<compile_context>
chip_gen: v7x
topology: tpu7x:2x2x1
jax: 0.10.0
libtpu: 0.0.40
codegen_flags: <defaults>
</compile_context>

<pallas_src>
import functools

import jax
import jax.numpy as jnp
from jax import lax
from jax.experimental import pallas as pl
from jax.experimental.pallas import tpu as pltpu

EPS = 1e-5
LANE = 128


# ------------------------------- helpers ----------------------------------- #

def _round_up(n, m):
    return (n + m - 1) // m * m


def _pad_axis(a, axis, size):
    pad = size - a.shape[axis]
    if pad == 0:
        return a
    cfg = [(0, 0)] * a.ndim
    cfg[axis] = (0, pad)
    return jnp.pad(a, cfg)


def _device_kind():
    try:
        return jax.devices()[0].device_kind.lower()
    except Exception:
        return ""


def _default_act_dtype():
    """bf16 feature maps on v6e/v7x (halves HBM traffic); f32 elsewhere (v5e)."""
    k = _device_kind()
    if "v6" in k or "v7" in k or "7x" in k:
        return jnp.bfloat16
    return jnp.float32


def _vmem_limit_bytes():
    # v7x: 64 MiB physical VMEM (default scoped limit 32 MiB) -> keep headroom
    # for double-buffered blocks.  v5e/v6e: 128 MiB physical.
    k = _device_kind()
    if "v7" in k or "7x" in k:
        return 48 << 20
    return 100 << 20


def _compiler_params():
    return pltpu.CompilerParams(
        dimension_semantics=("parallel",),
        vmem_limit_bytes=_vmem_limit_bytes())


# ----------------------------- Pallas kernels ------------------------------- #

def _conv_stats_kernel(*refs, apply_in_act):
    """3x3 conv (stride 1, pad 1) over one batch tile + partial BN statistics.

    Optionally applies the previous layer's folded BN affine + ReLU to its input
    (lazy BN apply), builds a 1-px zero halo in a bf16 VMEM scratch (border-only
    zeroing), and computes the conv as 9 shifted-slice MXU matmuls accumulated
    in f32 (no im2col buffer).  Emits per-block (sum, sum_sq) partials.
    """
    if apply_in_act:
        x_ref, aff_ref, w_ref, y_ref, st_ref, xpad_ref = refs
    else:
        x_ref, w_ref, y_ref, st_ref, xpad_ref = refs

    nb, h, w, cin = x_ref.shape
    cout = y_ref.shape[-1]

    x = x_ref[...]
    if apply_in_act:
        aff = aff_ref[...]                                   # (2, Cin_p) f32
        scale = aff[0:1, :].reshape(1, 1, 1, -1)
        shift = aff[1:2, :].reshape(1, 1, 1, -1)
        x = jnp.maximum(x.astype(jnp.float32) * scale + shift, 0.0)

    # Zero only the 1-px halo border; the interior is fully overwritten below,
    # so zeroing the whole scratch every step would be pure wasted vst traffic.
    zrow = jnp.zeros((nb, 1, w + 2, cin), xpad_ref.dtype)
    zcol = jnp.zeros((nb, h, 1, cin), xpad_ref.dtype)
    xpad_ref[:, 0:1, :, :] = zrow
    xpad_ref[:, h + 1:h + 2, :, :] = zrow
    xpad_ref[:, 1:h + 1, 0:1, :] = zcol
    xpad_ref[:, 1:h + 1, w + 1:w + 2, :] = zcol
    xpad_ref[:, 1:h + 1, 1:w + 1, :] = x.astype(xpad_ref.dtype)

    # 3x3 conv = 9 shifted-slice matmuls against 128-row weight slices, summed
    # with f32 accumulation.  Avoids the (M, 9*Cin_p) im2col VMEM temporary.
    # TODO(synk): pair taps (K = 2*Cin_p = 256 per dot) if the bundle shows the
    #             256-wide MXU (v6e/v7x) as the binding slot rather than vst.
    acc = None
    for t, (dy, dx) in enumerate((dy, dx) for dy in range(3) for dx in range(3)):
        tap = xpad_ref[:, dy:dy + h, dx:dx + w, :].reshape(nb * h * w, cin)
        part = jnp.dot(tap, w_ref[t * cin:(t + 1) * cin, :],
                       preferred_element_type=jnp.float32)
        acc = part if acc is None else acc + part

    # NOTE: no conv bias — a per-channel bias before BatchNorm cancels exactly
    # in the folded scale/shift computed by the wrapper.

    # Per-block partial statistics, written row-wise (no concatenate relayout);
    # the global (N,H,W) reduce is a tiny O(C) op in the wrapper.
    st_ref[0, 0:1, :] = jnp.sum(acc, axis=0, keepdims=True)
    st_ref[0, 1:2, :] = jnp.sum(acc * acc, axis=0, keepdims=True)

    y_ref[...] = acc.reshape(nb, h, w, cout).astype(y_ref.dtype)


def _bn_add_relu_kernel(y_ref, aff_ref, x_ref, o_ref):
    """out = relu(BN_affine(y) + x) — identity skip fused with the last BN."""
    aff = aff_ref[...]
    scale = aff[0:1, :].reshape(1, 1, 1, -1)
    shift = aff[1:2, :].reshape(1, 1, 1, -1)
    hv = y_ref[...].astype(jnp.float32) * scale + shift
    o_ref[...] = jnp.maximum(hv + x_ref[...].astype(jnp.float32),
                             0.0).astype(o_ref.dtype)


def _bn_proj_add_relu_kernel(y_ref, aff_ref, x_ref, wsk_ref, bsk_ref, o_ref):
    """out = relu(BN_affine(y) + conv1x1(x)) — projection skip fused in-kernel."""
    nb, hh, ww, cout = o_ref.shape
    cin = x_ref.shape[-1]
    aff = aff_ref[...]
    scale = aff[0:1, :].reshape(1, 1, 1, -1)
    shift = aff[1:2, :].reshape(1, 1, 1, -1)
    hv = y_ref[...].astype(jnp.float32) * scale + shift
    x2 = x_ref[...].reshape(nb * hh * ww, cin)
    skip = jnp.dot(x2.astype(wsk_ref.dtype), wsk_ref[...],
                   preferred_element_type=jnp.float32)
    skip = (skip + bsk_ref[...].astype(jnp.float32)).reshape(nb, hh, ww, cout)
    o_ref[...] = jnp.maximum(hv + skip, 0.0).astype(o_ref.dtype)


# ------------------------------ pallas_call glue ---------------------------- #

def _conv_stats_pass(x, aff, w, *, batch_tile, act_dtype, mm_dtype):
    n, h, wdt, cin = x.shape
    cout = w.shape[-1]
    nblk = n // batch_tile
    apply_in_act = aff is not None

    arrays = [x]
    in_specs = [pl.BlockSpec((batch_tile, h, wdt, cin), lambda i: (i, 0, 0, 0))]
    if apply_in_act:
        arrays.append(aff)
        in_specs.append(pl.BlockSpec((2, cin), lambda i: (0, 0)))
    arrays.append(w)
    in_specs.append(pl.BlockSpec(w.shape, lambda i: (0, 0)))

    y, stats = pl.pallas_call(
        functools.partial(_conv_stats_kernel, apply_in_act=apply_in_act),
        grid=(nblk,),
        in_specs=in_specs,
        out_specs=(
            pl.BlockSpec((batch_tile, h, wdt, cout), lambda i: (i, 0, 0, 0)),
            pl.BlockSpec((1, 2, cout), lambda i: (i, 0, 0)),
        ),
        out_shape=(
            jax.ShapeDtypeStruct((n, h, wdt, cout), act_dtype),
            jax.ShapeDtypeStruct((nblk, 2, cout), jnp.float32),
        ),
        scratch_shapes=[pltpu.VMEM((batch_tile, h + 2, wdt + 2, cin), mm_dtype)],
        compiler_params=_compiler_params(),
    )(*arrays)
    return y, stats


def _epilogue_pass(y, aff, x, wsk, bsk, *, batch_tile):
    n, h, wdt, cout = y.shape
    cin = x.shape[-1]
    nblk = n // batch_tile

    arrays = [y, aff, x]
    in_specs = [
        pl.BlockSpec((batch_tile, h, wdt, cout), lambda i: (i, 0, 0, 0)),
        pl.BlockSpec((2, cout), lambda i: (0, 0)),
        pl.BlockSpec((batch_tile, h, wdt, cin), lambda i: (i, 0, 0, 0)),
    ]
    if wsk is None:
        kern = _bn_add_relu_kernel
    else:
        kern = _bn_proj_add_relu_kernel
        arrays += [wsk, bsk]
        in_specs += [pl.BlockSpec(wsk.shape, lambda i: (0, 0)),
                     pl.BlockSpec(bsk.shape, lambda i: (0, 0))]

    # Output stays f32 NHWC (padded); the module interface is NCHW so the
    # wrapper still does the final channel slice + transpose.
    return pl.pallas_call(
        kern,
        grid=(nblk,),
        in_specs=in_specs,
        out_specs=pl.BlockSpec((batch_tile, h, wdt, cout),
                               lambda i: (i, 0, 0, 0)),
        out_shape=jax.ShapeDtypeStruct((n, h, wdt, cout), jnp.float32),
        compiler_params=_compiler_params(),
    )(*arrays)


# -------------------------------- ResBlock ----------------------------------- #

class ResBlockPallas:
    def __init__(self, in_channels, out_channels, num_convs, stride=1,
                 increase_channels=False, key=jax.random.PRNGKey(0),
                 mm_dtype=None, act_dtype=None, batch_tile=1):
        assert stride == 1, "TODO(synk): stride>1 not implemented in the Pallas path"
        if not increase_channels:
            assert in_channels == out_channels
        self.in_channels = in_channels
        self.out_channels = out_channels
        self.num_convs = num_convs
        self.increase_channels = increase_channels
        self.batch_tile = batch_tile
        # bf16 MXU inputs on every generation (v5e's MXU peak is bf16 too);
        # feature maps bf16 on v6e/v7x, f32 on v5e.
        self.mm_dtype = jnp.bfloat16 if mm_dtype is None else mm_dtype
        self.act_dtype = _default_act_dtype() if act_dtype is None else act_dtype

        # lane-dense (multiple-of-128) channel dims used inside the kernels
        self.cin_p = _round_up(in_channels, LANE)
        self.cout_p = _round_up(out_channels, LANE)

        keys = jax.random.split(key, 4 * num_convs + 2)
        self.conv_params = []                 # raw params (reference path)
        cin = in_channels
        for j in range(num_convs):
            kw, kb, kg, kbe = keys[4 * j:4 * j + 4]
            fan_in = cin * 9
            w = jax.random.normal(kw, (3, 3, cin, out_channels),
                                  jnp.float32) / jnp.sqrt(fan_in)
            b = 0.1 * jax.random.normal(kb, (1, out_channels), jnp.float32)
            g = 1.0 + 0.1 * jax.random.normal(kg, (1, out_channels), jnp.float32)
            be = 0.1 * jax.random.normal(kbe, (1, out_channels), jnp.float32)
            self.conv_params.append((w, b, g, be))
            cin = out_channels

        if increase_channels:
            kw, kb = keys[-2:]
            self.w_skip = jax.random.normal(
                kw, (in_channels, out_channels), jnp.float32) / jnp.sqrt(in_channels)
            self.b_skip = 0.1 * jax.random.normal(kb, (1, out_channels), jnp.float32)

        # kernel-side layouts: channel-padded, tap-major (9*Cin_p, Cout_p), MXU dtype.
        # The conv bias is NOT plumbed into the kernels (it cancels in the BN fold).
        self.w_mm, self.g_p, self.beta_p = [], [], []
        cin_p = self.cin_p
        for (w, b, g, be) in self.conv_params:
            wp = _pad_axis(_pad_axis(w, 2, cin_p), 3, self.cout_p)   # (3,3,Cin_p,Cout_p)
            self.w_mm.append(
                wp.reshape(9 * cin_p, self.cout_p).astype(self.mm_dtype))
            self.g_p.append(_pad_axis(g, 1, self.cout_p))
            self.beta_p.append(_pad_axis(be, 1, self.cout_p))
            cin_p = self.cout_p
        if increase_channels:
            self.wsk_mm = _pad_axis(_pad_axis(self.w_skip, 0, self.cin_p),
                                    1, self.cout_p).astype(self.mm_dtype)
            self.bsk_p = _pad_axis(self.b_skip, 1, self.cout_p)

    def __call__(self, x_nchw):
        n = x_nchw.shape[0]
        assert n % self.batch_tile == 0
        x = jnp.transpose(x_nchw, (0, 2, 3, 1))                       # -> NHWC
        x = _pad_axis(x, 3, self.cin_p).astype(self.act_dtype)        # lane-dense channels
        _, hh, ww, _ = x.shape
        count = float(n * hh * ww)

        h, aff = x, None
        for j in range(self.num_convs):
            h, stats = _conv_stats_pass(h, aff, self.w_mm[j],
                                        batch_tile=self.batch_tile,
                                        act_dtype=self.act_dtype,
                                        mm_dtype=self.mm_dtype)
            # tiny O(C) reduction + folded BN affine (training-mode, biased var)
            s = jnp.sum(stats, axis=0)                                # (2, Cout_p)
            mean = s[0] / count
            var = jnp.maximum(s[1] / count - mean * mean, 0.0)
            scale = self.g_p[j][0] * lax.rsqrt(var + EPS)
            shift = self.beta_p[j][0] - mean * scale
            aff = jnp.stack([scale, shift], axis=0)                   # (2, Cout_p) f32

        if self.increase_channels:
            out = _epilogue_pass(h, aff, x, self.wsk_mm, self.bsk_p,
                                 batch_tile=self.batch_tile)
        else:
            out = _epilogue_pass(h, aff, x, None, None,
                                 batch_tile=self.batch_tile)

        out = out[..., :self.out_channels]
        return jnp.transpose(out, (0, 3, 1, 2))                       # -> NCHW

    # Pure-JAX reference (faithful to the PyTorch module) for correctness checks.
    def reference(self, x_nchw):
        x = jnp.transpose(x_nchw, (0, 2, 3, 1)).astype(jnp.float32)
        h = x
        for j, (w, b, g, be) in enumerate(self.conv_params):
            if j > 0:
                h = jax.nn.relu(h)
            h = lax.conv_general_dilated(
                h, w, window_strides=(1, 1), padding=((1, 1), (1, 1)),
                dimension_numbers=("NHWC", "HWIO", "NHWC"),
                precision=lax.Precision.HIGHEST)
            h = h + b.reshape(1, 1, 1, -1)
            mean = jnp.mean(h, axis=(0, 1, 2), keepdims=True)
            var = jnp.mean((h - mean) ** 2, axis=(0, 1, 2), keepdims=True)
            h = ((h - mean) * lax.rsqrt(var + EPS) * g.reshape(1, 1, 1, -1)
                 + be.reshape(1, 1, 1, -1))
        if self.increase_channels:
            skip = jnp.einsum("nhwc,cd->nhwd", x, self.w_skip,
                              precision=lax.Precision.HIGHEST)
            skip = skip + self.b_skip.reshape(1, 1, 1, -1)
        else:
            skip = x
        out = jax.nn.relu(h + skip)
        return jnp.transpose(out, (0, 3, 1, 2))


# ----------------------------------- main ------------------------------------ #

if __name__ == "__main__":
    key = jax.random.PRNGKey(0)
    kx1, kx2, kp1, kp2 = jax.random.split(key, 4)

    # Config 1: channel-increasing block (exercises the fused conv1x1 projection skip).
    x1 = jax.random.normal(kx1, (2, 4, 16, 16), jnp.float32)   # NCHW
    blk1 = ResBlockPallas(in_channels=4, out_channels=8, num_convs=2,
                          stride=1, increase_channels=True, key=kp1)
    tol1 = 2e-3 if blk1.mm_dtype == jnp.float32 else 7.5e-2
    y1 = jax.block_until_ready(blk1(x1))
    r1 = jax.block_until_ready(blk1.reference(x1))
    assert y1.shape == (2, 8, 16, 16)
    assert jnp.allclose(y1, r1, atol=tol1, rtol=tol1), float(jnp.max(jnp.abs(y1 - r1)))

    # Config 2: identity-skip block.
    x2 = jax.random.normal(kx2, (2, 8, 16, 16), jnp.float32)   # NCHW
    blk2 = ResBlockPallas(in_channels=8, out_channels=8, num_convs=2,
                          stride=1, increase_channels=False, key=kp2)
    tol2 = 2e-3 if blk2.mm_dtype == jnp.float32 else 7.5e-2
    y2 = jax.block_until_ready(blk2(x2))
    r2 = jax.block_until_ready(blk2.reference(x2))
    assert y2.shape == (2, 8, 16, 16)
    assert jnp.allclose(y2, r2, atol=tol2, rtol=tol2), float(jnp.max(jnp.abs(y2 - r2)))

    print("KERNEL_OK")
</pallas_src>

<mosaic_0001>
module attributes {stable_mosaic.version = 11 : i64} {
  func.func @_conv_stats_kernel(%arg0: i32, %arg1: memref<1x16x16x128xf32, #tpu.memory_space<vmem>>, %arg2: memref<1152x128xbf16, #tpu.memory_space<vmem>>, %arg3: memref<1x16x16x128xf32, #tpu.memory_space<vmem>>, %arg4: memref<1x2x128xf32, #tpu.memory_space<vmem>>, %arg5: memref<1x18x18x128xbf16, #tpu.memory_space<vmem>>) attributes {dimension_semantics = [#tpu.dimension_semantics<parallel>], iteration_bounds = array<i64: 2>, scalar_prefetch = 0 : i64, scratch_operands = 1 : i64, tpu.core_type = #tpu.core_type<tc>, window_params = [{transform_indices = @transform_0, window_bounds = array<i64: 1, 16, 16, 128>}, {pipeline_mode = #tpu.pipeline_mode<synchronous>, transform_indices = @transform_1, window_bounds = array<i64: 1152, 128>}, {transform_indices = @transform_2, window_bounds = array<i64: 1, 16, 16, 128>}, {transform_indices = @transform_3, window_bounds = array<i64: 1, 2, 128>}]} {
    %c0 = arith.constant 0 : index
    %c0_0 = arith.constant 0 : index
    %c0_1 = arith.constant 0 : index
    %c0_2 = arith.constant 0 : index
    %0 = vector.load %arg1[%c0, %c0_0, %c0_1, %c0_2] : memref<1x16x16x128xf32, #tpu.memory_space<vmem>>, vector<1x16x16x128xf32>
    %cst = arith.constant 0.000000e+00 : bf16
    %1 = vector.broadcast %cst : bf16 to vector<1x1x18x128xbf16>
    %cst_3 = arith.constant 0.000000e+00 : bf16
    %2 = vector.broadcast %cst_3 : bf16 to vector<1x16x1x128xbf16>
    %c0_4 = arith.constant 0 : index
    %c0_5 = arith.constant 0 : index
    %c0_6 = arith.constant 0 : index
    %c0_7 = arith.constant 0 : index
    %3 = vector.load %arg5[%c0_4, %c0_5, %c0_6, %c0_7] : memref<1x18x18x128xbf16, #tpu.memory_space<vmem>>, vector<1x1x18x128xbf16>
    tpu.vector_store %arg5[%c0_4, %c0_5, %c0_6, %c0_7], %1 {strides = array<i32>} : memref<1x18x18x128xbf16, #tpu.memory_space<vmem>>, vector<1x1x18x128xbf16>,
    %c0_8 = arith.constant 0 : index
    %c17 = arith.constant 17 : index
    %c0_9 = arith.constant 0 : index
    %c0_10 = arith.constant 0 : index
    %4 = vector.load %arg5[%c0_8, %c17, %c0_9, %c0_10] : memref<1x18x18x128xbf16, #tpu.memory_space<vmem>>, vector<1x1x18x128xbf16>
    tpu.vector_store %arg5[%c0_8, %c17, %c0_9, %c0_10], %1 {strides = array<i32>} : memref<1x18x18x128xbf16, #tpu.memory_space<vmem>>, vector<1x1x18x128xbf16>,
    %c0_11 = arith.constant 0 : index
    %c1 = arith.constant 1 : index
    %c0_12 = arith.constant 0 : index
    %c0_13 = arith.constant 0 : index
    %5 = vector.load %arg5[%c0_11, %c1, %c0_12, %c0_13] : memref<1x18x18x128xbf16, #tpu.memory_space<vmem>>, vector<1x16x1x128xbf16>
    tpu.vector_store %arg5[%c0_11, %c1, %c0_12, %c0_13], %2 {strides = array<i32>} : memref<1x18x18x128xbf16, #tpu.memory_space<vmem>>, vector<1x16x1x128xbf16>,
    %c0_14 = arith.constant 0 : index
    %c1_15 = arith.constant 1 : index
    %c17_16 = arith.constant 17 : index
    %c0_17 = arith.constant 0 : index
    %6 = vector.load %arg5[%c0_14, %c1_15, %c17_16, %c0_17] : memref<1x18x18x128xbf16, #tpu.memory_space<vmem>>, vector<1x16x1x128xbf16>
    tpu.vector_store %arg5[%c0_14, %c1_15, %c17_16, %c0_17], %2 {strides = array<i32>} : memref<1x18x18x128xbf16, #tpu.memory_space<vmem>>, vector<1x16x1x128xbf16>,
    %7 = arith.truncf %0 : vector<1x16x16x128xf32> to vector<1x16x16x128xbf16>
    %c0_18 = arith.constant 0 : index
    %c1_19 = arith.constant 1 : index
    %c1_20 = arith.constant 1 : index
    %c0_21 = arith.constant 0 : index
    %8 = vector.load %arg5[%c0_18, %c1_19, %c1_20, %c0_21] : memref<1x18x18x128xbf16, #tpu.memory_space<vmem>>, vector<1x16x16x128xbf16>
    tpu.vector_store %arg5[%c0_18, %c1_19, %c1_20, %c0_21], %7 {strides = array<i32>} : memref<1x18x18x128xbf16, #tpu.memory_space<vmem>>, vector<1x16x16x128xbf16>,
    %c0_22 = arith.constant 0 : index
    %c0_23 = arith.constant 0 : index
    %c0_24 = arith.constant 0 : index
    %c0_25 = arith.constant 0 : index
    %9 = vector.load %arg5[%c0_22, %c0_23, %c0_24, %c0_25] : memref<1x18x18x128xbf16, #tpu.memory_space<vmem>>, vector<1x16x16x128xbf16>
    %10 = vector.shape_cast %9 : vector<1x16x16x128xbf16> to vector<256x128xbf16>
    %c0_26 = arith.constant 0 : index
    %c0_27 = arith.constant 0 : index
    %11 = vector.load %arg2[%c0_26, %c0_27] : memref<1152x128xbf16, #tpu.memory_space<vmem>>, vector<128x128xbf16>
    %cst_28 = arith.constant dense<0.000000e+00> : vector<256x128xf32>
    %12 = tpu.matmul %10, %11, %cst_28 {dimension_numbers = #tpu.dot_dimension_numbers<[1], [0], [0], [1], [0, 0, 1, 1], [], []>} : vector<256x128xbf16>, vector<128x128xbf16>, vector<256x128xf32> -> vector<256x128xf32>
    %c0_29 = arith.constant 0 : index
    %c0_30 = arith.constant 0 : index
    %c1_31 = arith.constant 1 : index
    %c0_32 = arith.constant 0 : index
    %13 = vector.load %arg5[%c0_29, %c0_30, %c1_31, %c0_32] : memref<1x18x18x128xbf16, #tpu.memory_space<vmem>>, vector<1x16x16x128xbf16>
    %14 = vector.shape_cast %13 : vector<1x16x16x128xbf16> to vector<256x128xbf16>
    %c128 = arith.constant 128 : index
    %c0_33 = arith.constant 0 : index
    %15 = vector.load %arg2[%c128, %c0_33] : memref<1152x128xbf16, #tpu.memory_space<vmem>>, vector<128x128xbf16>
    %cst_34 = arith.constant dense<0.000000e+00> : vector<256x128xf32>
    %16 = tpu.matmul %14, %15, %cst_34 {dimension_numbers = #tpu.dot_dimension_numbers<[1], [0], [0], [1], [0, 0, 1, 1], [], []>} : vector<256x128xbf16>, vector<128x128xbf16>, vector<256x128xf32> -> vector<256x128xf32>
    %17 = arith.addf %12, %16 : vector<256x128xf32>
    %c0_35 = arith.constant 0 : index
    %c0_36 = arith.constant 0 : index
    %c2 = arith.constant 2 : index
    %c0_37 = arith.constant 0 : index
    %18 = vector.load %arg5[%c0_35, %c0_36, %c2, %c0_37] : memref<1x18x18x128xbf16, #tpu.memory_space<vmem>>, vector<1x16x16x128xbf16>
    %19 = vector.shape_cast %18 : vector<1x16x16x128xbf16> to vector<256x128xbf16>
    %c256 = arith.constant 256 : index
    %c0_38 = arith.constant 0 : index
    %20 = vector.load %arg2[%c256, %c0_38] : memref<1152x128xbf16, #tpu.memory_space<vmem>>, vector<128x128xbf16>
    %cst_39 = arith.constant dense<0.000000e+00> : vector<256x128xf32>
    %21 = tpu.matmul %19, %20, %cst_39 {dimension_numbers = #tpu.dot_dimension_numbers<[1], [0], [0], [1], [0, 0, 1, 1], [], []>} : vector<256x128xbf16>, vector<128x128xbf16>, vector<256x128xf32> -> vector<256x128xf32>
    %22 = arith.addf %17, %21 : vector<256x128xf32>
    %c0_40 = arith.constant 0 : index
    %c1_41 = arith.constant 1 : index
    %c0_42 = arith.constant 0 : index
    %c0_43 = arith.constant 0 : index
    %23 = vector.load %arg5[%c0_40, %c1_41, %c0_42, %c0_43] : memref<1x18x18x128xbf16, #tpu.memory_space<vmem>>, vector<1x16x16x128xbf16>
    %24 = vector.shape_cast %23 : vector<1x16x16x128xbf16> to vector<256x128xbf16>
    %c384 = arith.constant 384 : index
    %c0_44 = arith.constant 0 : index
    %25 = vector.load %arg2[%c384, %c0_44] : memref<1152x128xbf16, #tpu.memory_space<vmem>>, vector<128x128xbf16>
    %cst_45 = arith.constant dense<0.000000e+00> : vector<256x128xf32>
    %26 = tpu.matmul %24, %25, %cst_45 {dimension_numbers = #tpu.dot_dimension_numbers<[1], [0], [0], [1], [0, 0, 1, 1], [], []>} : vector<256x128xbf16>, vector<128x128xbf16>, vector<256x128xf32> -> vector<256x128xf32>
    %27 = arith.addf %22, %26 : vector<256x128xf32>
    %c0_46 = arith.constant 0 : index
    %c1_47 = arith.constant 1 : index
    %c1_48 = arith.constant 1 : index
    %c0_49 = arith.constant 0 : index
    %28 = vector.load %arg5[%c0_46, %c1_47, %c1_48, %c0_49] : memref<1x18x18x128xbf16, #tpu.memory_space<vmem>>, vector<1x16x16x128xbf16>
    %29 = vector.shape_cast %28 : vector<1x16x16x128xbf16> to vector<256x128xbf16>
    %c512 = arith.constant 512 : index
    %c0_50 = arith.constant 0 : index
    %30 = vector.load %arg2[%c512, %c0_50] : memref<1152x128xbf16, #tpu.memory_space<vmem>>, vector<128x128xbf16>
    %cst_51 = arith.constant dense<0.000000e+00> : vector<256x128xf32>
    %31 = tpu.matmul %29, %30, %cst_51 {dimension_numbers = #tpu.dot_dimension_numbers<[1], [0], [0], [1], [0, 0, 1, 1], [], []>} : vector<256x128xbf16>, vector<128x128xbf16>, vector<256x128xf32> -> vector<256x128xf32>
    %32 = arith.addf %27, %31 : vector<256x128xf32>
    %c0_52 = arith.constant 0 : index
    %c1_53 = arith.constant 1 : index
    %c2_54 = arith.constant 2 : index
    %c0_55 = arith.constant 0 : index
    %33 = vector.load %arg5[%c0_52, %c1_53, %c2_54, %c0_55] : memref<1x18x18x128xbf16, #tpu.memory_space<vmem>>, vector<1x16x16x128xbf16>
    %34 = vector.shape_cast %33 : vector<1x16x16x128xbf16> to vector<256x128xbf16>
    %c640 = arith.constant 640 : index
    %c0_56 = arith.constant 0 : index
    %35 = vector.load %arg2[%c640, %c0_56] : memref<1152x128xbf16, #tpu.memory_space<vmem>>, vector<128x128xbf16>
    %cst_57 = arith.constant dense<0.000000e+00> : vector<256x128xf32>
    %36 = tpu.matmul %34, %35, %cst_57 {dimension_numbers = #tpu.dot_dimension_numbers<[1], [0], [0], [1], [0, 0, 1, 1], [], []>} : vector<256x128xbf16>, vector<128x128xbf16>, vector<256x128xf32> -> vector<256x128xf32>
    %37 = arith.addf %32, %36 : vector<256x128xf32>
    %c0_58 = arith.constant 0 : index
    %c2_59 = arith.constant 2 : index
    %c0_60 = arith.constant 0 : index
    %c0_61 = arith.constant 0 : index
    %38 = vector.load %arg5[%c0_58, %c2_59, %c0_60, %c0_61] : memref<1x18x18x128xbf16, #tpu.memory_space<vmem>>, vector<1x16x16x128xbf16>
    %39 = vector.shape_cast %38 : vector<1x16x16x128xbf16> to vector<256x128xbf16>
    %c768 = arith.constant 768 : index
    %c0_62 = arith.constant 0 : index
    %40 = vector.load %arg2[%c768, %c0_62] : memref<1152x128xbf16, #tpu.memory_space<vmem>>, vector<128x128xbf16>
    %cst_63 = arith.constant dense<0.000000e+00> : vector<256x128xf32>
    %41 = tpu.matmul %39, %40, %cst_63 {dimension_numbers = #tpu.dot_dimension_numbers<[1], [0], [0], [1], [0, 0, 1, 1], [], []>} : vector<256x128xbf16>, vector<128x128xbf16>, vector<256x128xf32> -> vector<256x128xf32>
    %42 = arith.addf %37, %41 : vector<256x128xf32>
    %c0_64 = arith.constant 0 : index
    %c2_65 = arith.constant 2 : index
    %c1_66 = arith.constant 1 : index
    %c0_67 = arith.constant 0 : index
    %43 = vector.load %arg5[%c0_64, %c2_65, %c1_66, %c0_67] : memref<1x18x18x128xbf16, #tpu.memory_space<vmem>>, vector<1x16x16x128xbf16>
    %44 = vector.shape_cast %43 : vector<1x16x16x128xbf16> to vector<256x128xbf16>
    %c896 = arith.constant 896 : index
    %c0_68 = arith.constant 0 : index
    %45 = vector.load %arg2[%c896, %c0_68] : memref<1152x128xbf16, #tpu.memory_space<vmem>>, vector<128x128xbf16>
    %cst_69 = arith.constant dense<0.000000e+00> : vector<256x128xf32>
    %46 = tpu.matmul %44, %45, %cst_69 {dimension_numbers = #tpu.dot_dimension_numbers<[1], [0], [0], [1], [0, 0, 1, 1], [], []>} : vector<256x128xbf16>, vector<128x128xbf16>, vector<256x128xf32> -> vector<256x128xf32>
    %47 = arith.addf %42, %46 : vector<256x128xf32>
    %c0_70 = arith.constant 0 : index
    %c2_71 = arith.constant 2 : index
    %c2_72 = arith.constant 2 : index
    %c0_73 = arith.constant 0 : index
    %48 = vector.load %arg5[%c0_70, %c2_71, %c2_72, %c0_73] : memref<1x18x18x128xbf16, #tpu.memory_space<vmem>>, vector<1x16x16x128xbf16>
    %49 = vector.shape_cast %48 : vector<1x16x16x128xbf16> to vector<256x128xbf16>
    %c1024 = arith.constant 1024 : index
    %c0_74 = arith.constant 0 : index
    %50 = vector.load %arg2[%c1024, %c0_74] : memref<1152x128xbf16, #tpu.memory_space<vmem>>, vector<128x128xbf16>
    %cst_75 = arith.constant dense<0.000000e+00> : vector<256x128xf32>
    %51 = tpu.matmul %49, %50, %cst_75 {dimension_numbers = #tpu.dot_dimension_numbers<[1], [0], [0], [1], [0, 0, 1, 1], [], []>} : vector<256x128xbf16>, vector<128x128xbf16>, vector<256x128xf32> -> vector<256x128xf32>
    %52 = arith.addf %47, %51 : vector<256x128xf32>
    %cst_76 = arith.constant dense<0.000000e+00> : vector<128xf32>
    %53 = vector.multi_reduction <add>, %52, %cst_76 [0] : vector<256x128xf32> to vector<128xf32>
    %54 = vector.shape_cast %53 : vector<128xf32> to vector<1x128xf32>
    %c0_77 = arith.constant 0 : index
    %c0_78 = arith.constant 0 : index
    %c0_79 = arith.constant 0 : index
    %55 = vector.load %arg4[%c0_77, %c0_78, %c0_79] : memref<1x2x128xf32, #tpu.memory_space<vmem>>, vector<1x1x128xf32>
    %56 = vector.shape_cast %55 : vector<1x1x128xf32> to vector<1x128xf32>
    %57 = vector.shape_cast %54 : vector<1x128xf32> to vector<1x1x128xf32>
    tpu.vector_store %arg4[%c0_77, %c0_78, %c0_79], %57 {strides = array<i32>} : memref<1x2x128xf32, #tpu.memory_space<vmem>>, vector<1x1x128xf32>,
    %58 = arith.mulf %52, %52 : vector<256x128xf32>
    %cst_80 = arith.constant dense<0.000000e+00> : vector<128xf32>
    %59 = vector.multi_reduction <add>, %58, %cst_80 [0] : vector<256x128xf32> to vector<128xf32>
    %60 = vector.shape_cast %59 : vector<128xf32> to vector<1x128xf32>
    %c0_81 = arith.constant 0 : index
    %c1_82 = arith.constant 1 : index
    %c0_83 = arith.constant 0 : index
    %61 = vector.load %arg4[%c0_81, %c1_82, %c0_83] : memref<1x2x128xf32, #tpu.memory_space<vmem>>, vector<1x1x128xf32>
    %62 = vector.shape_cast %61 : vector<1x1x128xf32> to vector<1x128xf32>
    %63 = vector.shape_cast %60 : vector<1x128xf32> to vector<1x1x128xf32>
    tpu.vector_store %arg4[%c0_81, %c1_82, %c0_83], %63 {strides = array<i32>} : memref<1x2x128xf32, #tpu.memory_space<vmem>>, vector<1x1x128xf32>,
    %64 = vector.shape_cast %52 : vector<256x128xf32> to vector<1x16x16x128xf32>
    %c0_84 = arith.constant 0 : index
    %c0_85 = arith.constant 0 : index
    %c0_86 = arith.constant 0 : index
    %c0_87 = arith.constant 0 : index
    %65 = vector.load %arg3[%c0_84, %c0_85, %c0_86, %c0_87] : memref<1x16x16x128xf32, #tpu.memory_space<vmem>>, vector<1x16x16x128xf32>
    tpu.vector_store %arg3[%c0_84, %c0_85, %c0_86, %c0_87], %64 {strides = array<i32>} : memref<1x16x16x128xf32, #tpu.memory_space<vmem>>, vector<1x16x16x128xf32>,
    return
  }
  func.func @transform_0(%arg0: i32) -> (i32, i32, i32, i32) {
    %c0_i32 = arith.constant 0 : i32
    %c0_i32_0 = arith.constant 0 : i32
    %c0_i32_1 = arith.constant 0 : i32
    %c0_i32_2 = arith.constant 0 : i32
    return %arg0, %c0_i32, %c0_i32_0, %c0_i32_1 : i32, i32, i32, i32
  }
  func.func @transform_1(%arg0: i32) -> (i32, i32) {
    %c0_i32 = arith.constant 0 : i32
    %c0_i32_0 = arith.constant 0 : i32
    %c0_i32_1 = arith.constant 0 : i32
    return %c0_i32, %c0_i32_0 : i32, i32
  }
  func.func @transform_2(%arg0: i32) -> (i32, i32, i32, i32) {
    %c0_i32 = arith.constant 0 : i32
    %c0_i32_0 = arith.constant 0 : i32
    %c0_i32_1 = arith.constant 0 : i32
    %c0_i32_2 = arith.constant 0 : i32
    return %arg0, %c0_i32, %c0_i32_0, %c0_i32_1 : i32, i32, i32, i32
  }
  func.func @transform_3(%arg0: i32) -> (i32, i32, i32) {
    %c0_i32 = arith.constant 0 : i32
    %c0_i32_0 = arith.constant 0 : i32
    %c0_i32_1 = arith.constant 0 : i32
    return %arg0, %c0_i32, %c0_i32_0 : i32, i32, i32
  }
}

</mosaic_0001>

<llo_original>
// kernel: tpu_custom_call.1
$region0: #{tpu_custom_call.1}
  #allocation0 [shape = 'u32[]', space=smem, size = 0x4, offset = 0x4, fixed_abs, tag = 'smem constant byte address 0x4 - core index']
  #allocation1 [shape = 'u32[144,128]{1,0:T(1,128)}', space=vmem, size = 0x12000, scoped, tag = 'internal scratch']
  #allocation2 [shape = 'bf16[1,18,18,128]{3,2,1,0:T(8,128)(2,1)}', space=vmem, size = 0x1b000, scoped, tag = 'scratch operand']
  %s0 = inlined_call_operand.hbm [shape: f32[2,16,16,128], index: 0, kind: input, shape index: {}]
  %s1 = inlined_call_operand.hbm [shape: bf16[1152,128], index: 1, kind: input, shape index: {}]
  %s2 = inlined_call_operand.hbm [shape: f32[2,16,16,128], index: 2, kind: output, shape index: {0}]
  %s3 = inlined_call_operand.hbm [shape: f32[2,2,128], index: 3, kind: output, shape index: {1}]
  %4 = xla_tuple %s2, %s3
  %s5 = sld [smem:[#allocation0]]
  $region57: #{tpu_custom_call.1} parent=0
    _
  %s7 = ssub.s32 1, %s5
  %s8 = scalar_select 0, %s7, %s5
  $region1: #{tpu_custom_call.1} parent=0
    #allocation3 [shape = 'u8[262144]{0}', space=vmem, size = 0x40000, scoped, tag = 'input window, operand 0']
    #allocation4 [shape = 's32[2]{0}', space=sflag, size = 0x8, scoped, tag = 'scoped memory for tpu_custom_call.1']
    #allocation5 [shape = 's32[2]{0}', space=sflag, size = 0x8, scoped, tag = 'scoped memory for tpu_custom_call.1']
    #allocation6 [shape = 'u8[294912]{0}', space=vmem, size = 0x48000, scoped, tag = 'input window, operand 1, single buffered']
    #allocation7 [shape = 's32[1]{0}', space=sflag, size = 0x4, scoped, tag = 'scoped memory for tpu_custom_call.1']
    #allocation8 [shape = 'u8[262144]{0}', space=vmem, size = 0x40000, scoped, tag = 'output window, operand 0']
    #allocation9 [shape = 'u8[2048]{0}', space=vmem, size = 0x800, scoped, tag = 'output window, operand 1']
    #allocation10 [shape = 's32[2]{0}', space=sflag, size = 0x8, scoped, tag = 'scoped memory for tpu_custom_call.1']
    %9 = vsyncpa [#allocation4], 0
    %s10 = scalar_lea.sflag [#allocation4], 1
    %11 = vsyncpa %s10, 0
    %12 = vsyncpa [#allocation7], 0
    %13 = vsyncpa [#allocation5], 0
    %s14 = scalar_lea.sflag [#allocation5], 1
    %15 = vsyncpa %s14, 0
    %16 = vsyncpa [#allocation10], 0
    %s17 = scalar_lea.sflag [#allocation10], 1
    %18 = vsyncpa %s17, 0
    loop: start=0, step=1, limit=4
    $region2: #{tpu_custom_call.1} parent=1 // loop_pre_header
      _
    $region3: #{tpu_custom_call.1} parent=1 // loop_header
      %s20 = sphi 0, %s24
      %p21 = scmp.ge.s32.totalorder %s20, 4
      %s30 = sphi 0, %s32
      %s33 = sphi 0, %s30
      %s34 = sphi 0, %s33
      %s50 = sphi 0, %s34
      %s54 = sphi 0, %s54
      %s56 = sphi 0, %s54
      %s57 = sphi 0, %s56
      %s71 = sphi 0, %s57
      %s77 = sphi 0, %s79
      %s80 = sphi 0, %s77
      %s81 = sphi 0, %s80
      %s97 = sphi 0, %s81
      %s103 = sphi 0, %s105
      %s106 = sphi 0, %s103
      %s107 = sphi 0, %s106
      %s123 = sphi 0, %s107
    $region4: #{tpu_custom_call.1} parent=1 // loop_header_branch
      %23 = sbr.rel (%p21) target = $region8
    $region5: #{tpu_custom_call.1} parent=1 // loop_body
      %s25 = ssub.s32 %s20, 1
      %s26 = ssub.s32 %s20, 2
      %s27 = sadd.s32 %s20, 1
      %s28 = ssub.s32 %s20, %s27
      %p29 = scmp.eq.s32.totalorder %s28, 0
      %s31 = sadd.s32 %s30, 1
      %s32 = scalar_select %p29, %s30, %s31
      %p35 = pneg %p29
      %p36 = scmp.eq.s32.totalorder %s20, 1
      %p37 = por %p35, %p36
      %p38 = scmp.ne.s32.totalorder %s30, %s33
      %p39 = scmp.eq.s32.totalorder %s20, 0
      %p40 = por %p38, %p39
      %p41 = scmp.ne.s32.totalorder %s30, %s33
      %p42 = scmp.eq.s32.totalorder %s25, 1
      %p43 = por %p41, %p42
      %p44 = scmp.ne.s32.totalorder %s33, %s34
      %p45 = scmp.eq.s32.totalorder %s25, 0
      %p46 = por %p44, %p45
      %p47 = scmp.ne.s32.totalorder %s33, %s34
      %p48 = scmp.eq.s32.totalorder %s26, 1
      %p49 = por %p47, %p48
      %p51 = scmp.ne.s32.totalorder %s34, %s50
      %p52 = scmp.eq.s32.totalorder %s26, 0
      %p53 = por %p51, %p52
      %s55 = sadd.s32 %s54, 1
      %p58 = scmp.eq.s32.totalorder %s20, 1
      %p59 = scmp.ne.s32.totalorder %s54, %s56
      %p60 = scmp.eq.s32.totalorder %s20, 0
      %p61 = por %p59, %p60
      %p62 = scmp.ne.s32.totalorder %s54, %s56
      %p63 = scmp.eq.s32.totalorder %s25, 1
      %p64 = por %p62, %p63
      %p65 = scmp.ne.s32.totalorder %s56, %s57
      %p66 = scmp.eq.s32.totalorder %s25, 0
      %p67 = por %p65, %p66
      %p68 = scmp.ne.s32.totalorder %s56, %s57
      %p69 = scmp.eq.s32.totalorder %s26, 1
      %p70 = por %p68, %p69
      %p72 = scmp.ne.s32.totalorder %s57, %s71
      %p73 = scmp.eq.s32.totalorder %s26, 0
      %p74 = por %p72, %p73
      %s75 = ssub.s32 %s20, %s27
      %p76 = scmp.eq.s32.totalorder %s75, 0
      %s78 = sadd.s32 %s77, 1
      %s79 = scalar_select %p76, %s77, %s78
      %p82 = pneg %p76
      %p83 = scmp.eq.s32.totalorder %s20, 1
      %p84 = por %p82, %p83
      %p85 = scmp.ne.s32.totalorder %s77, %s80
      %p86 = scmp.eq.s32.totalorder %s20, 0
      %p87 = por %p85, %p86
      %p88 = scmp.ne.s32.totalorder %s77, %s80
      %p89 = scmp.eq.s32.totalorder %s25, 1
      %p90 = por %p88, %p89
      %p91 = scmp.ne.s32.totalorder %s80, %s81
      %p92 = scmp.eq.s32.totalorder %s25, 0
      %p93 = por %p91, %p92
      %p94 = scmp.ne.s32.totalorder %s80, %s81
      %p95 = scmp.eq.s32.totalorder %s26, 1
      %p96 = por %p94, %p95
      %p98 = scmp.ne.s32.totalorder %s81, %s97
      %p99 = scmp.eq.s32.totalorder %s26, 0
      %p100 = por %p98, %p99
      %s101 = ssub.s32 %s20, %s27
      %p102 = scmp.eq.s32.totalorder %s101, 0
      %s104 = sadd.s32 %s103, 1
      %s105 = scalar_select %p102, %s103, %s104
      %p108 = pneg %p102
      %p109 = scmp.eq.s32.totalorder %s20, 1
      %p110 = por %p108, %p109
      %p111 = scmp.ne.s32.totalorder %s103, %s106
      %p112 = scmp.eq.s32.totalorder %s20, 0
      %p113 = por %p111, %p112
      %p114 = scmp.ne.s32.totalorder %s103, %s106
      %p115 = scmp.eq.s32.totalorder %s25, 1
      %p116 = por %p114, %p115
      %p117 = scmp.ne.s32.totalorder %s106, %s107
      %p118 = scmp.eq.s32.totalorder %s25, 0
      %p119 = por %p117, %p118
      %p120 = scmp.ne.s32.totalorder %s106, %s107
      %p121 = scmp.eq.s32.totalorder %s26, 1
      %p122 = por %p120, %p121
      %p124 = scmp.ne.s32.totalorder %s107, %s123
      %p125 = scmp.eq.s32.totalorder %s26, 0
      %p126 = por %p124, %p125
      %p127 = scmp.le.s32.totalorder 1, %s20
      %p128 = scmp.lt.s32.totalorder %s20, 3
      %p129 = pnand %p127, %p128
      %p130 = pneg %p129
      // Predicated region
      $region9: #{tpu_custom_call.1} parent=5 // pred_check
        _
      $region10: #{tpu_custom_call.1} parent=5 // pred_check_branch
        %132 = sbr.rel (%p129) target = $region12
      $region11: #{tpu_custom_call.1} parent=5 // pred_region
        %s133 = ssub.s32 %s20, 1
        // Predicated region
        $region13: #{tpu_custom_call.1} parent=11 // pred_check
          %p134 = pneg %p67
        $region14: #{tpu_custom_call.1} parent=11 // pred_check_branch
          %136 = sbr.rel (%p134) target = $region16
        $region15: #{tpu_custom_call.1} parent=11 // pred_region
          %s138 = ssub.s32 9216, 9216
          %139 = vsyncadd [#allocation7], %s138
          %s140 = sshll.u32 [#allocation6], 4
          %s141 = int_to_ptr.vmem [resolvable:$true] %s140
          %146 = dma.hbm_to_vmem [thread:$0]  %s1, 9216, %s141, [#allocation7], 64, 64, 4
        $region16: #{tpu_custom_call.1} parent=11 // pred_fallthru
          _
      $region12: #{tpu_custom_call.1} parent=5 // pred_fallthru
        _
      %p147 = scmp.lt.s32.totalorder %s20, 2
      // Predicated region
      $region17: #{tpu_custom_call.1} parent=5 // pred_check
        %p148 = pneg %p147
      $region18: #{tpu_custom_call.1} parent=5 // pred_check_branch
        %150 = sbr.rel (%p148) target = $region20
      $region19: #{tpu_custom_call.1} parent=5 // pred_region
        // Predicated region
        $region21: #{tpu_custom_call.1} parent=19 // pred_check
          %p151 = pneg %p40
        $region22: #{tpu_custom_call.1} parent=19 // pred_check_branch
          %153 = sbr.rel (%p151) target = $region24
        $region23: #{tpu_custom_call.1} parent=19 // pred_region
          %s154 = sand.u32 %s30, 1
          %s155 = scalar_lea.sflag [#allocation4], %s154
          %s156 = sand.u32 %s30, 1
          %s157 = smul.addr %s156, 256
          %s158 = scalar_lea.vmem [#allocation3], %s157
          %s160 = ssub.s32 4096, 4096
          %161 = vsyncadd %s155, %s160
          %s162 = smul.addr %s20, 32
          %s163 = smul.addr %s162, 128
          %s164 = scalar_lea.hbm %s0, %s163
          %s165 = sshll.u32 %s158, 4
          %s166 = int_to_ptr.vmem [resolvable:$true] %s165
          %171 = dma.hbm_to_vmem [thread:$0]  %s164, 4096, %s166, %s155, 128, 128, 8
        $region24: #{tpu_custom_call.1} parent=19 // pred_fallthru
          _
      $region20: #{tpu_custom_call.1} parent=5 // pred_fallthru
        _
      %p172 = scmp.le.s32.totalorder 1, %s20
      %p173 = scmp.lt.s32.totalorder %s20, 3
      %p174 = pnand %p172, %p173
      %p175 = pneg %p174
      // Predicated region
      $region25: #{tpu_custom_call.1} parent=5 // pred_check
        _
      $region26: #{tpu_custom_call.1} parent=5 // pred_check_branch
        %177 = sbr.rel (%p174) target = $region28
      $region27: #{tpu_custom_call.1} parent=5 // pred_region
        %s178 = ssub.s32 %s20, 1
        %s179 = sand.u32 %s33, 1
        %s180 = scalar_lea.sflag [#allocation4], %s179
        %s181 = sand.u32 %s33, 1
        %s182 = smul.addr %s181, 256
        %s183 = scalar_lea.vmem [#allocation3], %s182
        // Predicated region
        $region29: #{tpu_custom_call.1} parent=27 // pred_check
          %p184 = pneg %p46
        $region30: #{tpu_custom_call.1} parent=27 // pred_check_branch
          %186 = sbr.rel (%p184) target = $region32
        $region31: #{tpu_custom_call.1} parent=27 // pred_region
          %187 = dma.done %s180, 4096
        $region32: #{tpu_custom_call.1} parent=27 // pred_fallthru
          _
        // Predicated region
        $region33: #{tpu_custom_call.1} parent=27 // pred_check
          %p188 = pneg %p67
        $region34: #{tpu_custom_call.1} parent=27 // pred_check_branch
          %190 = sbr.rel (%p188) target = $region36
        $region35: #{tpu_custom_call.1} parent=27 // pred_region
          %191 = dma.done [#allocation7], 9216
        $region36: #{tpu_custom_call.1} parent=27 // pred_fallthru
          _
        %s192 = sand.u32 %s33, 1
        %s193 = scalar_lea.sflag [#allocation4], %s192
        %s194 = sand.u32 %s33, 1
        %s195 = smul.addr %s194, 256
        %s196 = scalar_lea.vmem [#allocation3], %s195
        %p197 = pneg %p46
        %p198 = pneg %p43
        %p199 = pneg %p67
        %p200 = pneg %p64
        %p201 = pneg %p93
        %p202 = pneg %p90
        %s203 = sand.u32 %s80, 1
        %s204 = scalar_lea.sflag [#allocation5], %s203
        %s205 = sand.u32 %s80, 1
        %s206 = smul.addr %s205, 256
        %s207 = scalar_lea.vmem [#allocation8], %s206
        %p208 = pneg %p119
        %p209 = pneg %p116
        %s210 = sand.u32 %s106, 1
        %s211 = scalar_lea.sflag [#allocation10], %s210
        %s212 = sand.u32 %s106, 1
        %s213 = smul.addr %s212, 2
        %s214 = scalar_lea.vmem [#allocation9], %s213
        %v216 = vld [vmem:[%s183] sm:$0xff]
        %v217 = vld [vmem:[%s183 + $0x8] sm:$0xff]
        %v218 = vld [vmem:[%s183 + $0x10] sm:$0xff]
        %v219 = vld [vmem:[%s183 + $0x18] sm:$0xff]
        %v220 = vld [vmem:[%s183 + $0x20] sm:$0xff]
        %v221 = vld [vmem:[%s183 + $0x28] sm:$0xff]
        %v222 = vld [vmem:[%s183 + $0x30] sm:$0xff]
        %v223 = vld [vmem:[%s183 + $0x38] sm:$0xff]
        %v224 = vld [vmem:[%s183 + $0x40] sm:$0xff]
        %v225 = vld [vmem:[%s183 + $0x48] sm:$0xff]
        %v226 = vld [vmem:[%s183 + $0x50] sm:$0xff]
        %v227 = vld [vmem:[%s183 + $0x58] sm:$0xff]
        %v228 = vld [vmem:[%s183 + $0x60] sm:$0xff]
        %v229 = vld [vmem:[%s183 + $0x68] sm:$0xff]
        %v230 = vld [vmem:[%s183 + $0x70] sm:$0xff]
        %v231 = vld [vmem:[%s183 + $0x78] sm:$0xff]
        %v232 = vld [vmem:[%s183 + $0x80] sm:$0xff]
        %v233 = vld [vmem:[%s183 + $0x88] sm:$0xff]
        %v234 = vld [vmem:[%s183 + $0x90] sm:$0xff]
        %v235 = vld [vmem:[%s183 + $0x98] sm:$0xff]
        %v236 = vld [vmem:[%s183 + $0xa0] sm:$0xff]
        %v237 = vld [vmem:[%s183 + $0xa8] sm:$0xff]
        %v238 = vld [vmem:[%s183 + $0xb0] sm:$0xff]
        %v239 = vld [vmem:[%s183 + $0xb8] sm:$0xff]
        %v240 = vld [vmem:[%s183 + $0xc0] sm:$0xff]
        %v241 = vld [vmem:[%s183 + $0xc8] sm:$0xff]
        %v242 = vld [vmem:[%s183 + $0xd0] sm:$0xff]
        %v243 = vld [vmem:[%s183 + $0xd8] sm:$0xff]
        %v244 = vld [vmem:[%s183 + $0xe0] sm:$0xff]
        %v245 = vld [vmem:[%s183 + $0xe8] sm:$0xff]
        %v246 = vld [vmem:[%s183 + $0xf0] sm:$0xff]
        %v247 = vld [vmem:[%s183 + $0xf8] sm:$0xff]
        %248 = vst [vmem:[#allocation2] sm:$0xf] 0
        %249 = vst [vmem:[#allocation2 + $0x4] sm:$0xf] 0
        %250 = vst [vmem:[#allocation2 + $0x8] sm:$0x1] 0
        %s251 = scalar_lea.vmem [#allocation2], 204
        %252 = vst [vmem:[%s251] sm:$0xf] 0
        %253 = vst [vmem:[%s251 + $0x4] sm:$0xf] 0
        %254 = vst [vmem:[%s251 + $0x8] sm:$0x1] 0
        %s255 = scalar_lea.vmem [#allocation2], 12
        %vm256 = vcmask 1040384
        %vm257 = vsmask.f32 256
        %vm258 = vmand %vm256, %vm257
        %v259 = vld [vmem:[%s255] sm:$0x1]
        %v260 = vsel %vm258, 0, %v259
        %261 = vst [vmem:[%s255] sm:$0x1] %v260
        %v262 = vld [vmem:[%s255 + $0xc] sm:$0x1]
        %v263 = vsel %vm258, 0, %v262
        %264 = vst [vmem:[%s255 + $0xc] sm:$0x1] %v263
        %v265 = vld [vmem:[%s255 + $0x18] sm:$0x1]
        %v266 = vsel %vm258, 0, %v265
        %267 = vst [vmem:[%s255 + $0x18] sm:$0x1] %v266
        %v268 = vld [vmem:[%s255 + $0x24] sm:$0x1]
        %v269 = vsel %vm258, 0, %v268
        %270 = vst [vmem:[%s255 + $0x24] sm:$0x1] %v269
        %v271 = vld [vmem:[%s255 + $0x30] sm:$0x1]
        %v272 = vsel %vm258, 0, %v271
        %273 = vst [vmem:[%s255 + $0x30] sm:$0x1] %v272
        %v274 = vld [vmem:[%s255 + $0x3c] sm:$0x1]
        %v275 = vsel %vm258, 0, %v274
        %276 = vst [vmem:[%s255 + $0x3c] sm:$0x1] %v275
        %v277 = vld [vmem:[%s255 + $0x48] sm:$0x1]
        %v278 = vsel %vm258, 0, %v277
        %279 = vst [vmem:[%s255 + $0x48] sm:$0x1] %v278
        %v280 = vld [vmem:[%s255 + $0x54] sm:$0x1]
        %v281 = vsel %vm258, 0, %v280
        %282 = vst [vmem:[%s255 + $0x54] sm:$0x1] %v281
        %v283 = vld [vmem:[%s255 + $0x60] sm:$0x1]
        %v284 = vsel %vm258, 0, %v283
        %285 = vst [vmem:[%s255 + $0x60] sm:$0x1] %v284
        %v286 = vld [vmem:[%s255 + $0x6c] sm:$0x1]
        %v287 = vsel %vm258, 0, %v286
        %288 = vst [vmem:[%s255 + $0x6c] sm:$0x1] %v287
        %v289 = vld [vmem:[%s255 + $0x78] sm:$0x1]
        %v290 = vsel %vm258, 0, %v289
        %291 = vst [vmem:[%s255 + $0x78] sm:$0x1] %v290
        %v292 = vld [vmem:[%s255 + $0x84] sm:$0x1]
        %v293 = vsel %vm258, 0, %v292
        %294 = vst [vmem:[%s255 + $0x84] sm:$0x1] %v293
        %v295 = vld [vmem:[%s255 + $0x90] sm:$0x1]
        %v296 = vsel %vm258, 0, %v295
        %297 = vst [vmem:[%s255 + $0x90] sm:$0x1] %v296
        %v298 = vld [vmem:[%s255 + $0x9c] sm:$0x1]
        %v299 = vsel %vm258, 0, %v298
        %300 = vst [vmem:[%s255 + $0x9c] sm:$0x1] %v299
        %v301 = vld [vmem:[%s255 + $0xa8] sm:$0x1]
        %v302 = vsel %vm258, 0, %v301
        %303 = vst [vmem:[%s255 + $0xa8] sm:$0x1] %v302
        %v304 = vld [vmem:[%s255 + $0xb4] sm:$0x1]
        %v305 = vsel %vm258, 0, %v304
        %306 = vst [vmem:[%s255 + $0xb4] sm:$0x1] %v305
        %vm307 = vsmask.f32 7938
        %vm308 = vmand %vm256, %vm307
        %v309 = vld [vmem:[%s255 + $0x8] sm:$0x1]
        %v310 = vsel %vm308, 0, %v309
        %311 = vst [vmem:[%s255 + $0x8] sm:$0x1] %v310
        %v312 = vld [vmem:[%s255 + $0x14] sm:$0x1]
        %v313 = vsel %vm308, 0, %v312
        %314 = vst [vmem:[%s255 + $0x14] sm:$0x1] %v313
        %v315 = vld [vmem:[%s255 + $0x20] sm:$0x1]
        %v316 = vsel %vm308, 0, %v315
        %317 = vst [vmem:[%s255 + $0x20] sm:$0x1] %v316
        %v318 = vld [vmem:[%s255 + $0x2c] sm:$0x1]
        %v319 = vsel %vm308, 0, %v318
        %320 = vst [vmem:[%s255 + $0x2c] sm:$0x1] %v319
        %v321 = vld [vmem:[%s255 + $0x38] sm:$0x1]
        %v322 = vsel %vm308, 0, %v321
        %323 = vst [vmem:[%s255 + $0x38] sm:$0x1] %v322
        %v324 = vld [vmem:[%s255 + $0x44] sm:$0x1]
        %v325 = vsel %vm308, 0, %v324
        %326 = vst [vmem:[%s255 + $0x44] sm:$0x1] %v325
        %v327 = vld [vmem:[%s255 + $0x50] sm:$0x1]
        %v328 = vsel %vm308, 0, %v327
        %329 = vst [vmem:[%s255 + $0x50] sm:$0x1] %v328
        %v330 = vld [vmem:[%s255 + $0x5c] sm:$0x1]
        %v331 = vsel %vm308, 0, %v330
        %332 = vst [vmem:[%s255 + $0x5c] sm:$0x1] %v331
        %v333 = vld [vmem:[%s255 + $0x68] sm:$0x1]
        %v334 = vsel %vm308, 0, %v333
        %335 = vst [vmem:[%s255 + $0x68] sm:$0x1] %v334
        %v336 = vld [vmem:[%s255 + $0x74] sm:$0x1]
        %v337 = vsel %vm308, 0, %v336
        %338 = vst [vmem:[%s255 + $0x74] sm:$0x1] %v337
        %v339 = vld [vmem:[%s255 + $0x80] sm:$0x1]
        %v340 = vsel %vm308, 0, %v339
        %341 = vst [vmem:[%s255 + $0x80] sm:$0x1] %v340
        %v342 = vld [vmem:[%s255 + $0x8c] sm:$0x1]
        %v343 = vsel %vm308, 0, %v342
        %344 = vst [vmem:[%s255 + $0x8c] sm:$0x1] %v343
        %v345 = vld [vmem:[%s255 + $0x98] sm:$0x1]
        %v346 = vsel %vm308, 0, %v345
        %347 = vst [vmem:[%s255 + $0x98] sm:$0x1] %v346
        %v348 = vld [vmem:[%s255 + $0xa4] sm:$0x1]
        %v349 = vsel %vm308, 0, %v348
        %350 = vst [vmem:[%s255 + $0xa4] sm:$0x1] %v349
        %v351 = vld [vmem:[%s255 + $0xb0] sm:$0x1]
        %v352 = vsel %vm308, 0, %v351
        %353 = vst [vmem:[%s255 + $0xb0] sm:$0x1] %v352
        %v354 = vld [vmem:[%s255 + $0xbc] sm:$0x1]
        %v355 = vsel %vm308, 0, %v354
        %356 = vst [vmem:[%s255 + $0xbc] sm:$0x1] %v355
        %v357 = vpack.c.bf16 %v217, %v216
        %v358 = vpack.c.bf16 %v219, %v218
        %v359 = vpack.c.bf16 %v221, %v220
        %v360 = vpack.c.bf16 %v223, %v222
        %v361 = vpack.c.bf16 %v225, %v224
        %v362 = vpack.c.bf16 %v227, %v226
        %v363 = vpack.c.bf16 %v229, %v228
        %v364 = vpack.c.bf16 %v231, %v230
        %v365 = vpack.c.bf16 %v233, %v232
        %v366 = vpack.c.bf16 %v235, %v234
        %v367 = vpack.c.bf16 %v237, %v236
        %v368 = vpack.c.bf16 %v239, %v238
        %v369 = vpack.c.bf16 %v241, %v240
        %v370 = vpack.c.bf16 %v243, %v242
        %v371 = vpack.c.bf16 %v245, %v244
        %v372 = vpack.c.bf16 %v247, %v246
        %v389 = vunpack.c.l.b16 %v357
        %v390 = vunpack.c.h.b16 %v357
        %v391 = vunpack.c.l.b16 %v358
        %v392 = vunpack.c.h.b16 %v358
        %v393 = vunpack.c.l.b16 %v359
        %v394 = vunpack.c.h.b16 %v359
        %v395 = vunpack.c.l.b16 %v360
        %v396 = vunpack.c.h.b16 %v360
        %v397 = vunpack.c.l.b16 %v361
        %v398 = vunpack.c.h.b16 %v361
        %v399 = vunpack.c.l.b16 %v362
        %v400 = vunpack.c.h.b16 %v362
        %v401 = vunpack.c.l.b16 %v363
        %v402 = vunpack.c.h.b16 %v363
        %v403 = vunpack.c.l.b16 %v364
        %v404 = vunpack.c.h.b16 %v364
        %v405 = vunpack.c.l.b16 %v365
        %v406 = vunpack.c.h.b16 %v365
        %v407 = vunpack.c.l.b16 %v366
        %v408 = vunpack.c.h.b16 %v366
        %v409 = vunpack.c.l.b16 %v367
        %v410 = vunpack.c.h.b16 %v367
        %v411 = vunpack.c.l.b16 %v368
        %v412 = vunpack.c.h.b16 %v368
        %v413 = vunpack.c.l.b16 %v369
        %v414 = vunpack.c.h.b16 %v369
        %v415 = vunpack.c.l.b16 %v370
        %v416 = vunpack.c.h.b16 %v370
        %v417 = vunpack.c.l.b16 %v371
        %v418 = vunpack.c.h.b16 %v371
        %v419 = vunpack.c.l.b16 %v372
        %v420 = vunpack.c.h.b16 %v372
        %v421 = vpack.c.b16 %v389, %v389
        %v422 = vpack.c.b16 %v390, %v390
        %v423 = vpack.c.b16 %v391, %v391
        %v424 = vpack.c.b16 %v392, %v392
        %v425 = vpack.c.b16 %v393, %v393
        %v426 = vpack.c.b16 %v394, %v394
        %v427 = vpack.c.b16 %v395, %v395
        %v428 = vpack.c.b16 %v396, %v396
        %v429 = vpack.c.b16 %v397, %v397
        %v430 = vpack.c.b16 %v398, %v398
        %v431 = vpack.c.b16 %v399, %v399
        %v432 = vpack.c.b16 %v400, %v400
        %v433 = vpack.c.b16 %v401, %v401
        %v434 = vpack.c.b16 %v402, %v402
        %v435 = vpack.c.b16 %v403, %v403
        %v436 = vpack.c.b16 %v404, %v404
        %v437 = vpack.c.b16 %v405, %v405
        %v438 = vpack.c.b16 %v406, %v406
        %v439 = vpack.c.b16 %v407, %v407
        %v440 = vpack.c.b16 %v408, %v408
        %v441 = vpack.c.b16 %v409, %v409
        %v442 = vpack.c.b16 %v410, %v410
        %v443 = vpack.c.b16 %v411, %v411
        %v444 = vpack.c.b16 %v412, %v412
        %v445 = vpack.c.b16 %v413, %v413
        %v446 = vpack.c.b16 %v414, %v414
        %v447 = vpack.c.b16 %v415, %v415
        %v448 = vpack.c.b16 %v416, %v416
        %v449 = vpack.c.b16 %v417, %v417
        %v450 = vpack.c.b16 %v418, %v418
        %v451 = vpack.c.b16 %v419, %v419
        %v452 = vpack.c.b16 %v420, %v420
        %vm453 = vsmask.f32 4368
        %vm454 = vmor %vm257, %vm453
        %v456 = vshrl.u32 %v421, 16
        %v458 = vrot.slane %v456, 7
        %v459 = vshll.u32 %v421, 16
        %v461 = vor.u32 %v458, %v459
        %v462 = vrot.slane %v458, 4
        %v464 = vshrl.u32 %v422, 16
        %v466 = vrot.slane %v464, 7
        %v467 = vshll.u32 %v422, 16
        %v469 = vor.u32 %v466, %v467
        %v470 = vsel %vm454, %v462, %v469
        %v471 = vrot.slane %v466, 4
        %v473 = vshrl.u32 %v423, 16
        %v475 = vrot.slane %v473, 7
        %v476 = vshll.u32 %v423, 16
        %v478 = vor.u32 %v475, %v476
        %v479 = vrot.slane %v475, 4
        %v481 = vshrl.u32 %v424, 16
        %v483 = vrot.slane %v481, 7
        %v484 = vshll.u32 %v424, 16
        %v486 = vor.u32 %v483, %v484
        %v487 = vsel %vm454, %v479, %v486
        %v488 = vrot.slane %v483, 4
        %v490 = vshrl.u32 %v425, 16
        %v492 = vrot.slane %v490, 7
        %v493 = vshll.u32 %v425, 16
        %v495 = vor.u32 %v492, %v493
        %v496 = vrot.slane %v492, 4
        %v498 = vshrl.u32 %v426, 16
        %v500 = vrot.slane %v498, 7
        %v501 = vshll.u32 %v426, 16
        %v503 = vor.u32 %v500, %v501
        %v504 = vsel %vm454, %v496, %v503
        %v505 = vrot.slane %v500, 4
        %v507 = vshrl.u32 %v427, 16
        %v509 = vrot.slane %v507, 7
        %v510 = vshll.u32 %v427, 16
        %v512 = vor.u32 %v509, %v510
        %v513 = vrot.slane %v509, 4
        %v515 = vshrl.u32 %v428, 16
        %v517 = vrot.slane %v515, 7
        %v518 = vshll.u32 %v428, 16
        %v520 = vor.u32 %v517, %v518
        %v521 = vsel %vm454, %v513, %v520
        %v522 = vrot.slane %v517, 4
        %v524 = vshrl.u32 %v429, 16
        %v526 = vrot.slane %v524, 7
        %v527 = vshll.u32 %v429, 16
        %v529 = vor.u32 %v526, %v527
        %v530 = vrot.slane %v526, 4
        %v532 = vshrl.u32 %v430, 16
        %v534 = vrot.slane %v532, 7
        %v535 = vshll.u32 %v430, 16
        %v537 = vor.u32 %v534, %v535
        %v538 = vsel %vm454, %v530, %v537
        %v539 = vrot.slane %v534, 4
        %v541 = vshrl.u32 %v431, 16
        %v543 = vrot.slane %v541, 7
        %v544 = vshll.u32 %v431, 16
        %v546 = vor.u32 %v543, %v544
        %v547 = vrot.slane %v543, 4
        %v549 = vshrl.u32 %v432, 16
        %v551 = vrot.slane %v549, 7
        %v552 = vshll.u32 %v432, 16
        %v554 = vor.u32 %v551, %v552
        %v555 = vsel %vm454, %v547, %v554
        %v556 = vrot.slane %v551, 4
        %v558 = vshrl.u32 %v433, 16
        %v560 = vrot.slane %v558, 7
        %v561 = vshll.u32 %v433, 16
        %v563 = vor.u32 %v560, %v561
        %v564 = vrot.slane %v560, 4
        %v566 = vshrl.u32 %v434, 16
        %v568 = vrot.slane %v566, 7
        %v569 = vshll.u32 %v434, 16
        %v571 = vor.u32 %v568, %v569
        %v572 = vsel %vm454, %v564, %v571
        %v573 = vrot.slane %v568, 4
        %v575 = vshrl.u32 %v435, 16
        %v577 = vrot.slane %v575, 7
        %v578 = vshll.u32 %v435, 16
        %v580 = vor.u32 %v577, %v578
        %v581 = vrot.slane %v577, 4
        %v583 = vshrl.u32 %v436, 16
        %v585 = vrot.slane %v583, 7
        %v586 = vshll.u32 %v436, 16
        %v588 = vor.u32 %v585, %v586
        %v589 = vsel %vm454, %v581, %v588
        %v590 = vrot.slane %v585, 4
        %v592 = vshrl.u32 %v437, 16
        %v594 = vrot.slane %v592, 7
        %v595 = vshll.u32 %v437, 16
        %v597 = vor.u32 %v594, %v595
        %v598 = vrot.slane %v594, 4
        %v600 = vshrl.u32 %v438, 16
        %v602 = vrot.slane %v600, 7
        %v603 = vshll.u32 %v438, 16
        %v605 = vor.u32 %v602, %v603
        %v606 = vsel %vm454, %v598, %v605
        %v607 = vrot.slane %v602, 4
        %v609 = vshrl.u32 %v439, 16
        %v611 = vrot.slane %v609, 7
        %v612 = vshll.u32 %v439, 16
        %v614 = vor.u32 %v611, %v612
        %v615 = vrot.slane %v611, 4
        %v617 = vshrl.u32 %v440, 16
        %v619 = vrot.slane %v617, 7
        %v620 = vshll.u32 %v440, 16
        %v622 = vor.u32 %v619, %v620
        %v623 = vsel %vm454, %v615, %v622
        %v624 = vrot.slane %v619, 4
        %v626 = vshrl.u32 %v441, 16
        %v628 = vrot.slane %v626, 7
        %v629 = vshll.u32 %v441, 16
        %v631 = vor.u32 %v628, %v629
        %v632 = vrot.slane %v628, 4
        %v634 = vshrl.u32 %v442, 16
        %v636 = vrot.slane %v634, 7
        %v637 = vshll.u32 %v442, 16
        %v639 = vor.u32 %v636, %v637
        %v640 = vsel %vm454, %v632, %v639
        %v641 = vrot.slane %v636, 4
        %v643 = vshrl.u32 %v443, 16
        %v645 = vrot.slane %v643, 7
        %v646 = vshll.u32 %v443, 16
        %v648 = vor.u32 %v645, %v646
        %v649 = vrot.slane %v645, 4
        %v651 = vshrl.u32 %v444, 16
        %v653 = vrot.slane %v651, 7
        %v654 = vshll.u32 %v444, 16
        %v656 = vor.u32 %v653, %v654
        %v657 = vsel %vm454, %v649, %v656
        %v658 = vrot.slane %v653, 4
        %v660 = vshrl.u32 %v445, 16
        %v662 = vrot.slane %v660, 7
        %v663 = vshll.u32 %v445, 16
        %v665 = vor.u32 %v662, %v663
        %v666 = vrot.slane %v662, 4
        %v668 = vshrl.u32 %v446, 16
        %v670 = vrot.slane %v668, 7
        %v671 = vshll.u32 %v446, 16
        %v673 = vor.u32 %v670, %v671
        %v674 = vsel %vm454, %v666, %v673
        %v675 = vrot.slane %v670, 4
        %v677 = vshrl.u32 %v447, 16
        %v679 = vrot.slane %v677, 7
        %v680 = vshll.u32 %v447, 16
        %v682 = vor.u32 %v679, %v680
        %v683 = vrot.slane %v679, 4
        %v685 = vshrl.u32 %v448, 16
        %v687 = vrot.slane %v685, 7
        %v688 = vshll.u32 %v448, 16
        %v690 = vor.u32 %v687, %v688
        %v691 = vsel %vm454, %v683, %v690
        %v692 = vrot.slane %v687, 4
        %v694 = vshrl.u32 %v449, 16
        %v696 = vrot.slane %v694, 7
        %v697 = vshll.u32 %v449, 16
        %v699 = vor.u32 %v696, %v697
        %v700 = vrot.slane %v696, 4
        %v702 = vshrl.u32 %v450, 16
        %v704 = vrot.slane %v702, 7
        %v705 = vshll.u32 %v450, 16
        %v707 = vor.u32 %v704, %v705
        %v708 = vsel %vm454, %v700, %v707
        %v709 = vrot.slane %v704, 4
        %v711 = vshrl.u32 %v451, 16
        %v713 = vrot.slane %v711, 7
        %v714 = vshll.u32 %v451, 16
        %v716 = vor.u32 %v713, %v714
        %v717 = vrot.slane %v713, 4
        %v719 = vshrl.u32 %v452, 16
        %v721 = vrot.slane %v719, 7
        %v722 = vshll.u32 %v452, 16
        %v724 = vor.u32 %v721, %v722
        %v725 = vsel %vm454, %v717, %v724
        %v726 = vrot.slane %v721, 4
        %vm775 = vcmask 1043456
        %vm776 = vmand %vm775, %vm307
        %v777 = vld [vmem:[%s255] sm:$0xf]
        %v778 = vsel %vm776, %v461, %v777
        %779 = vst [vmem:[%s255] sm:$0xf] %v778
        %780 = vst [vmem:[%s255 + $0x4] sm:$0xf] %v470
        %v781 = vld [vmem:[%s255 + $0x8] sm:$0x1]
        %v782 = vsel %vm258, %v471, %v781
        %783 = vst [vmem:[%s255 + $0x8] sm:$0x1] %v782
        %v784 = vld [vmem:[%s255 + $0xc] sm:$0xf]
        %v785 = vsel %vm776, %v478, %v784
        %786 = vst [vmem:[%s255 + $0xc] sm:$0xf] %v785
        %787 = vst [vmem:[%s255 + $0x10] sm:$0xf] %v487
        %v788 = vld [vmem:[%s255 + $0x14] sm:$0x1]
        %v789 = vsel %vm258, %v488, %v788
        %790 = vst [vmem:[%s255 + $0x14] sm:$0x1] %v789
        %v791 = vld [vmem:[%s255 + $0x18] sm:$0xf]
        %v792 = vsel %vm776, %v495, %v791
        %793 = vst [vmem:[%s255 + $0x18] sm:$0xf] %v792
        %794 = vst [vmem:[%s255 + $0x1c] sm:$0xf] %v504
        %v795 = vld [vmem:[%s255 + $0x20] sm:$0x1]
        %v796 = vsel %vm258, %v505, %v795
        %797 = vst [vmem:[%s255 + $0x20] sm:$0x1] %v796
        %v798 = vld [vmem:[%s255 + $0x24] sm:$0xf]
        %v799 = vsel %vm776, %v512, %v798
        %800 = vst [vmem:[%s255 + $0x24] sm:$0xf] %v799
        %801 = vst [vmem:[%s255 + $0x28] sm:$0xf] %v521
        %v802 = vld [vmem:[%s255 + $0x2c] sm:$0x1]
        %v803 = vsel %vm258, %v522, %v802
        %804 = vst [vmem:[%s255 + $0x2c] sm:$0x1] %v803
        %v805 = vld [vmem:[%s255 + $0x30] sm:$0xf]
        %v806 = vsel %vm776, %v529, %v805
        %807 = vst [vmem:[%s255 + $0x30] sm:$0xf] %v806
        %808 = vst [vmem:[%s255 + $0x34] sm:$0xf] %v538
        %v809 = vld [vmem:[%s255 + $0x38] sm:$0x1]
        %v810 = vsel %vm258, %v539, %v809
        %811 = vst [vmem:[%s255 + $0x38] sm:$0x1] %v810
        %v812 = vld [vmem:[%s255 + $0x3c] sm:$0xf]
        %v813 = vsel %vm776, %v546, %v812
        %814 = vst [vmem:[%s255 + $0x3c] sm:$0xf] %v813
        %815 = vst [vmem:[%s255 + $0x40] sm:$0xf] %v555
        %v816 = vld [vmem:[%s255 + $0x44] sm:$0x1]
        %v817 = vsel %vm258, %v556, %v816
        %818 = vst [vmem:[%s255 + $0x44] sm:$0x1] %v817
        %v819 = vld [vmem:[%s255 + $0x48] sm:$0xf]
        %v820 = vsel %vm776, %v563, %v819
        %821 = vst [vmem:[%s255 + $0x48] sm:$0xf] %v820
        %822 = vst [vmem:[%s255 + $0x4c] sm:$0xf] %v572
        %v823 = vld [vmem:[%s255 + $0x50] sm:$0x1]
        %v824 = vsel %vm258, %v573, %v823
        %825 = vst [vmem:[%s255 + $0x50] sm:$0x1] %v824
        %v826 = vld [vmem:[%s255 + $0x54] sm:$0xf]
        %v827 = vsel %vm776, %v580, %v826
        %828 = vst [vmem:[%s255 + $0x54] sm:$0xf] %v827
        %829 = vst [vmem:[%s255 + $0x58] sm:$0xf] %v589
        %v830 = vld [vmem:[%s255 + $0x5c] sm:$0x1]
        %v831 = vsel %vm258, %v590, %v830
        %832 = vst [vmem:[%s255 + $0x5c] sm:$0x1] %v831
        %v833 = vld [vmem:[%s255 + $0x60] sm:$0xf]
        %v834 = vsel %vm776, %v597, %v833
        %835 = vst [vmem:[%s255 + $0x60] sm:$0xf] %v834
        %836 = vst [vmem:[%s255 + $0x64] sm:$0xf] %v606
        %v837 = vld [vmem:[%s255 + $0x68] sm:$0x1]
        %v838 = vsel %vm258, %v607, %v837
        %839 = vst [vmem:[%s255 + $0x68] sm:$0x1] %v838
        %v840 = vld [vmem:[%s255 + $0x6c] sm:$0xf]
        %v841 = vsel %vm776, %v614, %v840
        %842 = vst [vmem:[%s255 + $0x6c] sm:$0xf] %v841
        %843 = vst [vmem:[%s255 + $0x70] sm:$0xf] %v623
        %v844 = vld [vmem:[%s255 + $0x74] sm:$0x1]
        %v845 = vsel %vm258, %v624, %v844
        %846 = vst [vmem:[%s255 + $0x74] sm:$0x1] %v845
        %v847 = vld [vmem:[%s255 + $0x78] sm:$0xf]
        %v848 = vsel %vm776, %v631, %v847
        %849 = vst [vmem:[%s255 + $0x78] sm:$0xf] %v848
        %850 = vst [vmem:[%s255 + $0x7c] sm:$0xf] %v640
        %v851 = vld [vmem:[%s255 + $0x80] sm:$0x1]
        %v852 = vsel %vm258, %v641, %v851
        %853 = vst [vmem:[%s255 + $0x80] sm:$0x1] %v852
        %v854 = vld [vmem:[%s255 + $0x84] sm:$0xf]
        %v855 = vsel %vm776, %v648, %v854
        %856 = vst [vmem:[%s255 + $0x84] sm:$0xf] %v855
        %857 = vst [vmem:[%s255 + $0x88] sm:$0xf] %v657
        %v858 = vld [vmem:[%s255 + $0x8c] sm:$0x1]
        %v859 = vsel %vm258, %v658, %v858
        %860 = vst [vmem:[%s255 + $0x8c] sm:$0x1] %v859
        %v861 = vld [vmem:[%s255 + $0x90] sm:$0xf]
        %v862 = vsel %vm776, %v665, %v861
        %863 = vst [vmem:[%s255 + $0x90] sm:$0xf] %v862
        %864 = vst [vmem:[%s255 + $0x94] sm:$0xf] %v674
        %v865 = vld [vmem:[%s255 + $0x98] sm:$0x1]
        %v866 = vsel %vm258, %v675, %v865
        %867 = vst [vmem:[%s255 + $0x98] sm:$0x1] %v866
        %v868 = vld [vmem:[%s255 + $0x9c] sm:$0xf]
        %v869 = vsel %vm776, %v682, %v868
        %870 = vst [vmem:[%s255 + $0x9c] sm:$0xf] %v869
        %871 = vst [vmem:[%s255 + $0xa0] sm:$0xf] %v691
        %v872 = vld [vmem:[%s255 + $0xa4] sm:$0x1]
        %v873 = vsel %vm258, %v692, %v872
        %874 = vst [vmem:[%s255 + $0xa4] sm:$0x1] %v873
        %v875 = vld [vmem:[%s255 + $0xa8] sm:$0xf]
        %v876 = vsel %vm776, %v699, %v875
        %877 = vst [vmem:[%s255 + $0xa8] sm:$0xf] %v876
        %878 = vst [vmem:[%s255 + $0xac] sm:$0xf] %v708
        %v879 = vld [vmem:[%s255 + $0xb0] sm:$0x1]
        %v880 = vsel %vm258, %v709, %v879
        %881 = vst [vmem:[%s255 + $0xb0] sm:$0x1] %v880
        %v882 = vld [vmem:[%s255 + $0xb4] sm:$0xf]
        %v883 = vsel %vm776, %v716, %v882
        %884 = vst [vmem:[%s255 + $0xb4] sm:$0xf] %v883
        %885 = vst [vmem:[%s255 + $0xb8] sm:$0xf] %v725
        %v886 = vld [vmem:[%s255 + $0xbc] sm:$0x1]
        %v887 = vsel %vm258, %v726, %v886
        %888 = vst [vmem:[%s255 + $0xbc] sm:$0x1] %v887
        %v889 = vld [vmem:[#allocation2] sm:$0xf]
        %v890 = vld [vmem:[#allocation2 + $0x4] sm:$0xf]
        %v891 = vld [vmem:[#allocation2 + $0xc] sm:$0xf]
        %v892 = vld [vmem:[#allocation2 + $0x10] sm:$0xf]
        %v893 = vld [vmem:[#allocation2 + $0x18] sm:$0xf]
        %v894 = vld [vmem:[#allocation2 + $0x1c] sm:$0xf]
        %v895 = vld [vmem:[#allocation2 + $0x24] sm:$0xf]
        %v896 = vld [vmem:[#allocation2 + $0x28] sm:$0xf]
        %v897 = vld [vmem:[#allocation2 + $0x30] sm:$0xf]
        %v898 = vld [vmem:[#allocation2 + $0x34] sm:$0xf]
        %v899 = vld [vmem:[#allocation2 + $0x3c] sm:$0xf]
        %v900 = vld [vmem:[#allocation2 + $0x40] sm:$0xf]
        %v901 = vld [vmem:[#allocation2 + $0x48] sm:$0xf]
        %v902 = vld [vmem:[#allocation2 + $0x4c] sm:$0xf]
        %v903 = vld [vmem:[#allocation2 + $0x54] sm:$0xf]
        %v904 = vld [vmem:[#allocation2 + $0x58] sm:$0xf]
        %v905 = vld [vmem:[#allocation2 + $0x60] sm:$0xf]
        %v906 = vld [vmem:[#allocation2 + $0x64] sm:$0xf]
        %v907 = vld [vmem:[#allocation2 + $0x6c] sm:$0xf]
        %v908 = vld [vmem:[#allocation2 + $0x70] sm:$0xf]
        %v909 = vld [vmem:[#allocation2 + $0x78] sm:$0xf]
        %v910 = vld [vmem:[#allocation2 + $0x7c] sm:$0xf]
        %v911 = vld [vmem:[#allocation2 + $0x84] sm:$0xf]
        %v912 = vld [vmem:[#allocation2 + $0x88] sm:$0xf]
        %v913 = vld [vmem:[#allocation2 + $0x90] sm:$0xf]
        %v914 = vld [vmem:[#allocation2 + $0x94] sm:$0xf]
        %v915 = vld [vmem:[#allocation2 + $0x9c] sm:$0xf]
        %v916 = vld [vmem:[#allocation2 + $0xa0] sm:$0xf]
        %v917 = vld [vmem:[#allocation2 + $0xa8] sm:$0xf]
        %v918 = vld [vmem:[#allocation2 + $0xac] sm:$0xf]
        %v919 = vld [vmem:[#allocation2 + $0xb4] sm:$0xf]
        %v920 = vld [vmem:[#allocation2 + $0xb8] sm:$0xf]
        %v921 = vld [vmem:[#allocation6] sm:$0xf]
        %v922 = vld [vmem:[#allocation6 + $0x4] sm:$0xf]
        %v923 = vld [vmem:[#allocation6 + $0x8] sm:$0xf]
        %v924 = vld [vmem:[#allocation6 + $0xc] sm:$0xf]
        %v925 = vld [vmem:[#allocation6 + $0x10] sm:$0xf]
        %v926 = vld [vmem:[#allocation6 + $0x14] sm:$0xf]
        %v927 = vld [vmem:[#allocation6 + $0x18] sm:$0xf]
        %v928 = vld [vmem:[#allocation6 + $0x1c] sm:$0xf]
        %v929 = vld [vmem:[#allocation6 + $0x20] sm:$0xf]
        %v930 = vld [vmem:[#allocation6 + $0x24] sm:$0xf]
        %v931 = vld [vmem:[#allocation6 + $0x28] sm:$0xf]
        %v932 = vld [vmem:[#allocation6 + $0x2c] sm:$0xf]
        %v933 = vld [vmem:[#allocation6 + $0x30] sm:$0xf]
        %v934 = vld [vmem:[#allocation6 + $0x34] sm:$0xf]
        %v935 = vld [vmem:[#allocation6 + $0x38] sm:$0xf]
        %v936 = vld [vmem:[#allocation6 + $0x3c] sm:$0xf]
        %v937 = vld [vmem:[#allocation2 + $0x8] sm:$0x1]
        %v938 = vld [vmem:[#allocation2 + $0x14] sm:$0x1]
        %v939 = vld [vmem:[#allocation2 + $0x20] sm:$0x1]
        %v940 = vld [vmem:[#allocation2 + $0x2c] sm:$0x1]
        %v941 = vld [vmem:[#allocation2 + $0x38] sm:$0x1]
        %v942 = vld [vmem:[#allocation2 + $0x44] sm:$0x1]
        %v943 = vld [vmem:[#allocation2 + $0x50] sm:$0x1]
        %v944 = vld [vmem:[#allocation2 + $0x5c] sm:$0x1]
        %v945 = vld [vmem:[#allocation2 + $0x68] sm:$0x1]
        %v946 = vld [vmem:[#allocation2 + $0x74] sm:$0x1]
        %v947 = vld [vmem:[#allocation2 + $0x80] sm:$0x1]
        %v948 = vld [vmem:[#allocation2 + $0x8c] sm:$0x1]
        %v949 = vld [vmem:[#allocation2 + $0x98] sm:$0x1]
        %v950 = vld [vmem:[#allocation2 + $0xa4] sm:$0x1]
        %v951 = vld [vmem:[#allocation2 + $0xb0] sm:$0x1]
        %v952 = vld [vmem:[#allocation2 + $0xbc] sm:$0x1]
        %vm953 = vsmask.f32 3328
        %vm954 = vsmask.f32 7440
        %vm955 = vmor %vm953, %vm954
        %v957 = vshrl.u32 %v889, 16
        %v959 = vrot.slane %v957, 4
        %v960 = vshll.u32 %v889, 16
        %v962 = vrot.slane %v960, 5
        %v963 = vor.u32 %v959, %v962
        %v964 = vrot.slane %v963, 4
        %v966 = vshll.u32 %v890, 16
        %v968 = vrot.slane %v966, 5
        %v969 = vsel %vm955, %v964, %v968
        %v970 = vshrl.u32 %v890, 16
        %v972 = vrot.slane %v970, 4
        %v973 = vor.u32 %v972, %v968
        %v974 = vrot.slane %v973, 4
        %v976 = vshll.u32 %v937, 16
        %v978 = vrot.slane %v976, 5
        %v979 = vsel %vm955, %v974, %v978
        %v981 = vshrl.u32 %v891, 16
        %v983 = vrot.slane %v981, 4
        %v984 = vshll.u32 %v891, 16
        %v986 = vrot.slane %v984, 5
        %v987 = vor.u32 %v983, %v986
        %v988 = vrot.slane %v987, 4
        %v990 = vshll.u32 %v892, 16
        %v992 = vrot.slane %v990, 5
        %v993 = vsel %vm955, %v988, %v992
        %v994 = vshrl.u32 %v892, 16
        %v996 = vrot.slane %v994, 4
        %v997 = vor.u32 %v996, %v992
        %v998 = vrot.slane %v997, 4
        %v1000 = vshll.u32 %v938, 16
        %v1002 = vrot.slane %v1000, 5
        %v1003 = vsel %vm955, %v998, %v1002
        %v1005 = vshrl.u32 %v893, 16
        %v1007 = vrot.slane %v1005, 4
        %v1008 = vshll.u32 %v893, 16
        %v1010 = vrot.slane %v1008, 5
        %v1011 = vor.u32 %v1007, %v1010
        %v1012 = vrot.slane %v1011, 4
        %v1014 = vshll.u32 %v894, 16
        %v1016 = vrot.slane %v1014, 5
        %v1017 = vsel %vm955, %v1012, %v1016
        %v1018 = vshrl.u32 %v894, 16
        %v1020 = vrot.slane %v1018, 4
        %v1021 = vor.u32 %v1020, %v1016
        %v1022 = vrot.slane %v1021, 4
        %v1024 = vshll.u32 %v939, 16
        %v1026 = vrot.slane %v1024, 5
        %v1027 = vsel %vm955, %v1022, %v1026
        %v1029 = vshrl.u32 %v895, 16
        %v1031 = vrot.slane %v1029, 4
        %v1032 = vshll.u32 %v895, 16
        %v1034 = vrot.slane %v1032, 5
        %v1035 = vor.u32 %v1031, %v1034
        %v1036 = vrot.slane %v1035, 4
        %v1038 = vshll.u32 %v896, 16
        %v1040 = vrot.slane %v1038, 5
        %v1041 = vsel %vm955, %v1036, %v1040
        %v1042 = vshrl.u32 %v896, 16
        %v1044 = vrot.slane %v1042, 4
        %v1045 = vor.u32 %v1044, %v1040
        %v1046 = vrot.slane %v1045, 4
        %v1048 = vshll.u32 %v940, 16
        %v1050 = vrot.slane %v1048, 5
        %v1051 = vsel %vm955, %v1046, %v1050
        %v1053 = vshrl.u32 %v897, 16
        %v1055 = vrot.slane %v1053, 4
        %v1056 = vshll.u32 %v897, 16
        %v1058 = vrot.slane %v1056, 5
        %v1059 = vor.u32 %v1055, %v1058
        %v1060 = vrot.slane %v1059, 4
        %v1062 = vshll.u32 %v898, 16
        %v1064 = vrot.slane %v1062, 5
        %v1065 = vsel %vm955, %v1060, %v1064
        %v1066 = vshrl.u32 %v898, 16
        %v1068 = vrot.slane %v1066, 4
        %v1069 = vor.u32 %v1068, %v1064
        %v1070 = vrot.slane %v1069, 4
        %v1072 = vshll.u32 %v941, 16
        %v1074 = vrot.slane %v1072, 5
        %v1075 = vsel %vm955, %v1070, %v1074
        %v1077 = vshrl.u32 %v899, 16
        %v1079 = vrot.slane %v1077, 4
        %v1080 = vshll.u32 %v899, 16
        %v1082 = vrot.slane %v1080, 5
        %v1083 = vor.u32 %v1079, %v1082
        %v1084 = vrot.slane %v1083, 4
        %v1086 = vshll.u32 %v900, 16
        %v1088 = vrot.slane %v1086, 5
        %v1089 = vsel %vm955, %v1084, %v1088
        %v1090 = vshrl.u32 %v900, 16
        %v1092 = vrot.slane %v1090, 4
        %v1093 = vor.u32 %v1092, %v1088
        %v1094 = vrot.slane %v1093, 4
        %v1096 = vshll.u32 %v942, 16
        %v1098 = vrot.slane %v1096, 5
        %v1099 = vsel %vm955, %v1094, %v1098
        %v1101 = vshrl.u32 %v901, 16
        %v1103 = vrot.slane %v1101, 4
        %v1104 = vshll.u32 %v901, 16
        %v1106 = vrot.slane %v1104, 5
        %v1107 = vor.u32 %v1103, %v1106
        %v1108 = vrot.slane %v1107, 4
        %v1110 = vshll.u32 %v902, 16
        %v1112 = vrot.slane %v1110, 5
        %v1113 = vsel %vm955, %v1108, %v1112
        %v1114 = vshrl.u32 %v902, 16
        %v1116 = vrot.slane %v1114, 4
        %v1117 = vor.u32 %v1116, %v1112
        %v1118 = vrot.slane %v1117, 4
        %v1120 = vshll.u32 %v943, 16
        %v1122 = vrot.slane %v1120, 5
        %v1123 = vsel %vm955, %v1118, %v1122
        %v1125 = vshrl.u32 %v903, 16
        %v1127 = vrot.slane %v1125, 4
        %v1128 = vshll.u32 %v903, 16
        %v1130 = vrot.slane %v1128, 5
        %v1131 = vor.u32 %v1127, %v1130
        %v1132 = vrot.slane %v1131, 4
        %v1134 = vshll.u32 %v904, 16
        %v1136 = vrot.slane %v1134, 5
        %v1137 = vsel %vm955, %v1132, %v1136
        %v1138 = vshrl.u32 %v904, 16
        %v1140 = vrot.slane %v1138, 4
        %v1141 = vor.u32 %v1140, %v1136
        %v1142 = vrot.slane %v1141, 4
        %v1144 = vshll.u32 %v944, 16
        %v1146 = vrot.slane %v1144, 5
        %v1147 = vsel %vm955, %v1142, %v1146
        %v1149 = vshrl.u32 %v905, 16
        %v1151 = vrot.slane %v1149, 4
        %v1152 = vshll.u32 %v905, 16
        %v1154 = vrot.slane %v1152, 5
        %v1155 = vor.u32 %v1151, %v1154
        %v1156 = vrot.slane %v1155, 4
        %v1158 = vshll.u32 %v906, 16
        %v1160 = vrot.slane %v1158, 5
        %v1161 = vsel %vm955, %v1156, %v1160
        %v1162 = vshrl.u32 %v906, 16
        %v1164 = vrot.slane %v1162, 4
        %v1165 = vor.u32 %v1164, %v1160
        %v1166 = vrot.slane %v1165, 4
        %v1168 = vshll.u32 %v945, 16
        %v1170 = vrot.slane %v1168, 5
        %v1171 = vsel %vm955, %v1166, %v1170
        %v1173 = vshrl.u32 %v907, 16
        %v1175 = vrot.slane %v1173, 4
        %v1176 = vshll.u32 %v907, 16
        %v1178 = vrot.slane %v1176, 5
        %v1179 = vor.u32 %v1175, %v1178
        %v1180 = vrot.slane %v1179, 4
        %v1182 = vshll.u32 %v908, 16
        %v1184 = vrot.slane %v1182, 5
        %v1185 = vsel %vm955, %v1180, %v1184
        %v1186 = vshrl.u32 %v908, 16
        %v1188 = vrot.slane %v1186, 4
        %v1189 = vor.u32 %v1188, %v1184
        %v1190 = vrot.slane %v1189, 4
        %v1192 = vshll.u32 %v946, 16
        %v1194 = vrot.slane %v1192, 5
        %v1195 = vsel %vm955, %v1190, %v1194
        %v1197 = vshrl.u32 %v909, 16
        %v1199 = vrot.slane %v1197, 4
        %v1200 = vshll.u32 %v909, 16
        %v1202 = vrot.slane %v1200, 5
        %v1203 = vor.u32 %v1199, %v1202
        %v1204 = vrot.slane %v1203, 4
        %v1206 = vshll.u32 %v910, 16
        %v1208 = vrot.slane %v1206, 5
        %v1209 = vsel %vm955, %v1204, %v1208
        %v1210 = vshrl.u32 %v910, 16
        %v1212 = vrot.slane %v1210, 4
        %v1213 = vor.u32 %v1212, %v1208
        %v1214 = vrot.slane %v1213, 4
        %v1216 = vshll.u32 %v947, 16
        %v1218 = vrot.slane %v1216, 5
        %v1219 = vsel %vm955, %v1214, %v1218
        %v1221 = vshrl.u32 %v911, 16
        %v1223 = vrot.slane %v1221, 4
        %v1224 = vshll.u32 %v911, 16
        %v1226 = vrot.slane %v1224, 5
        %v1227 = vor.u32 %v1223, %v1226
        %v1228 = vrot.slane %v1227, 4
        %v1230 = vshll.u32 %v912, 16
        %v1232 = vrot.slane %v1230, 5
        %v1233 = vsel %vm955, %v1228, %v1232
        %v1234 = vshrl.u32 %v912, 16
        %v1236 = vrot.slane %v1234, 4
        %v1237 = vor.u32 %v1236, %v1232
        %v1238 = vrot.slane %v1237, 4
        %v1240 = vshll.u32 %v948, 16
        %v1242 = vrot.slane %v1240, 5
        %v1243 = vsel %vm955, %v1238, %v1242
        %v1245 = vshrl.u32 %v913, 16
        %v1247 = vrot.slane %v1245, 4
        %v1248 = vshll.u32 %v913, 16
        %v1250 = vrot.slane %v1248, 5
        %v1251 = vor.u32 %v1247, %v1250
        %v1252 = vrot.slane %v1251, 4
        %v1254 = vshll.u32 %v914, 16
        %v1256 = vrot.slane %v1254, 5
        %v1257 = vsel %vm955, %v1252, %v1256
        %v1258 = vshrl.u32 %v914, 16
        %v1260 = vrot.slane %v1258, 4
        %v1261 = vor.u32 %v1260, %v1256
        %v1262 = vrot.slane %v1261, 4
        %v1264 = vshll.u32 %v949, 16
        %v1266 = vrot.slane %v1264, 5
        %v1267 = vsel %vm955, %v1262, %v1266
        %v1269 = vshrl.u32 %v915, 16
        %v1271 = vrot.slane %v1269, 4
        %v1272 = vshll.u32 %v915, 16
        %v1274 = vrot.slane %v1272, 5
        %v1275 = vor.u32 %v1271, %v1274
        %v1276 = vrot.slane %v1275, 4
        %v1278 = vshll.u32 %v916, 16
        %v1280 = vrot.slane %v1278, 5
        %v1281 = vsel %vm955, %v1276, %v1280
        %v1282 = vshrl.u32 %v916, 16
        %v1284 = vrot.slane %v1282, 4
        %v1285 = vor.u32 %v1284, %v1280
        %v1286 = vrot.slane %v1285, 4
        %v1288 = vshll.u32 %v950, 16
        %v1290 = vrot.slane %v1288, 5
        %v1291 = vsel %vm955, %v1286, %v1290
        %v1293 = vshrl.u32 %v917, 16
        %v1295 = vrot.slane %v1293, 4
        %v1296 = vshll.u32 %v917, 16
        %v1298 = vrot.slane %v1296, 5
        %v1299 = vor.u32 %v1295, %v1298
        %v1300 = vrot.slane %v1299, 4
        %v1302 = vshll.u32 %v918, 16
        %v1304 = vrot.slane %v1302, 5
        %v1305 = vsel %vm955, %v1300, %v1304
        %v1306 = vshrl.u32 %v918, 16
        %v1308 = vrot.slane %v1306, 4
        %v1309 = vor.u32 %v1308, %v1304
        %v1310 = vrot.slane %v1309, 4
        %v1312 = vshll.u32 %v951, 16
        %v1314 = vrot.slane %v1312, 5
        %v1315 = vsel %vm955, %v1310, %v1314
        %v1317 = vshrl.u32 %v919, 16
        %v1319 = vrot.slane %v1317, 4
        %v1320 = vshll.u32 %v919, 16
        %v1322 = vrot.slane %v1320, 5
        %v1323 = vor.u32 %v1319, %v1322
        %v1324 = vrot.slane %v1323, 4
        %v1326 = vshll.u32 %v920, 16
        %v1328 = vrot.slane %v1326, 5
        %v1329 = vsel %vm955, %v1324, %v1328
        %v1330 = vshrl.u32 %v920, 16
        %v1332 = vrot.slane %v1330, 4
        %v1333 = vor.u32 %v1332, %v1328
        %v1334 = vrot.slane %v1333, 4
        %v1336 = vshll.u32 %v952, 16
        %v1338 = vrot.slane %v1336, 5
        %v1339 = vsel %vm955, %v1334, %v1338
        %v1340 = vld [vmem:[#allocation6 + $0x40] sm:$0xf]
        %v1341 = vld [vmem:[#allocation6 + $0x44] sm:$0xf]
        %v1342 = vld [vmem:[#allocation6 + $0x48] sm:$0xf]
        %v1343 = vld [vmem:[#allocation6 + $0x4c] sm:$0xf]
        %v1344 = vld [vmem:[#allocation6 + $0x50] sm:$0xf]
        %v1345 = vld [vmem:[#allocation6 + $0x54] sm:$0xf]
        %v1346 = vld [vmem:[#allocation6 + $0x58] sm:$0xf]
        %v1347 = vld [vmem:[#allocation6 + $0x5c] sm:$0xf]
        %v1348 = vld [vmem:[#allocation6 + $0x60] sm:$0xf]
        %v1349 = vld [vmem:[#allocation6 + $0x64] sm:$0xf]
        %v1350 = vld [vmem:[#allocation6 + $0x68] sm:$0xf]
        %v1351 = vld [vmem:[#allocation6 + $0x6c] sm:$0xf]
        %v1352 = vld [vmem:[#allocation6 + $0x70] sm:$0xf]
        %v1353 = vld [vmem:[#allocation6 + $0x74] sm:$0xf]
        %v1354 = vld [vmem:[#allocation6 + $0x78] sm:$0xf]
        %v1355 = vld [vmem:[#allocation6 + $0x7c] sm:$0xf]
        %v1356 = vunpack.c.l.b16 %v969
        %v1357 = vunpack.c.l.b16 %v979
        %v1358 = vunpack.c.l.b16 %v993
        %v1359 = vunpack.c.l.b16 %v1003
        %v1360 = vunpack.c.l.b16 %v1017
        %v1361 = vunpack.c.l.b16 %v1027
        %v1362 = vunpack.c.l.b16 %v1041
        %v1363 = vunpack.c.l.b16 %v1051
        %v1364 = vunpack.c.l.b16 %v1065
        %v1365 = vunpack.c.l.b16 %v1075
        %v1366 = vunpack.c.l.b16 %v1089
        %v1367 = vunpack.c.l.b16 %v1099
        %v1368 = vunpack.c.l.b16 %v1113
        %v1369 = vunpack.c.l.b16 %v1123
        %v1370 = vunpack.c.l.b16 %v1137
        %v1371 = vunpack.c.l.b16 %v1147
        %v1372 = vunpack.c.l.b16 %v1161
        %v1373 = vunpack.c.l.b16 %v1171
        %v1374 = vunpack.c.l.b16 %v1185
        %v1375 = vunpack.c.l.b16 %v1195
        %v1376 = vunpack.c.l.b16 %v1209
        %v1377 = vunpack.c.l.b16 %v1219
        %v1378 = vunpack.c.l.b16 %v1233
        %v1379 = vunpack.c.l.b16 %v1243
        %v1380 = vunpack.c.l.b16 %v1257
        %v1381 = vunpack.c.l.b16 %v1267
        %v1382 = vunpack.c.l.b16 %v1281
        %v1383 = vunpack.c.l.b16 %v1291
        %v1384 = vunpack.c.l.b16 %v1305
        %v1385 = vunpack.c.l.b16 %v1315
        %v1386 = vunpack.c.l.b16 %v1329
        %v1387 = vunpack.c.l.b16 %v1339
        %v1388 = vpack.c.b16 %v1357, %v1356
        %v1389 = vpack.c.b16 %v1359, %v1358
        %v1390 = vpack.c.b16 %v1361, %v1360
        %v1391 = vpack.c.b16 %v1363, %v1362
        %v1392 = vpack.c.b16 %v1365, %v1364
        %v1393 = vpack.c.b16 %v1367, %v1366
        %v1394 = vpack.c.b16 %v1369, %v1368
        %v1395 = vpack.c.b16 %v1371, %v1370
        %v1396 = vpack.c.b16 %v1373, %v1372
        %v1397 = vpack.c.b16 %v1375, %v1374
        %v1398 = vpack.c.b16 %v1377, %v1376
        %v1399 = vpack.c.b16 %v1379, %v1378
        %v1400 = vpack.c.b16 %v1381, %v1380
        %v1401 = vpack.c.b16 %v1383, %v1382
        %v1402 = vpack.c.b16 %v1385, %v1384
        %v1403 = vpack.c.b16 %v1387, %v1386
        %v1436 = vunpack.c.l.b16 %v1340
        %v1437 = vunpack.c.l.b16 %v1341
        %v1438 = vunpack.c.l.b16 %v1342
        %v1439 = vunpack.c.l.b16 %v1343
        %v1440 = vunpack.c.l.b16 %v1344
        %v1441 = vunpack.c.l.b16 %v1345
        %v1442 = vunpack.c.l.b16 %v1346
        %v1443 = vunpack.c.l.b16 %v1347
        %v1444 = vunpack.c.l.b16 %v1348
        %v1445 = vunpack.c.l.b16 %v1349
        %v1446 = vunpack.c.l.b16 %v1350
        %v1447 = vunpack.c.l.b16 %v1351
        %v1448 = vunpack.c.l.b16 %v1352
        %v1449 = vunpack.c.l.b16 %v1353
        %v1450 = vunpack.c.l.b16 %v1354
        %v1451 = vunpack.c.l.b16 %v1355
        %v1452 = vpack.c.b16 %v1437, %v1436
        %v1453 = vpack.c.b16 %v1439, %v1438
        %v1454 = vpack.c.b16 %v1441, %v1440
        %v1455 = vpack.c.b16 %v1443, %v1442
        %v1456 = vpack.c.b16 %v1445, %v1444
        %v1457 = vpack.c.b16 %v1447, %v1446
        %v1458 = vpack.c.b16 %v1449, %v1448
        %v1459 = vpack.c.b16 %v1451, %v1450
        %1468 = vmatprep.subr.bf16.mxu0 0
        %1469 = vmatpush1.bf16.msra.mxu0 %v1452
        %1470 = vmatprep.subr.bf16.mxu0 0
        %1471 = vmatpush1.bf16.msra.mxu0 %v1453
        %1472 = vmatprep.subr.bf16.mxu0 0
        %1473 = vmatpush1.bf16.msra.mxu0 %v1454
        %1474 = vmatprep.subr.bf16.mxu0 0
        %1475 = vmatpush1.bf16.msra.mxu0 %v1455
        %1476 = vmatprep.subr.bf16.mxu0 0
        %1477 = vmatpush1.bf16.msra.mxu0 %v1456
        %1478 = vmatprep.subr.bf16.mxu0 0
        %1479 = vmatpush1.bf16.msra.mxu0 %v1457
        %1480 = vmatprep.subr.bf16.mxu0 0
        %1481 = vmatpush1.bf16.msra.mxu0 %v1458
        %1482 = vmatprep.subr.bf16.mxu0 0
        %1483 = vmatpush1.bf16.msra.mxu0 %v1459
        %1484 = vmatprep.subr.bf16.mxu0 0
        %1485 = vmatpush1.bf16.msra.mxu0 0
        %1486 = vmatprep.subr.bf16.mxu0 0
        %1487 = vmatpush1.bf16.msra.mxu0 0
        %1488 = vmatprep.subr.bf16.mxu0 0
        %1489 = vmatpush1.bf16.msra.mxu0 0
        %1490 = vmatprep.subr.bf16.mxu0 0
        %1491 = vmatpush1.bf16.msra.mxu0 0
        %1492 = vmatprep.subr.bf16.mxu0 0
        %1493 = vmatpush1.bf16.msra.mxu0 0
        %1494 = vmatprep.subr.bf16.mxu0 0
        %1495 = vmatpush1.bf16.msra.mxu0 0
        %1496 = vmatprep.subr.bf16.mxu0 0
        %1497 = vmatpush1.bf16.msra.mxu0 0
        %1498 = vmatprep.subr.bf16.mxu0 0
        %1499 = vmatpush1.bf16.msra.mxu0 0
        %1500 = vmatprep.mubr.bf16.mxu0 0
        %1501 = vmatmul.mubr.bf16.gmra.mrb[0].mxu0 %v1388
        %v1502 = vpop.f32.mrb[0].mxu0
        %v1503 = vadd.f32 0.0, %v1502
        %v1504 = vpop.f32.mrb[0].mxu0
        %v1505 = vpop.f32.mrb[0].mxu0
        %v1506 = vadd.f32 0.0, %v1505
        %v1507 = vpop.f32.mrb[0].mxu0
        %1508 = vmatprep.mubr.bf16.mxu0 0
        %1509 = vmatmul.mubr.bf16.gmra.mrb[0].mxu0 %v1389
        %v1510 = vpop.f32.mrb[0].mxu0
        %v1511 = vadd.f32 0.0, %v1510
        %v1512 = vpop.f32.mrb[0].mxu0
        %v1513 = vpop.f32.mrb[0].mxu0
        %v1514 = vadd.f32 0.0, %v1513
        %v1515 = vpop.f32.mrb[0].mxu0
        %1516 = vmatprep.mubr.bf16.mxu0 0
        %1517 = vmatmul.mubr.bf16.gmra.mrb[0].mxu0 %v1390
        %v1518 = vpop.f32.mrb[0].mxu0
        %v1519 = vadd.f32 0.0, %v1518
        %v1520 = vpop.f32.mrb[0].mxu0
        %v1521 = vpop.f32.mrb[0].mxu0
        %v1522 = vadd.f32 0.0, %v1521
        %v1523 = vpop.f32.mrb[0].mxu0
        %1524 = vmatprep.mubr.bf16.mxu0 0
        %1525 = vmatmul.mubr.bf16.gmra.mrb[0].mxu0 %v1391
        %v1526 = vpop.f32.mrb[0].mxu0
        %v1527 = vadd.f32 0.0, %v1526
        %v1528 = vpop.f32.mrb[0].mxu0
        %v1529 = vpop.f32.mrb[0].mxu0
        %v1530 = vadd.f32 0.0, %v1529
        %v1531 = vpop.f32.mrb[0].mxu0
        %1532 = vmatprep.mubr.bf16.mxu0 0
        %1533 = vmatmul.mubr.bf16.gmra.mrb[0].mxu0 %v1392
        %v1534 = vpop.f32.mrb[0].mxu0
        %v1535 = vadd.f32 0.0, %v1534
        %v1536 = vpop.f32.mrb[0].mxu0
        %v1537 = vpop.f32.mrb[0].mxu0
        %v1538 = vadd.f32 0.0, %v1537
        %v1539 = vpop.f32.mrb[0].mxu0
        %1540 = vmatprep.mubr.bf16.mxu0 0
        %1541 = vmatmul.mubr.bf16.gmra.mrb[0].mxu0 %v1393
        %v1542 = vpop.f32.mrb[0].mxu0
        %v1543 = vadd.f32 0.0, %v1542
        %v1544 = vpop.f32.mrb[0].mxu0
        %v1545 = vpop.f32.mrb[0].mxu0
        %v1546 = vadd.f32 0.0, %v1545
        %v1547 = vpop.f32.mrb[0].mxu0
        %1548 = vmatprep.mubr.bf16.mxu0 0
        %1549 = vmatmul.mubr.bf16.gmra.mrb[0].mxu0 %v1394
        %v1550 = vpop.f32.mrb[0].mxu0
        %v1551 = vadd.f32 0.0, %v1550
        %v1552 = vpop.f32.mrb[0].mxu0
        %v1553 = vpop.f32.mrb[0].mxu0
        %v1554 = vadd.f32 0.0, %v1553
        %v1555 = vpop.f32.mrb[0].mxu0
        %1556 = vmatprep.mubr.bf16.mxu0 0
        %1557 = vmatmul.mubr.bf16.gmra.mrb[0].mxu0 %v1395
        %v1558 = vpop.f32.mrb[0].mxu0
        %v1559 = vadd.f32 0.0, %v1558
        %v1560 = vpop.f32.mrb[0].mxu0
        %v1561 = vpop.f32.mrb[0].mxu0
        %v1562 = vadd.f32 0.0, %v1561
        %v1563 = vpop.f32.mrb[0].mxu0
        %1564 = vmatprep.mubr.bf16.mxu0 0
        %1565 = vmatmul.mubr.bf16.gmra.mrb[0].mxu0 %v1396
        %v1566 = vpop.f32.mrb[0].mxu0
        %v1567 = vadd.f32 0.0, %v1566
        %v1568 = vpop.f32.mrb[0].mxu0
        %v1569 = vpop.f32.mrb[0].mxu0
        %v1570 = vadd.f32 0.0, %v1569
        %v1571 = vpop.f32.mrb[0].mxu0
        %1572 = vmatprep.mubr.bf16.mxu0 0
        %1573 = vmatmul.mubr.bf16.gmra.mrb[0].mxu0 %v1397
        %v1574 = vpop.f32.mrb[0].mxu0
        %v1575 = vadd.f32 0.0, %v1574
        %v1576 = vpop.f32.mrb[0].mxu0
        %v1577 = vpop.f32.mrb[0].mxu0
        %v1578 = vadd.f32 0.0, %v1577
        %v1579 = vpop.f32.mrb[0].mxu0
        %1580 = vmatprep.mubr.bf16.mxu0 0
        %1581 = vmatmul.mubr.bf16.gmra.mrb[0].mxu0 %v1398
        %v1582 = vpop.f32.mrb[0].mxu0
        %v1583 = vadd.f32 0.0, %v1582
        %v1584 = vpop.f32.mrb[0].mxu0
        %v1585 = vpop.f32.mrb[0].mxu0
        %v1586 = vadd.f32 0.0, %v1585
        %v1587 = vpop.f32.mrb[0].mxu0
        %1588 = vmatprep.mubr.bf16.mxu0 0
        %1589 = vmatmul.mubr.bf16.gmra.mrb[0].mxu0 %v1399
        %v1590 = vpop.f32.mrb[0].mxu0
        %v1591 = vadd.f32 0.0, %v1590
        %v1592 = vpop.f32.mrb[0].mxu0
        %v1593 = vpop.f32.mrb[0].mxu0
        %v1594 = vadd.f32 0.0, %v1593
        %v1595 = vpop.f32.mrb[0].mxu0
        %1596 = vmatprep.mubr.bf16.mxu0 0
        %1597 = vmatmul.mubr.bf16.gmra.mrb[0].mxu0 %v1400
        %v1598 = vpop.f32.mrb[0].mxu0
        %v1599 = vadd.f32 0.0, %v1598
        %v1600 = vpop.f32.mrb[0].mxu0
        %v1601 = vpop.f32.mrb[0].mxu0
        %v1602 = vadd.f32 0.0, %v1601
        %v1603 = vpop.f32.mrb[0].mxu0
        %1604 = vmatprep.mubr.bf16.mxu0 0
        %1605 = vmatmul.mubr.bf16.gmra.mrb[0].mxu0 %v1401
        %v1606 = vpop.f32.mrb[0].mxu0
        %v1607 = vadd.f32 0.0, %v1606
        %v1608 = vpop.f32.mrb[0].mxu0
        %v1609 = vpop.f32.mrb[0].mxu0
        %v1610 = vadd.f32 0.0, %v1609
        %v1611 = vpop.f32.mrb[0].mxu0
        %1612 = vmatprep.mubr.bf16.mxu0 0
        %1613 = vmatmul.mubr.bf16.gmra.mrb[0].mxu0 %v1402
        %v1614 = vpop.f32.mrb[0].mxu0
        %v1615 = vadd.f32 0.0, %v1614
        %v1616 = vpop.f32.mrb[0].mxu0
        %v1617 = vpop.f32.mrb[0].mxu0
        %v1618 = vadd.f32 0.0, %v1617
        %v1619 = vpop.f32.mrb[0].mxu0
        %1620 = vmatprep.mubr.bf16.mxu0 0
        %1621 = vmatmul.mubr.bf16.gmra.mrb[0].mxu0 %v1403
        %v1622 = vpop.f32.mrb[0].mxu0
        %v1623 = vadd.f32 0.0, %v1622
        %v1624 = vpop.f32.mrb[0].mxu0
        %v1625 = vpop.f32.mrb[0].mxu0
        %v1626 = vadd.f32 0.0, %v1625
        %v1627 = vpop.f32.mrb[0].mxu0
        %1628 = vdwg.mxu0
        %v1661 = vunpack.c.l.b16 %v889
        %v1662 = vunpack.c.l.b16 %v890
        %v1663 = vunpack.c.l.b16 %v891
        %v1664 = vunpack.c.l.b16 %v892
        %v1665 = vunpack.c.l.b16 %v893
        %v1666 = vunpack.c.l.b16 %v894
        %v1667 = vunpack.c.l.b16 %v895
        %v1668 = vunpack.c.l.b16 %v896
        %v1669 = vunpack.c.l.b16 %v897
        %v1670 = vunpack.c.l.b16 %v898
        %v1671 = vunpack.c.l.b16 %v899
        %v1672 = vunpack.c.l.b16 %v900
        %v1673 = vunpack.c.l.b16 %v901
        %v1674 = vunpack.c.l.b16 %v902
        %v1675 = vunpack.c.l.b16 %v903
        %v1676 = vunpack.c.l.b16 %v904
        %v1677 = vunpack.c.l.b16 %v905
        %v1678 = vunpack.c.l.b16 %v906
        %v1679 = vunpack.c.l.b16 %v907
        %v1680 = vunpack.c.l.b16 %v908
        %v1681 = vunpack.c.l.b16 %v909
        %v1682 = vunpack.c.l.b16 %v910
        %v1683 = vunpack.c.l.b16 %v911
        %v1684 = vunpack.c.l.b16 %v912
        %v1685 = vunpack.c.l.b16 %v913
        %v1686 = vunpack.c.l.b16 %v914
        %v1687 = vunpack.c.l.b16 %v915
        %v1688 = vunpack.c.l.b16 %v916
        %v1689 = vunpack.c.l.b16 %v917
        %v1690 = vunpack.c.l.b16 %v918
        %v1691 = vunpack.c.l.b16 %v919
        %v1692 = vunpack.c.l.b16 %v920
        %v1693 = vpack.c.b16 %v1662, %v1661
        %v1694 = vpack.c.b16 %v1664, %v1663
        %v1695 = vpack.c.b16 %v1666, %v1665
        %v1696 = vpack.c.b16 %v1668, %v1667
        %v1697 = vpack.c.b16 %v1670, %v1669
        %v1698 = vpack.c.b16 %v1672, %v1671
        %v1699 = vpack.c.b16 %v1674, %v1673
        %v1700 = vpack.c.b16 %v1676, %v1675
        %v1701 = vpack.c.b16 %v1678, %v1677
        %v1702 = vpack.c.b16 %v1680, %v1679
        %v1703 = vpack.c.b16 %v1682, %v1681
        %v1704 = vpack.c.b16 %v1684, %v1683
        %v1705 = vpack.c.b16 %v1686, %v1685
        %v1706 = vpack.c.b16 %v1688, %v1687
        %v1707 = vpack.c.b16 %v1690, %v1689
        %v1708 = vpack.c.b16 %v1692, %v1691
        %v1741 = vunpack.c.l.b16 %v921
        %v1742 = vunpack.c.l.b16 %v922
        %v1743 = vunpack.c.l.b16 %v923
        %v1744 = vunpack.c.l.b16 %v924
        %v1745 = vunpack.c.l.b16 %v925
        %v1746 = vunpack.c.l.b16 %v926
        %v1747 = vunpack.c.l.b16 %v927
        %v1748 = vunpack.c.l.b16 %v928
        %v1749 = vunpack.c.l.b16 %v929
        %v1750 = vunpack.c.l.b16 %v930
        %v1751 = vunpack.c.l.b16 %v931
        %v1752 = vunpack.c.l.b16 %v932
        %v1753 = vunpack.c.l.b16 %v933
        %v1754 = vunpack.c.l.b16 %v934
        %v1755 = vunpack.c.l.b16 %v935
        %v1756 = vunpack.c.l.b16 %v936
        %v1757 = vpack.c.b16 %v1742, %v1741
        %v1758 = vpack.c.b16 %v1744, %v1743
        %v1759 = vpack.c.b16 %v1746, %v1745
        %v1760 = vpack.c.b16 %v1748, %v1747
        %v1761 = vpack.c.b16 %v1750, %v1749
        %v1762 = vpack.c.b16 %v1752, %v1751
        %v1763 = vpack.c.b16 %v1754, %v1753
        %v1764 = vpack.c.b16 %v1756, %v1755
        %1773 = vmatprep.subr.bf16.mxu0 0
        %1774 = vmatpush1.bf16.msra.mxu0 %v1757
        %1775 = vmatprep.subr.bf16.mxu0 0
        %1776 = vmatpush1.bf16.msra.mxu0 %v1758
        %1777 = vmatprep.subr.bf16.mxu0 0
        %1778 = vmatpush1.bf16.msra.mxu0 %v1759
        %1779 = vmatprep.subr.bf16.mxu0 0
        %1780 = vmatpush1.bf16.msra.mxu0 %v1760
        %1781 = vmatprep.subr.bf16.mxu0 0
        %1782 = vmatpush1.bf16.msra.mxu0 %v1761
        %1783 = vmatprep.subr.bf16.mxu0 0
        %1784 = vmatpush1.bf16.msra.mxu0 %v1762
        %1785 = vmatprep.subr.bf16.mxu0 0
        %1786 = vmatpush1.bf16.msra.mxu0 %v1763
        %1787 = vmatprep.subr.bf16.mxu0 0
        %1788 = vmatpush1.bf16.msra.mxu0 %v1764
        %1789 = vmatprep.subr.bf16.mxu0 0
        %1790 = vmatpush1.bf16.msra.mxu0 0
        %1791 = vmatprep.subr.bf16.mxu0 0
        %1792 = vmatpush1.bf16.msra.mxu0 0
        %1793 = vmatprep.subr.bf16.mxu0 0
        %1794 = vmatpush1.bf16.msra.mxu0 0
        %1795 = vmatprep.subr.bf16.mxu0 0
        %1796 = vmatpush1.bf16.msra.mxu0 0
        %1797 = vmatprep.subr.bf16.mxu0 0
        %1798 = vmatpush1.bf16.msra.mxu0 0
        %1799 = vmatprep.subr.bf16.mxu0 0
        %1800 = vmatpush1.bf16.msra.mxu0 0
        %1801 = vmatprep.subr.bf16.mxu0 0
        %1802 = vmatpush1.bf16.msra.mxu0 0
        %1803 = vmatprep.subr.bf16.mxu0 0
        %1804 = vmatpush1.bf16.msra.mxu0 0
        %1805 = vmatprep.mubr.bf16.mxu0 0
        %1806 = vmatmul.mubr.bf16.gmra.mrb[0].mxu0 %v1693
        %v1807 = vpop.f32.mrb[0].mxu0
        %v1808 = vadd.f32 %v1503, %v1807
        %v1809 = vpop.f32.mrb[0].mxu0
        %v1810 = vpop.f32.mrb[0].mxu0
        %v1811 = vadd.f32 %v1506, %v1810
        %v1812 = vpop.f32.mrb[0].mxu0
        %1813 = vmatprep.mubr.bf16.mxu0 0
        %1814 = vmatmul.mubr.bf16.gmra.mrb[0].mxu0 %v1694
        %v1815 = vpop.f32.mrb[0].mxu0
        %v1816 = vadd.f32 %v1511, %v1815
        %v1817 = vpop.f32.mrb[0].mxu0
        %v1818 = vpop.f32.mrb[0].mxu0
        %v1819 = vadd.f32 %v1514, %v1818
        %v1820 = vpop.f32.mrb[0].mxu0
        %1821 = vmatprep.mubr.bf16.mxu0 0
        %1822 = vmatmul.mubr.bf16.gmra.mrb[0].mxu0 %v1695
        %v1823 = vpop.f32.mrb[0].mxu0
        %v1824 = vadd.f32 %v1519, %v1823
        %v1825 = vpop.f32.mrb[0].mxu0
        %v1826 = vpop.f32.mrb[0].mxu0
        %v1827 = vadd.f32 %v1522, %v1826
        %v1828 = vpop.f32.mrb[0].mxu0
        %1829 = vmatprep.mubr.bf16.mxu0 0
        %1830 = vmatmul.mubr.bf16.gmra.mrb[0].mxu0 %v1696
        %v1831 = vpop.f32.mrb[0].mxu0
        %v1832 = vadd.f32 %v1527, %v1831
        %v1833 = vpop.f32.mrb[0].mxu0
        %v1834 = vpop.f32.mrb[0].mxu0
        %v1835 = vadd.f32 %v1530, %v1834
        %v1836 = vpop.f32.mrb[0].mxu0
        %1837 = vmatprep.mubr.bf16.mxu0 0
        %1838 = vmatmul.mubr.bf16.gmra.mrb[0].mxu0 %v1697
        %v1839 = vpop.f32.mrb[0].mxu0
        %v1840 = vadd.f32 %v1535, %v1839
        %v1841 = vpop.f32.mrb[0].mxu0
        %v1842 = vpop.f32.mrb[0].mxu0
        %v1843 = vadd.f32 %v1538, %v1842
        %v1844 = vpop.f32.mrb[0].mxu0
        %1845 = vmatprep.mubr.bf16.mxu0 0
        %1846 = vmatmul.mubr.bf16.gmra.mrb[0].mxu0 %v1698
        %v1847 = vpop.f32.mrb[0].mxu0
        %v1848 = vadd.f32 %v1543, %v1847
        %v1849 = vpop.f32.mrb[0].mxu0
        %v1850 = vpop.f32.mrb[0].mxu0
        %v1851 = vadd.f32 %v1546, %v1850
        %v1852 = vpop.f32.mrb[0].mxu0
        %1853 = vmatprep.mubr.bf16.mxu0 0
        %1854 = vmatmul.mubr.bf16.gmra.mrb[0].mxu0 %v1699
        %v1855 = vpop.f32.mrb[0].mxu0
        %v1856 = vadd.f32 %v1551, %v1855
        %v1857 = vpop.f32.mrb[0].mxu0
        %v1858 = vpop.f32.mrb[0].mxu0
        %v1859 = vadd.f32 %v1554, %v1858
        %v1860 = vpop.f32.mrb[0].mxu0
        %1861 = vmatprep.mubr.bf16.mxu0 0
        %1862 = vmatmul.mubr.bf16.gmra.mrb[0].mxu0 %v1700
        %v1863 = vpop.f32.mrb[0].mxu0
        %v1864 = vadd.f32 %v1559, %v1863
        %v1865 = vpop.f32.mrb[0].mxu0
        %v1866 = vpop.f32.mrb[0].mxu0
        %v1867 = vadd.f32 %v1562, %v1866
        %v1868 = vpop.f32.mrb[0].mxu0
        %1869 = vmatprep.mubr.bf16.mxu0 0
        %1870 = vmatmul.mubr.bf16.gmra.mrb[0].mxu0 %v1701
        %v1871 = vpop.f32.mrb[0].mxu0
        %v1872 = vadd.f32 %v1567, %v1871
        %v1873 = vpop.f32.mrb[0].mxu0
        %v1874 = vpop.f32.mrb[0].mxu0
        %v1875 = vadd.f32 %v1570, %v1874
        %v1876 = vpop.f32.mrb[0].mxu0
        %1877 = vmatprep.mubr.bf16.mxu0 0
        %1878 = vmatmul.mubr.bf16.gmra.mrb[0].mxu0 %v1702
        %v1879 = vpop.f32.mrb[0].mxu0
        %v1880 = vadd.f32 %v1575, %v1879
        %v1881 = vpop.f32.mrb[0].mxu0
        %v1882 = vpop.f32.mrb[0].mxu0
        %v1883 = vadd.f32 %v1578, %v1882
        %v1884 = vpop.f32.mrb[0].mxu0
        %1885 = vmatprep.mubr.bf16.mxu0 0
        %1886 = vmatmul.mubr.bf16.gmra.mrb[0].mxu0 %v1703
        %v1887 = vpop.f32.mrb[0].mxu0
        %v1888 = vadd.f32 %v1583, %v1887
        %v1889 = vpop.f32.mrb[0].mxu0
        %v1890 = vpop.f32.mrb[0].mxu0
        %v1891 = vadd.f32 %v1586, %v1890
        %v1892 = vpop.f32.mrb[0].mxu0
        %1893 = vmatprep.mubr.bf16.mxu0 0
        %1894 = vmatmul.mubr.bf16.gmra.mrb[0].mxu0 %v1704
        %v1895 = vpop.f32.mrb[0].mxu0
        %v1896 = vadd.f32 %v1591, %v1895
        %v1897 = vpop.f32.mrb[0].mxu0
        %v1898 = vpop.f32.mrb[0].mxu0
        %v1899 = vadd.f32 %v1594, %v1898
        %v1900 = vpop.f32.mrb[0].mxu0
        %1901 = vmatprep.mubr.bf16.mxu0 0
        %1902 = vmatmul.mubr.bf16.gmra.mrb[0].mxu0 %v1705
        %v1903 = vpop.f32.mrb[0].mxu0
        %v1904 = vadd.f32 %v1599, %v1903
        %v1905 = vpop.f32.mrb[0].mxu0
        %v1906 = vpop.f32.mrb[0].mxu0
        %v1907 = vadd.f32 %v1602, %v1906
        %v1908 = vpop.f32.mrb[0].mxu0
        %1909 = vmatprep.mubr.bf16.mxu0 0
        %1910 = vmatmul.mubr.bf16.gmra.mrb[0].mxu0 %v1706
        %v1911 = vpop.f32.mrb[0].mxu0
        %v1912 = vadd.f32 %v1607, %v1911
        %v1913 = vpop.f32.mrb[0].mxu0
        %v1914 = vpop.f32.mrb[0].mxu0
        %v1915 = vadd.f32 %v1610, %v1914
        %v1916 = vpop.f32.mrb[0].mxu0
        %1917 = vmatprep.mubr.bf16.mxu0 0
        %1918 = vmatmul.mubr.bf16.gmra.mrb[0].mxu0 %v1707
        %v1919 = vpop.f32.mrb[0].mxu0
        %v1920 = vadd.f32 %v1615, %v1919
        %v1921 = vpop.f32.mrb[0].mxu0
        %v1922 = vpop.f32.mrb[0].mxu0
        %v1923 = vadd.f32 %v1618, %v1922
        %v1924 = vpop.f32.mrb[0].mxu0
        %1925 = vmatprep.mubr.bf16.mxu0 0
        %1926 = vmatmul.mubr.bf16.gmra.mrb[0].mxu0 %v1708
        %v1927 = vpop.f32.mrb[0].mxu0
        %v1928 = vadd.f32 %v1623, %v1927
        %v1929 = vpop.f32.mrb[0].mxu0
        %v1930 = vpop.f32.mrb[0].mxu0
        %v1931 = vadd.f32 %v1626, %v1930
        %v1932 = vpop.f32.mrb[0].mxu0
        %1933 = vdwg.mxu0
        %v1934 = vld [vmem:[#allocation2] sm:$0xe]
        %v1935 = vld [vmem:[#allocation2 + $0xc] sm:$0xe]
        %v1936 = vld [vmem:[#allocation2 + $0x18] sm:$0xe]
        %v1937 = vld [vmem:[#allocation2 + $0x24] sm:$0xe]
        %v1938 = vld [vmem:[#allocation2 + $0x30] sm:$0xe]
        %v1939 = vld [vmem:[#allocation2 + $0x3c] sm:$0xe]
        %v1940 = vld [vmem:[#allocation2 + $0x48] sm:$0xe]
        %v1941 = vld [vmem:[#allocation2 + $0x54] sm:$0xe]
        %v1942 = vld [vmem:[#allocation2 + $0x60] sm:$0xe]
        %v1943 = vld [vmem:[#allocation2 + $0x6c] sm:$0xe]
        %v1944 = vld [vmem:[#allocation2 + $0x78] sm:$0xe]
        %v1945 = vld [vmem:[#allocation2 + $0x84] sm:$0xe]
        %v1946 = vld [vmem:[#allocation2 + $0x90] sm:$0xe]
        %v1947 = vld [vmem:[#allocation2 + $0x9c] sm:$0xe]
        %v1948 = vld [vmem:[#allocation2 + $0xa8] sm:$0xe]
        %v1949 = vld [vmem:[#allocation2 + $0xb4] sm:$0xe]
        %vm1982 = vcmask 1042432
        %vm1983 = vcmask 1046532
        %vm1984 = vmor %vm1982, %vm1983
        %v1985 = vrot.slane %v1934, 5
        %v1986 = vrot.slane %v1985, 4
        %v1987 = vrot.slane %v890, 5
        %v1988 = vsel %vm1984, %v1986, %v1987
        %v1989 = vrot.slane %v1987, 4
        %v1990 = vrot.slane %v937, 5
        %v1991 = vsel %vm1984, %v1989, %v1990
        %v1992 = vrot.slane %v1935, 5
        %v1993 = vrot.slane %v1992, 4
        %v1994 = vrot.slane %v892, 5
        %v1995 = vsel %vm1984, %v1993, %v1994
        %v1996 = vrot.slane %v1994, 4
        %v1997 = vrot.slane %v938, 5
        %v1998 = vsel %vm1984, %v1996, %v1997
        %v1999 = vrot.slane %v1936, 5
        %v2000 = vrot.slane %v1999, 4
        %v2001 = vrot.slane %v894, 5
        %v2002 = vsel %vm1984, %v2000, %v2001
        %v2003 = vrot.slane %v2001, 4
        %v2004 = vrot.slane %v939, 5
        %v2005 = vsel %vm1984, %v2003, %v2004
        %v2006 = vrot.slane %v1937, 5
        %v2007 = vrot.slane %v2006, 4
        %v2008 = vrot.slane %v896, 5
        %v2009 = vsel %vm1984, %v2007, %v2008
        %v2010 = vrot.slane %v2008, 4
        %v2011 = vrot.slane %v940, 5
        %v2012 = vsel %vm1984, %v2010, %v2011
        %v2013 = vrot.slane %v1938, 5
        %v2014 = vrot.slane %v2013, 4
        %v2015 = vrot.slane %v898, 5
        %v2016 = vsel %vm1984, %v2014, %v2015
        %v2017 = vrot.slane %v2015, 4
        %v2018 = vrot.slane %v941, 5
        %v2019 = vsel %vm1984, %v2017, %v2018
        %v2020 = vrot.slane %v1939, 5
        %v2021 = vrot.slane %v2020, 4
        %v2022 = vrot.slane %v900, 5
        %v2023 = vsel %vm1984, %v2021, %v2022
        %v2024 = vrot.slane %v2022, 4
        %v2025 = vrot.slane %v942, 5
        %v2026 = vsel %vm1984, %v2024, %v2025
        %v2027 = vrot.slane %v1940, 5
        %v2028 = vrot.slane %v2027, 4
        %v2029 = vrot.slane %v902, 5
        %v2030 = vsel %vm1984, %v2028, %v2029
        %v2031 = vrot.slane %v2029, 4
        %v2032 = vrot.slane %v943, 5
        %v2033 = vsel %vm1984, %v2031, %v2032
        %v2034 = vrot.slane %v1941, 5
        %v2035 = vrot.slane %v2034, 4
        %v2036 = vrot.slane %v904, 5
        %v2037 = vsel %vm1984, %v2035, %v2036
        %v2038 = vrot.slane %v2036, 4
        %v2039 = vrot.slane %v944, 5
        %v2040 = vsel %vm1984, %v2038, %v2039
        %v2041 = vrot.slane %v1942, 5
        %v2042 = vrot.slane %v2041, 4
        %v2043 = vrot.slane %v906, 5
        %v2044 = vsel %vm1984, %v2042, %v2043
        %v2045 = vrot.slane %v2043, 4
        %v2046 = vrot.slane %v945, 5
        %v2047 = vsel %vm1984, %v2045, %v2046
        %v2048 = vrot.slane %v1943, 5
        %v2049 = vrot.slane %v2048, 4
        %v2050 = vrot.slane %v908, 5
        %v2051 = vsel %vm1984, %v2049, %v2050
        %v2052 = vrot.slane %v2050, 4
        %v2053 = vrot.slane %v946, 5
        %v2054 = vsel %vm1984, %v2052, %v2053
        %v2055 = vrot.slane %v1944, 5
        %v2056 = vrot.slane %v2055, 4
        %v2057 = vrot.slane %v910, 5
        %v2058 = vsel %vm1984, %v2056, %v2057
        %v2059 = vrot.slane %v2057, 4
        %v2060 = vrot.slane %v947, 5
        %v2061 = vsel %vm1984, %v2059, %v2060
        %v2062 = vrot.slane %v1945, 5
        %v2063 = vrot.slane %v2062, 4
        %v2064 = vrot.slane %v912, 5
        %v2065 = vsel %vm1984, %v2063, %v2064
        %v2066 = vrot.slane %v2064, 4
        %v2067 = vrot.slane %v948, 5
        %v2068 = vsel %vm1984, %v2066, %v2067
        %v2069 = vrot.slane %v1946, 5
        %v2070 = vrot.slane %v2069, 4
        %v2071 = vrot.slane %v914, 5
        %v2072 = vsel %vm1984, %v2070, %v2071
        %v2073 = vrot.slane %v2071, 4
        %v2074 = vrot.slane %v949, 5
        %v2075 = vsel %vm1984, %v2073, %v2074
        %v2076 = vrot.slane %v1947, 5
        %v2077 = vrot.slane %v2076, 4
        %v2078 = vrot.slane %v916, 5
        %v2079 = vsel %vm1984, %v2077, %v2078
        %v2080 = vrot.slane %v2078, 4
        %v2081 = vrot.slane %v950, 5
        %v2082 = vsel %vm1984, %v2080, %v2081
        %v2083 = vrot.slane %v1948, 5
        %v2084 = vrot.slane %v2083, 4
        %v2085 = vrot.slane %v918, 5
        %v2086 = vsel %vm1984, %v2084, %v2085
        %v2087 = vrot.slane %v2085, 4
        %v2088 = vrot.slane %v951, 5
        %v2089 = vsel %vm1984, %v2087, %v2088
        %v2090 = vrot.slane %v1949, 5
        %v2091 = vrot.slane %v2090, 4
        %v2092 = vrot.slane %v920, 5
        %v2093 = vsel %vm1984, %v2091, %v2092
        %v2094 = vrot.slane %v2092, 4
        %v2095 = vrot.slane %v952, 5
        %v2096 = vsel %vm1984, %v2094, %v2095
        %v2097 = vld [vmem:[#allocation6 + $0x80] sm:$0xf]
        %v2098 = vld [vmem:[#allocation6 + $0x84] sm:$0xf]
        %v2099 = vld [vmem:[#allocation6 + $0x88] sm:$0xf]
        %v2100 = vld [vmem:[#allocation6 + $0x8c] sm:$0xf]
        %v2101 = vld [vmem:[#allocation6 + $0x90] sm:$0xf]
        %v2102 = vld [vmem:[#allocation6 + $0x94] sm:$0xf]
        %v2103 = vld [vmem:[#allocation6 + $0x98] sm:$0xf]
        %v2104 = vld [vmem:[#allocation6 + $0x9c] sm:$0xf]
        %v2105 = vld [vmem:[#allocation6 + $0xa0] sm:$0xf]
        %v2106 = vld [vmem:[#allocation6 + $0xa4] sm:$0xf]
        %v2107 = vld [vmem:[#allocation6 + $0xa8] sm:$0xf]
        %v2108 = vld [vmem:[#allocation6 + $0xac] sm:$0xf]
        %v2109 = vld [vmem:[#allocation6 + $0xb0] sm:$0xf]
        %v2110 = vld [vmem:[#allocation6 + $0xb4] sm:$0xf]
        %v2111 = vld [vmem:[#allocation6 + $0xb8] sm:$0xf]
        %v2112 = vld [vmem:[#allocation6 + $0xbc] sm:$0xf]
        %v2113 = vunpack.c.l.b16 %v1988
        %v2114 = vunpack.c.l.b16 %v1991
        %v2115 = vunpack.c.l.b16 %v1995
        %v2116 = vunpack.c.l.b16 %v1998
        %v2117 = vunpack.c.l.b16 %v2002
        %v2118 = vunpack.c.l.b16 %v2005
        %v2119 = vunpack.c.l.b16 %v2009
        %v2120 = vunpack.c.l.b16 %v2012
        %v2121 = vunpack.c.l.b16 %v2016
        %v2122 = vunpack.c.l.b16 %v2019
        %v2123 = vunpack.c.l.b16 %v2023
        %v2124 = vunpack.c.l.b16 %v2026
        %v2125 = vunpack.c.l.b16 %v2030
        %v2126 = vunpack.c.l.b16 %v2033
        %v2127 = vunpack.c.l.b16 %v2037
        %v2128 = vunpack.c.l.b16 %v2040
        %v2129 = vunpack.c.l.b16 %v2044
        %v2130 = vunpack.c.l.b16 %v2047
        %v2131 = vunpack.c.l.b16 %v2051
        %v2132 = vunpack.c.l.b16 %v2054
        %v2133 = vunpack.c.l.b16 %v2058
        %v2134 = vunpack.c.l.b16 %v2061
        %v2135 = vunpack.c.l.b16 %v2065
        %v2136 = vunpack.c.l.b16 %v2068
        %v2137 = vunpack.c.l.b16 %v2072
        %v2138 = vunpack.c.l.b16 %v2075
        %v2139 = vunpack.c.l.b16 %v2079
        %v2140 = vunpack.c.l.b16 %v2082
        %v2141 = vunpack.c.l.b16 %v2086
        %v2142 = vunpack.c.l.b16 %v2089
        %v2143 = vunpack.c.l.b16 %v2093
        %v2144 = vunpack.c.l.b16 %v2096
        %v2145 = vpack.c.b16 %v2114, %v2113
        %v2146 = vpack.c.b16 %v2116, %v2115
        %v2147 = vpack.c.b16 %v2118, %v2117
        %v2148 = vpack.c.b16 %v2120, %v2119
        %v2149 = vpack.c.b16 %v2122, %v2121
        %v2150 = vpack.c.b16 %v2124, %v2123
        %v2151 = vpack.c.b16 %v2126, %v2125
        %v2152 = vpack.c.b16 %v2128, %v2127
        %v2153 = vpack.c.b16 %v2130, %v2129
        %v2154 = vpack.c.b16 %v2132, %v2131
        %v2155 = vpack.c.b16 %v2134, %v2133
        %v2156 = vpack.c.b16 %v2136, %v2135
        %v2157 = vpack.c.b16 %v2138, %v2137
        %v2158 = vpack.c.b16 %v2140, %v2139
        %v2159 = vpack.c.b16 %v2142, %v2141
        %v2160 = vpack.c.b16 %v2144, %v2143
        %v2193 = vunpack.c.l.b16 %v2097
        %v2194 = vunpack.c.l.b16 %v2098
        %v2195 = vunpack.c.l.b16 %v2099
        %v2196 = vunpack.c.l.b16 %v2100
        %v2197 = vunpack.c.l.b16 %v2101
        %v2198 = vunpack.c.l.b16 %v2102
        %v2199 = vunpack.c.l.b16 %v2103
        %v2200 = vunpack.c.l.b16 %v2104
        %v2201 = vunpack.c.l.b16 %v2105
        %v2202 = vunpack.c.l.b16 %v2106
        %v2203 = vunpack.c.l.b16 %v2107
        %v2204 = vunpack.c.l.b16 %v2108
        %v2205 = vunpack.c.l.b16 %v2109
        %v2206 = vunpack.c.l.b16 %v2110
        %v2207 = vunpack.c.l.b16 %v2111
        %v2208 = vunpack.c.l.b16 %v2112
        %v2209 = vpack.c.b16 %v2194, %v2193
        %v2210 = vpack.c.b16 %v2196, %v2195
        %v2211 = vpack.c.b16 %v2198, %v2197
        %v2212 = vpack.c.b16 %v2200, %v2199
        %v2213 = vpack.c.b16 %v2202, %v2201
        %v2214 = vpack.c.b16 %v2204, %v2203
        %v2215 = vpack.c.b16 %v2206, %v2205
        %v2216 = vpack.c.b16 %v2208, %v2207
        %2225 = vmatprep.subr.bf16.mxu0 0
        %2226 = vmatpush1.bf16.msra.mxu0 %v2209
        %2227 = vmatprep.subr.bf16.mxu0 0
        %2228 = vmatpush1.bf16.msra.mxu0 %v2210
        %2229 = vmatprep.subr.bf16.mxu0 0
        %2230 = vmatpush1.bf16.msra.mxu0 %v2211
        %2231 = vmatprep.subr.bf16.mxu0 0
        %2232 = vmatpush1.bf16.msra.mxu0 %v2212
        %2233 = vmatprep.subr.bf16.mxu0 0
        %2234 = vmatpush1.bf16.msra.mxu0 %v2213
        %2235 = vmatprep.subr.bf16.mxu0 0
        %2236 = vmatpush1.bf16.msra.mxu0 %v2214
        %2237 = vmatprep.subr.bf16.mxu0 0
        %2238 = vmatpush1.bf16.msra.mxu0 %v2215
        %2239 = vmatprep.subr.bf16.mxu0 0
        %2240 = vmatpush1.bf16.msra.mxu0 %v2216
        %2241 = vmatprep.subr.bf16.mxu0 0
        %2242 = vmatpush1.bf16.msra.mxu0 0
        %2243 = vmatprep.subr.bf16.mxu0 0
        %2244 = vmatpush1.bf16.msra.mxu0 0
        %2245 = vmatprep.subr.bf16.mxu0 0
        %2246 = vmatpush1.bf16.msra.mxu0 0
        %2247 = vmatprep.subr.bf16.mxu0 0
        %2248 = vmatpush1.bf16.msra.mxu0 0
        %2249 = vmatprep.subr.bf16.mxu0 0
        %2250 = vmatpush1.bf16.msra.mxu0 0
        %2251 = vmatprep.subr.bf16.mxu0 0
        %2252 = vmatpush1.bf16.msra.mxu0 0
        %2253 = vmatprep.subr.bf16.mxu0 0
        %2254 = vmatpush1.bf16.msra.mxu0 0
        %2255 = vmatprep.subr.bf16.mxu0 0
        %2256 = vmatpush1.bf16.msra.mxu0 0
        %2257 = vmatprep.mubr.bf16.mxu0 0
        %2258 = vmatmul.mubr.bf16.gmra.mrb[0].mxu0 %v2145
        %v2259 = vpop.f32.mrb[0].mxu0
        %v2260 = vadd.f32 0.0, %v2259
        %v2261 = vpop.f32.mrb[0].mxu0
        %v2262 = vpop.f32.mrb[0].mxu0
        %v2263 = vadd.f32 0.0, %v2262
        %v2264 = vpop.f32.mrb[0].mxu0
        %2265 = vmatprep.mubr.bf16.mxu0 0
        %2266 = vmatmul.mubr.bf16.gmra.mrb[0].mxu0 %v2146
        %v2267 = vpop.f32.mrb[0].mxu0
        %v2268 = vadd.f32 0.0, %v2267
        %v2269 = vpop.f32.mrb[0].mxu0
        %v2270 = vpop.f32.mrb[0].mxu0
        %v2271 = vadd.f32 0.0, %v2270
        %v2272 = vpop.f32.mrb[0].mxu0
        %2273 = vmatprep.mubr.bf16.mxu0 0
        %2274 = vmatmul.mubr.bf16.gmra.mrb[0].mxu0 %v2147
        %v2275 = vpop.f32.mrb[0].mxu0
        %v2276 = vadd.f32 0.0, %v2275
        %v2277 = vpop.f32.mrb[0].mxu0
        %v2278 = vpop.f32.mrb[0].mxu0
        %v2279 = vadd.f32 0.0, %v2278
        %v2280 = vpop.f32.mrb[0].mxu0
        %2281 = vmatprep.mubr.bf16.mxu0 0
        %2282 = vmatmul.mubr.bf16.gmra.mrb[0].mxu0 %v2148
        %v2283 = vpop.f32.mrb[0].mxu0
        %v2284 = vadd.f32 0.0, %v2283
        %v2285 = vpop.f32.mrb[0].mxu0
        %v2286 = vpop.f32.mrb[0].mxu0
        %v2287 = vadd.f32 0.0, %v2286
        %v2288 = vpop.f32.mrb[0].mxu0
        %2289 = vmatprep.mubr.bf16.mxu0 0
        %2290 = vmatmul.mubr.bf16.gmra.mrb[0].mxu0 %v2149
        %v2291 = vpop.f32.mrb[0].mxu0
        %v2292 = vadd.f32 0.0, %v2291
        %v2293 = vpop.f32.mrb[0].mxu0
        %v2294 = vpop.f32.mrb[0].mxu0
        %v2295 = vadd.f32 0.0, %v2294
        %v2296 = vpop.f32.mrb[0].mxu0
        %2297 = vmatprep.mubr.bf16.mxu0 0
        %2298 = vmatmul.mubr.bf16.gmra.mrb[0].mxu0 %v2150
        %v2299 = vpop.f32.mrb[0].mxu0
        %v2300 = vadd.f32 0.0, %v2299
        %v2301 = vpop.f32.mrb[0].mxu0
        %v2302 = vpop.f32.mrb[0].mxu0
        %v2303 = vadd.f32 0.0, %v2302
        %v2304 = vpop.f32.mrb[0].mxu0
        %2305 = vmatprep.mubr.bf16.mxu0 0
        %2306 = vmatmul.mubr.bf16.gmra.mrb[0].mxu0 %v2151
        %v2307 = vpop.f32.mrb[0].mxu0
        %v2308 = vadd.f32 0.0, %v2307
        %v2309 = vpop.f32.mrb[0].mxu0
        %v2310 = vpop.f32.mrb[0].mxu0
        %v2311 = vadd.f32 0.0, %v2310
        %v2312 = vpop.f32.mrb[0].mxu0
        %2313 = vmatprep.mubr.bf16.mxu0 0
        %2314 = vmatmul.mubr.bf16.gmra.mrb[0].mxu0 %v2152
        %v2315 = vpop.f32.mrb[0].mxu0
        %v2316 = vadd.f32 0.0, %v2315
        %v2317 = vpop.f32.mrb[0].mxu0
        %v2318 = vpop.f32.mrb[0].mxu0
        %v2319 = vadd.f32 0.0, %v2318
        %v2320 = vpop.f32.mrb[0].mxu0
        %2321 = vmatprep.mubr.bf16.mxu0 0
        %2322 = vmatmul.mubr.bf16.gmra.mrb[0].mxu0 %v2153
        %v2323 = vpop.f32.mrb[0].mxu0
        %v2324 = vadd.f32 0.0, %v2323
        %v2325 = vpop.f32.mrb[0].mxu0
        %v2326 = vpop.f32.mrb[0].mxu0
        %v2327 = vadd.f32 0.0, %v2326
        %v2328 = vpop.f32.mrb[0].mxu0
        %2329 = vmatprep.mubr.bf16.mxu0 0
        %2330 = vmatmul.mubr.bf16.gmra.mrb[0].mxu0 %v2154
        %v2331 = vpop.f32.mrb[0].mxu0
        %v2332 = vadd.f32 0.0, %v2331
        %v2333 = vpop.f32.mrb[0].mxu0
        %v2334 = vpop.f32.mrb[0].mxu0
        %v2335 = vadd.f32 0.0, %v2334
        %v2336 = vpop.f32.mrb[0].mxu0
        %2337 = vmatprep.mubr.bf16.mxu0 0
        %2338 = vmatmul.mubr.bf16.gmra.mrb[0].mxu0 %v2155
        %v2339 = vpop.f32.mrb[0].mxu0
        %v2340 = vadd.f32 0.0, %v2339
        %v2341 = vpop.f32.mrb[0].mxu0
        %v2342 = vpop.f32.mrb[0].mxu0
        %v2343 = vadd.f32 0.0, %v2342
        %v2344 = vpop.f32.mrb[0].mxu0
        %2345 = vmatprep.mubr.bf16.mxu0 0
        %2346 = vmatmul.mubr.bf16.gmra.mrb[0].mxu0 %v2156
        %v2347 = vpop.f32.mrb[0].mxu0
        %v2348 = vadd.f32 0.0, %v2347
        %v2349 = vpop.f32.mrb[0].mxu0
        %v2350 = vpop.f32.mrb[0].mxu0
        %v2351 = vadd.f32 0.0, %v2350
        %v2352 = vpop.f32.mrb[0].mxu0
        %2353 = vmatprep.mubr.bf16.mxu0 0
        %2354 = vmatmul.mubr.bf16.gmra.mrb[0].mxu0 %v2157
        %v2355 = vpop.f32.mrb[0].mxu0
        %v2356 = vadd.f32 0.0, %v2355
        %v2357 = vpop.f32.mrb[0].mxu0
        %v2358 = vpop.f32.mrb[0].mxu0
        %v2359 = vadd.f32 0.0, %v2358
        %v2360 = vpop.f32.mrb[0].mxu0
        %2361 = vmatprep.mubr.bf16.mxu0 0
        %2362 = vmatmul.mubr.bf16.gmra.mrb[0].mxu0 %v2158
        %v2363 = vpop.f32.mrb[0].mxu0
        %v2364 = vadd.f32 0.0, %v2363
        %v2365 = vpop.f32.mrb[0].mxu0
        %v2366 = vpop.f32.mrb[0].mxu0
        %v2367 = vadd.f32 0.0, %v2366
        %v2368 = vpop.f32.mrb[0].mxu0
        %2369 = vmatprep.mubr.bf16.mxu0 0
        %2370 = vmatmul.mubr.bf16.gmra.mrb[0].mxu0 %v2159
        %v2371 = vpop.f32.mrb[0].mxu0
        %v2372 = vadd.f32 0.0, %v2371
        %v2373 = vpop.f32.mrb[0].mxu0
        %v2374 = vpop.f32.mrb[0].mxu0
        %v2375 = vadd.f32 0.0, %v2374
        %v2376 = vpop.f32.mrb[0].mxu0
        %2377 = vmatprep.mubr.bf16.mxu0 0
        %2378 = vmatmul.mubr.bf16.gmra.mrb[0].mxu0 %v2160
        %v2379 = vpop.f32.mrb[0].mxu0
        %v2380 = vadd.f32 0.0, %v2379
        %v2381 = vpop.f32.mrb[0].mxu0
        %v2382 = vpop.f32.mrb[0].mxu0
        %v2383 = vadd.f32 0.0, %v2382
        %v2384 = vpop.f32.mrb[0].mxu0
        %2385 = vdwg.mxu0
        %v2386 = vadd.f32 %v1808, %v2260
        %v2387 = vadd.f32 %v1811, %v2263
        %v2388 = vadd.f32 %v1816, %v2268
        %v2389 = vadd.f32 %v1819, %v2271
        %v2390 = vadd.f32 %v1824, %v2276
        %v2391 = vadd.f32 %v1827, %v2279
        %v2392 = vadd.f32 %v1832, %v2284
        %v2393 = vadd.f32 %v1835, %v2287
        %v2394 = vadd.f32 %v1840, %v2292
        %v2395 = vadd.f32 %v1843, %v2295
        %v2396 = vadd.f32 %v1848, %v2300
        %v2397 = vadd.f32 %v1851, %v2303
        %v2398 = vadd.f32 %v1856, %v2308
        %v2399 = vadd.f32 %v1859, %v2311
        %v2400 = vadd.f32 %v1864, %v2316
        %v2401 = vadd.f32 %v1867, %v2319
        %v2402 = vadd.f32 %v1872, %v2324
        %v2403 = vadd.f32 %v1875, %v2327
        %v2404 = vadd.f32 %v1880, %v2332
        %v2405 = vadd.f32 %v1883, %v2335
        %v2406 = vadd.f32 %v1888, %v2340
        %v2407 = vadd.f32 %v1891, %v2343
        %v2408 = vadd.f32 %v1896, %v2348
        %v2409 = vadd.f32 %v1899, %v2351
        %v2410 = vadd.f32 %v1904, %v2356
        %v2411 = vadd.f32 %v1907, %v2359
        %v2412 = vadd.f32 %v1912, %v2364
        %v2413 = vadd.f32 %v1915, %v2367
        %v2414 = vadd.f32 %v1920, %v2372
        %v2415 = vadd.f32 %v1923, %v2375
        %v2416 = vadd.f32 %v1928, %v2380
        %v2417 = vadd.f32 %v1931, %v2383
        %v2418 = vld [vmem:[%s255] sm:$0xf]
        %v2419 = vld [vmem:[%s255 + $0x4] sm:$0xf]
        %v2420 = vld [vmem:[%s255 + $0xc] sm:$0xf]
        %v2421 = vld [vmem:[%s255 + $0x10] sm:$0xf]
        %v2422 = vld [vmem:[%s255 + $0x18] sm:$0xf]
        %v2423 = vld [vmem:[%s255 + $0x1c] sm:$0xf]
        %v2424 = vld [vmem:[%s255 + $0x24] sm:$0xf]
        %v2425 = vld [vmem:[%s255 + $0x28] sm:$0xf]
        %v2426 = vld [vmem:[%s255 + $0x30] sm:$0xf]
        %v2427 = vld [vmem:[%s255 + $0x34] sm:$0xf]
        %v2428 = vld [vmem:[%s255 + $0x3c] sm:$0xf]
        %v2429 = vld [vmem:[%s255 + $0x40] sm:$0xf]
        %v2430 = vld [vmem:[%s255 + $0x48] sm:$0xf]
        %v2431 = vld [vmem:[%s255 + $0x4c] sm:$0xf]
        %v2432 = vld [vmem:[%s255 + $0x54] sm:$0xf]
        %v2433 = vld [vmem:[%s255 + $0x58] sm:$0xf]
        %v2434 = vld [vmem:[%s255 + $0x60] sm:$0xf]
        %v2435 = vld [vmem:[%s255 + $0x64] sm:$0xf]
        %v2436 = vld [vmem:[%s255 + $0x6c] sm:$0xf]
        %v2437 = vld [vmem:[%s255 + $0x70] sm:$0xf]
        %v2438 = vld [vmem:[%s255 + $0x78] sm:$0xf]
        %v2439 = vld [vmem:[%s255 + $0x7c] sm:$0xf]
        %v2440 = vld [vmem:[%s255 + $0x84] sm:$0xf]
        %v2441 = vld [vmem:[%s255 + $0x88] sm:$0xf]
        %v2442 = vld [vmem:[%s255 + $0x90] sm:$0xf]
        %v2443 = vld [vmem:[%s255 + $0x94] sm:$0xf]
        %v2444 = vld [vmem:[%s255 + $0x9c] sm:$0xf]
        %v2445 = vld [vmem:[%s255 + $0xa0] sm:$0xf]
        %v2446 = vld [vmem:[%s255 + $0xa8] sm:$0xf]
        %v2447 = vld [vmem:[%s255 + $0xac] sm:$0xf]
        %v2448 = vld [vmem:[%s255 + $0xb4] sm:$0xf]
        %v2449 = vld [vmem:[%s255 + $0xb8] sm:$0xf]
        %v2450 = vld [vmem:[#allocation6 + $0xc0] sm:$0xf]
        %v2451 = vld [vmem:[#allocation6 + $0xc4] sm:$0xf]
        %v2452 = vld [vmem:[#allocation6 + $0xc8] sm:$0xf]
        %v2453 = vld [vmem:[#allocation6 + $0xcc] sm:$0xf]
        %v2454 = vld [vmem:[#allocation6 + $0xd0] sm:$0xf]
        %v2455 = vld [vmem:[#allocation6 + $0xd4] sm:$0xf]
        %v2456 = vld [vmem:[#allocation6 + $0xd8] sm:$0xf]
        %v2457 = vld [vmem:[#allocation6 + $0xdc] sm:$0xf]
        %v2458 = vld [vmem:[#allocation6 + $0xe0] sm:$0xf]
        %v2459 = vld [vmem:[#allocation6 + $0xe4] sm:$0xf]
        %v2460 = vld [vmem:[#allocation6 + $0xe8] sm:$0xf]
        %v2461 = vld [vmem:[#allocation6 + $0xec] sm:$0xf]
        %v2462 = vld [vmem:[#allocation6 + $0xf0] sm:$0xf]
        %v2463 = vld [vmem:[#allocation6 + $0xf4] sm:$0xf]
        %v2464 = vld [vmem:[#allocation6 + $0xf8] sm:$0xf]
        %v2465 = vld [vmem:[#allocation6 + $0xfc] sm:$0xf]
        %v2498 = vunpack.c.l.b16 %v2418
        %v2499 = vunpack.c.l.b16 %v2419
        %v2500 = vunpack.c.l.b16 %v2420
        %v2501 = vunpack.c.l.b16 %v2421
        %v2502 = vunpack.c.l.b16 %v2422
        %v2503 = vunpack.c.l.b16 %v2423
        %v2504 = vunpack.c.l.b16 %v2424
        %v2505 = vunpack.c.l.b16 %v2425
        %v2506 = vunpack.c.l.b16 %v2426
        %v2507 = vunpack.c.l.b16 %v2427
        %v2508 = vunpack.c.l.b16 %v2428
        %v2509 = vunpack.c.l.b16 %v2429
        %v2510 = vunpack.c.l.b16 %v2430
        %v2511 = vunpack.c.l.b16 %v2431
        %v2512 = vunpack.c.l.b16 %v2432
        %v2513 = vunpack.c.l.b16 %v2433
        %v2514 = vunpack.c.l.b16 %v2434
        %v2515 = vunpack.c.l.b16 %v2435
        %v2516 = vunpack.c.l.b16 %v2436
        %v2517 = vunpack.c.l.b16 %v2437
        %v2518 = vunpack.c.l.b16 %v2438
        %v2519 = vunpack.c.l.b16 %v2439
        %v2520 = vunpack.c.l.b16 %v2440
        %v2521 = vunpack.c.l.b16 %v2441
        %v2522 = vunpack.c.l.b16 %v2442
        %v2523 = vunpack.c.l.b16 %v2443
        %v2524 = vunpack.c.l.b16 %v2444
        %v2525 = vunpack.c.l.b16 %v2445
        %v2526 = vunpack.c.l.b16 %v2446
        %v2527 = vunpack.c.l.b16 %v2447
        %v2528 = vunpack.c.l.b16 %v2448
        %v2529 = vunpack.c.l.b16 %v2449
        %v2530 = vpack.c.b16 %v2499, %v2498
        %v2531 = vpack.c.b16 %v2501, %v2500
        %v2532 = vpack.c.b16 %v2503, %v2502
        %v2533 = vpack.c.b16 %v2505, %v2504
        %v2534 = vpack.c.b16 %v2507, %v2506
        %v2535 = vpack.c.b16 %v2509, %v2508
        %v2536 = vpack.c.b16 %v2511, %v2510
        %v2537 = vpack.c.b16 %v2513, %v2512
        %v2538 = vpack.c.b16 %v2515, %v2514
        %v2539 = vpack.c.b16 %v2517, %v2516
        %v2540 = vpack.c.b16 %v2519, %v2518
        %v2541 = vpack.c.b16 %v2521, %v2520
        %v2542 = vpack.c.b16 %v2523, %v2522
        %v2543 = vpack.c.b16 %v2525, %v2524
        %v2544 = vpack.c.b16 %v2527, %v2526
        %v2545 = vpack.c.b16 %v2529, %v2528
        %v2578 = vunpack.c.l.b16 %v2450
        %v2579 = vunpack.c.l.b16 %v2451
        %v2580 = vunpack.c.l.b16 %v2452
        %v2581 = vunpack.c.l.b16 %v2453
        %v2582 = vunpack.c.l.b16 %v2454
        %v2583 = vunpack.c.l.b16 %v2455
        %v2584 = vunpack.c.l.b16 %v2456
        %v2585 = vunpack.c.l.b16 %v2457
        %v2586 = vunpack.c.l.b16 %v2458
        %v2587 = vunpack.c.l.b16 %v2459
        %v2588 = vunpack.c.l.b16 %v2460
        %v2589 = vunpack.c.l.b16 %v2461
        %v2590 = vunpack.c.l.b16 %v2462
        %v2591 = vunpack.c.l.b16 %v2463
        %v2592 = vunpack.c.l.b16 %v2464
        %v2593 = vunpack.c.l.b16 %v2465
        %v2594 = vpack.c.b16 %v2579, %v2578
        %v2595 = vpack.c.b16 %v2581, %v2580
        %v2596 = vpack.c.b16 %v2583, %v2582
        %v2597 = vpack.c.b16 %v2585, %v2584
        %v2598 = vpack.c.b16 %v2587, %v2586
        %v2599 = vpack.c.b16 %v2589, %v2588
        %v2600 = vpack.c.b16 %v2591, %v2590
        %v2601 = vpack.c.b16 %v2593, %v2592
        %2610 = vmatprep.subr.bf16.mxu0 0
        %2611 = vmatpush1.bf16.msra.mxu0 %v2594
        %2612 = vmatprep.subr.bf16.mxu0 0
        %2613 = vmatpush1.bf16.msra.mxu0 %v2595
        %2614 = vmatprep.subr.bf16.mxu0 0
        %2615 = vmatpush1.bf16.msra.mxu0 %v2596
        %2616 = vmatprep.subr.bf16.mxu0 0
        %2617 = vmatpush1.bf16.msra.mxu0 %v2597
        %2618 = vmatprep.subr.bf16.mxu0 0
        %2619 = vmatpush1.bf16.msra.mxu0 %v2598
        %2620 = vmatprep.subr.bf16.mxu0 0
        %2621 = vmatpush1.bf16.msra.mxu0 %v2599
        %2622 = vmatprep.subr.bf16.mxu0 0
        %2623 = vmatpush1.bf16.msra.mxu0 %v2600
        %2624 = vmatprep.subr.bf16.mxu0 0
        %2625 = vmatpush1.bf16.msra.mxu0 %v2601
        %2626 = vmatprep.subr.bf16.mxu0 0
        %2627 = vmatpush1.bf16.msra.mxu0 0
        %2628 = vmatprep.subr.bf16.mxu0 0
        %2629 = vmatpush1.bf16.msra.mxu0 0
        %2630 = vmatprep.subr.bf16.mxu0 0
        %2631 = vmatpush1.bf16.msra.mxu0 0
        %2632 = vmatprep.subr.bf16.mxu0 0
        %2633 = vmatpush1.bf16.msra.mxu0 0
        %2634 = vmatprep.subr.bf16.mxu0 0
        %2635 = vmatpush1.bf16.msra.mxu0 0
        %2636 = vmatprep.subr.bf16.mxu0 0
        %2637 = vmatpush1.bf16.msra.mxu0 0
        %2638 = vmatprep.subr.bf16.mxu0 0
        %2639 = vmatpush1.bf16.msra.mxu0 0
        %2640 = vmatprep.subr.bf16.mxu0 0
        %2641 = vmatpush1.bf16.msra.mxu0 0
        %2642 = vmatprep.mubr.bf16.mxu0 0
        %2643 = vmatmul.mubr.bf16.gmra.mrb[0].mxu0 %v2530
        %v2644 = vpop.f32.mrb[0].mxu0
        %v2645 = vadd.f32 0.0, %v2644
        %v2646 = vpop.f32.mrb[0].mxu0
        %v2647 = vpop.f32.mrb[0].mxu0
        %v2648 = vadd.f32 0.0, %v2647
        %v2649 = vpop.f32.mrb[0].mxu0
        %2650 = vmatprep.mubr.bf16.mxu0 0
        %2651 = vmatmul.mubr.bf16.gmra.mrb[0].mxu0 %v2531
        %v2652 = vpop.f32.mrb[0].mxu0
        %v2653 = vadd.f32 0.0, %v2652
        %v2654 = vpop.f32.mrb[0].mxu0
        %v2655 = vpop.f32.mrb[0].mxu0
        %v2656 = vadd.f32 0.0, %v2655
        %v2657 = vpop.f32.mrb[0].mxu0
        %2658 = vmatprep.mubr.bf16.mxu0 0
        %2659 = vmatmul.mubr.bf16.gmra.mrb[0].mxu0 %v2532
        %v2660 = vpop.f32.mrb[0].mxu0
        %v2661 = vadd.f32 0.0, %v2660
        %v2662 = vpop.f32.mrb[0].mxu0
        %v2663 = vpop.f32.mrb[0].mxu0
        %v2664 = vadd.f32 0.0, %v2663
        %v2665 = vpop.f32.mrb[0].mxu0
        %2666 = vmatprep.mubr.bf16.mxu0 0
        %2667 = vmatmul.mubr.bf16.gmra.mrb[0].mxu0 %v2533
        %v2668 = vpop.f32.mrb[0].mxu0
        %v2669 = vadd.f32 0.0, %v2668
        %v2670 = vpop.f32.mrb[0].mxu0
        %v2671 = vpop.f32.mrb[0].mxu0
        %v2672 = vadd.f32 0.0, %v2671
        %v2673 = vpop.f32.mrb[0].mxu0
        %2674 = vmatprep.mubr.bf16.mxu0 0
        %2675 = vmatmul.mubr.bf16.gmra.mrb[0].mxu0 %v2534
        %v2676 = vpop.f32.mrb[0].mxu0
        %v2677 = vadd.f32 0.0, %v2676
        %v2678 = vpop.f32.mrb[0].mxu0
        %v2679 = vpop.f32.mrb[0].mxu0
        %v2680 = vadd.f32 0.0, %v2679
        %v2681 = vpop.f32.mrb[0].mxu0
        %2682 = vmatprep.mubr.bf16.mxu0 0
        %2683 = vmatmul.mubr.bf16.gmra.mrb[0].mxu0 %v2535
        %v2684 = vpop.f32.mrb[0].mxu0
        %v2685 = vadd.f32 0.0, %v2684
        %v2686 = vpop.f32.mrb[0].mxu0
        %v2687 = vpop.f32.mrb[0].mxu0
        %v2688 = vadd.f32 0.0, %v2687
        %v2689 = vpop.f32.mrb[0].mxu0
        %2690 = vmatprep.mubr.bf16.mxu0 0
        %2691 = vmatmul.mubr.bf16.gmra.mrb[0].mxu0 %v2536
        %v2692 = vpop.f32.mrb[0].mxu0
        %v2693 = vadd.f32 0.0, %v2692
        %v2694 = vpop.f32.mrb[0].mxu0
        %v2695 = vpop.f32.mrb[0].mxu0
        %v2696 = vadd.f32 0.0, %v2695
        %v2697 = vpop.f32.mrb[0].mxu0
        %2698 = vmatprep.mubr.bf16.mxu0 0
        %2699 = vmatmul.mubr.bf16.gmra.mrb[0].mxu0 %v2537
        %v2700 = vpop.f32.mrb[0].mxu0
        %v2701 = vadd.f32 0.0, %v2700
        %v2702 = vpop.f32.mrb[0].mxu0
        %v2703 = vpop.f32.mrb[0].mxu0
        %v2704 = vadd.f32 0.0, %v2703
        %v2705 = vpop.f32.mrb[0].mxu0
        %2706 = vmatprep.mubr.bf16.mxu0 0
        %2707 = vmatmul.mubr.bf16.gmra.mrb[0].mxu0 %v2538
        %v2708 = vpop.f32.mrb[0].mxu0
        %v2709 = vadd.f32 0.0, %v2708
        %v2710 = vpop.f32.mrb[0].mxu0
        %v2711 = vpop.f32.mrb[0].mxu0
        %v2712 = vadd.f32 0.0, %v2711
        %v2713 = vpop.f32.mrb[0].mxu0
        %2714 = vmatprep.mubr.bf16.mxu0 0
        %2715 = vmatmul.mubr.bf16.gmra.mrb[0].mxu0 %v2539
        %v2716 = vpop.f32.mrb[0].mxu0
        %v2717 = vadd.f32 0.0, %v2716
        %v2718 = vpop.f32.mrb[0].mxu0
        %v2719 = vpop.f32.mrb[0].mxu0
        %v2720 = vadd.f32 0.0, %v2719
        %v2721 = vpop.f32.mrb[0].mxu0
        %2722 = vmatprep.mubr.bf16.mxu0 0
        %2723 = vmatmul.mubr.bf16.gmra.mrb[0].mxu0 %v2540
        %v2724 = vpop.f32.mrb[0].mxu0
        %v2725 = vadd.f32 0.0, %v2724
        %v2726 = vpop.f32.mrb[0].mxu0
        %v2727 = vpop.f32.mrb[0].mxu0
        %v2728 = vadd.f32 0.0, %v2727
        %v2729 = vpop.f32.mrb[0].mxu0
        %2730 = vmatprep.mubr.bf16.mxu0 0
        %2731 = vmatmul.mubr.bf16.gmra.mrb[0].mxu0 %v2541
        %v2732 = vpop.f32.mrb[0].mxu0
        %v2733 = vadd.f32 0.0, %v2732
        %v2734 = vpop.f32.mrb[0].mxu0
        %v2735 = vpop.f32.mrb[0].mxu0
        %v2736 = vadd.f32 0.0, %v2735
        %v2737 = vpop.f32.mrb[0].mxu0
        %2738 = vmatprep.mubr.bf16.mxu0 0
        %2739 = vmatmul.mubr.bf16.gmra.mrb[0].mxu0 %v2542
        %v2740 = vpop.f32.mrb[0].mxu0
        %v2741 = vadd.f32 0.0, %v2740
        %v2742 = vpop.f32.mrb[0].mxu0
        %v2743 = vpop.f32.mrb[0].mxu0
        %v2744 = vadd.f32 0.0, %v2743
        %v2745 = vpop.f32.mrb[0].mxu0
        %2746 = vmatprep.mubr.bf16.mxu0 0
        %2747 = vmatmul.mubr.bf16.gmra.mrb[0].mxu0 %v2543
        %v2748 = vpop.f32.mrb[0].mxu0
        %v2749 = vadd.f32 0.0, %v2748
        %v2750 = vpop.f32.mrb[0].mxu0
        %v2751 = vpop.f32.mrb[0].mxu0
        %v2752 = vadd.f32 0.0, %v2751
        %v2753 = vpop.f32.mrb[0].mxu0
        %2754 = vmatprep.mubr.bf16.mxu0 0
        %2755 = vmatmul.mubr.bf16.gmra.mrb[0].mxu0 %v2544
        %v2756 = vpop.f32.mrb[0].mxu0
        %v2757 = vadd.f32 0.0, %v2756
        %v2758 = vpop.f32.mrb[0].mxu0
        %v2759 = vpop.f32.mrb[0].mxu0
        %v2760 = vadd.f32 0.0, %v2759
        %v2761 = vpop.f32.mrb[0].mxu0
        %2762 = vmatprep.mubr.bf16.mxu0 0
        %2763 = vmatmul.mubr.bf16.gmra.mrb[0].mxu0 %v2545
        %v2764 = vpop.f32.mrb[0].mxu0
        %v2765 = vadd.f32 0.0, %v2764
        %v2766 = vpop.f32.mrb[0].mxu0
        %v2767 = vpop.f32.mrb[0].mxu0
        %v2768 = vadd.f32 0.0, %v2767
        %v2769 = vpop.f32.mrb[0].mxu0
        %2770 = vdwg.mxu0
        %v2771 = vadd.f32 %v2386, %v2645
        %v2772 = vadd.f32 %v2387, %v2648
        %v2773 = vadd.f32 %v2388, %v2653
        %v2774 = vadd.f32 %v2389, %v2656
        %v2775 = vadd.f32 %v2390, %v2661
        %v2776 = vadd.f32 %v2391, %v2664
        %v2777 = vadd.f32 %v2392, %v2669
        %v2778 = vadd.f32 %v2393, %v2672
        %v2779 = vadd.f32 %v2394, %v2677
        %v2780 = vadd.f32 %v2395, %v2680
        %v2781 = vadd.f32 %v2396, %v2685
        %v2782 = vadd.f32 %v2397, %v2688
        %v2783 = vadd.f32 %v2398, %v2693
        %v2784 = vadd.f32 %v2399, %v2696
        %v2785 = vadd.f32 %v2400, %v2701
        %v2786 = vadd.f32 %v2401, %v2704
        %v2787 = vadd.f32 %v2402, %v2709
        %v2788 = vadd.f32 %v2403, %v2712
        %v2789 = vadd.f32 %v2404, %v2717
        %v2790 = vadd.f32 %v2405, %v2720
        %v2791 = vadd.f32 %v2406, %v2725
        %v2792 = vadd.f32 %v2407, %v2728
        %v2793 = vadd.f32 %v2408, %v2733
        %v2794 = vadd.f32 %v2409, %v2736
        %v2795 = vadd.f32 %v2410, %v2741
        %v2796 = vadd.f32 %v2411, %v2744
        %v2797 = vadd.f32 %v2412, %v2749
        %v2798 = vadd.f32 %v2413, %v2752
        %v2799 = vadd.f32 %v2414, %v2757
        %v2800 = vadd.f32 %v2415, %v2760
        %v2801 = vadd.f32 %v2416, %v2765
        %v2802 = vadd.f32 %v2417, %v2768
        %v2803 = vld [vmem:[%s255] sm:$0xf]
        %v2804 = vld [vmem:[%s255 + $0x4] sm:$0xf]
        %v2805 = vld [vmem:[%s255 + $0x8] sm:$0x1]
        %v2806 = vld [vmem:[%s255 + $0xc] sm:$0xf]
        %v2807 = vld [vmem:[%s255 + $0x10] sm:$0xf]
        %v2808 = vld [vmem:[%s255 + $0x14] sm:$0x1]
        %v2809 = vld [vmem:[%s255 + $0x18] sm:$0xf]
        %v2810 = vld [vmem:[%s255 + $0x1c] sm:$0xf]
        %v2811 = vld [vmem:[%s255 + $0x20] sm:$0x1]
        %v2812 = vld [vmem:[%s255 + $0x24] sm:$0xf]
        %v2813 = vld [vmem:[%s255 + $0x28] sm:$0xf]
        %v2814 = vld [vmem:[%s255 + $0x2c] sm:$0x1]
        %v2815 = vld [vmem:[%s255 + $0x30] sm:$0xf]
        %v2816 = vld [vmem:[%s255 + $0x34] sm:$0xf]
        %v2817 = vld [vmem:[%s255 + $0x38] sm:$0x1]
        %v2818 = vld [vmem:[%s255 + $0x3c] sm:$0xf]
        %v2819 = vld [vmem:[%s255 + $0x40] sm:$0xf]
        %v2820 = vld [vmem:[%s255 + $0x44] sm:$0x1]
        %v2821 = vld [vmem:[%s255 + $0x48] sm:$0xf]
        %v2822 = vld [vmem:[%s255 + $0x4c] sm:$0xf]
        %v2823 = vld [vmem:[%s255 + $0x50] sm:$0x1]
        %v2824 = vld [vmem:[%s255 + $0x54] sm:$0xf]
        %v2825 = vld [vmem:[%s255 + $0x58] sm:$0xf]
        %v2826 = vld [vmem:[%s255 + $0x5c] sm:$0x1]
        %v2827 = vld [vmem:[%s255 + $0x60] sm:$0xf]
        %v2828 = vld [vmem:[%s255 + $0x64] sm:$0xf]
        %v2829 = vld [vmem:[%s255 + $0x68] sm:$0x1]
        %v2830 = vld [vmem:[%s255 + $0x6c] sm:$0xf]
        %v2831 = vld [vmem:[%s255 + $0x70] sm:$0xf]
        %v2832 = vld [vmem:[%s255 + $0x74] sm:$0x1]
        %v2833 = vld [vmem:[%s255 + $0x78] sm:$0xf]
        %v2834 = vld [vmem:[%s255 + $0x7c] sm:$0xf]
        %v2835 = vld [vmem:[%s255 + $0x80] sm:$0x1]
        %v2836 = vld [vmem:[%s255 + $0x84] sm:$0xf]
        %v2837 = vld [vmem:[%s255 + $0x88] sm:$0xf]
        %v2838 = vld [vmem:[%s255 + $0x8c] sm:$0x1]
        %v2839 = vld [vmem:[%s255 + $0x90] sm:$0xf]
        %v2840 = vld [vmem:[%s255 + $0x94] sm:$0xf]
        %v2841 = vld [vmem:[%s255 + $0x98] sm:$0x1]
        %v2842 = vld [vmem:[%s255 + $0x9c] sm:$0xf]
        %v2843 = vld [vmem:[%s255 + $0xa0] sm:$0xf]
        %v2844 = vld [vmem:[%s255 + $0xa4] sm:$0x1]
        %v2845 = vld [vmem:[%s255 + $0xa8] sm:$0xf]
        %v2846 = vld [vmem:[%s255 + $0xac] sm:$0xf]
        %v2847 = vld [vmem:[%s255 + $0xb0] sm:$0x1]
        %v2848 = vld [vmem:[%s255 + $0xb4] sm:$0xf]
        %v2849 = vld [vmem:[%s255 + $0xb8] sm:$0xf]
        %v2850 = vld [vmem:[%s255 + $0xbc] sm:$0x1]
        %v2852 = vshrl.u32 %v2803, 16
        %v2854 = vrot.slane %v2852, 4
        %v2855 = vshll.u32 %v2803, 16
        %v2857 = vrot.slane %v2855, 5
        %v2858 = vor.u32 %v2854, %v2857
        %v2859 = vrot.slane %v2858, 4
        %v2861 = vshll.u32 %v2804, 16
        %v2863 = vrot.slane %v2861, 5
        %v2864 = vsel %vm955, %v2859, %v2863
        %v2865 = vshrl.u32 %v2804, 16
        %v2867 = vrot.slane %v2865, 4
        %v2868 = vor.u32 %v2867, %v2863
        %v2869 = vrot.slane %v2868, 4
        %v2871 = vshll.u32 %v2805, 16
        %v2873 = vrot.slane %v2871, 5
        %v2874 = vsel %vm955, %v2869, %v2873
        %v2876 = vshrl.u32 %v2806, 16
        %v2878 = vrot.slane %v2876, 4
        %v2879 = vshll.u32 %v2806, 16
        %v2881 = vrot.slane %v2879, 5
        %v2882 = vor.u32 %v2878, %v2881
        %v2883 = vrot.slane %v2882, 4
        %v2885 = vshll.u32 %v2807, 16
        %v2887 = vrot.slane %v2885, 5
        %v2888 = vsel %vm955, %v2883, %v2887
        %v2889 = vshrl.u32 %v2807, 16
        %v2891 = vrot.slane %v2889, 4
        %v2892 = vor.u32 %v2891, %v2887
        %v2893 = vrot.slane %v2892, 4
        %v2895 = vshll.u32 %v2808, 16
        %v2897 = vrot.slane %v2895, 5
        %v2898 = vsel %vm955, %v2893, %v2897
        %v2900 = vshrl.u32 %v2809, 16
        %v2902 = vrot.slane %v2900, 4
        %v2903 = vshll.u32 %v2809, 16
        %v2905 = vrot.slane %v2903, 5
        %v2906 = vor.u32 %v2902, %v2905
        %v2907 = vrot.slane %v2906, 4
        %v2909 = vshll.u32 %v2810, 16
        %v2911 = vrot.slane %v2909, 5
        %v2912 = vsel %vm955, %v2907, %v2911
        %v2913 = vshrl.u32 %v2810, 16
        %v2915 = vrot.slane %v2913, 4
        %v2916 = vor.u32 %v2915, %v2911
        %v2917 = vrot.slane %v2916, 4
        %v2919 = vshll.u32 %v2811, 16
        %v2921 = vrot.slane %v2919, 5
        %v2922 = vsel %vm955, %v2917, %v2921
        %v2924 = vshrl.u32 %v2812, 16
        %v2926 = vrot.slane %v2924, 4
        %v2927 = vshll.u32 %v2812, 16
        %v2929 = vrot.slane %v2927, 5
        %v2930 = vor.u32 %v2926, %v2929
        %v2931 = vrot.slane %v2930, 4
        %v2933 = vshll.u32 %v2813, 16
        %v2935 = vrot.slane %v2933, 5
        %v2936 = vsel %vm955, %v2931, %v2935
        %v2937 = vshrl.u32 %v2813, 16
        %v2939 = vrot.slane %v2937, 4
        %v2940 = vor.u32 %v2939, %v2935
        %v2941 = vrot.slane %v2940, 4
        %v2943 = vshll.u32 %v2814, 16
        %v2945 = vrot.slane %v2943, 5
        %v2946 = vsel %vm955, %v2941, %v2945
        %v2948 = vshrl.u32 %v2815, 16
        %v2950 = vrot.slane %v2948, 4
        %v2951 = vshll.u32 %v2815, 16
        %v2953 = vrot.slane %v2951, 5
        %v2954 = vor.u32 %v2950, %v2953
        %v2955 = vrot.slane %v2954, 4
        %v2957 = vshll.u32 %v2816, 16
        %v2959 = vrot.slane %v2957, 5
        %v2960 = vsel %vm955, %v2955, %v2959
        %v2961 = vshrl.u32 %v2816, 16
        %v2963 = vrot.slane %v2961, 4
        %v2964 = vor.u32 %v2963, %v2959
        %v2965 = vrot.slane %v2964, 4
        %v2967 = vshll.u32 %v2817, 16
        %v2969 = vrot.slane %v2967, 5
        %v2970 = vsel %vm955, %v2965, %v2969
        %v2972 = vshrl.u32 %v2818, 16
        %v2974 = vrot.slane %v2972, 4
        %v2975 = vshll.u32 %v2818, 16
        %v2977 = vrot.slane %v2975, 5
        %v2978 = vor.u32 %v2974, %v2977
        %v2979 = vrot.slane %v2978, 4
        %v2981 = vshll.u32 %v2819, 16
        %v2983 = vrot.slane %v2981, 5
        %v2984 = vsel %vm955, %v2979, %v2983
        %v2985 = vshrl.u32 %v2819, 16
        %v2987 = vrot.slane %v2985, 4
        %v2988 = vor.u32 %v2987, %v2983
        %v2989 = vrot.slane %v2988, 4
        %v2991 = vshll.u32 %v2820, 16
        %v2993 = vrot.slane %v2991, 5
        %v2994 = vsel %vm955, %v2989, %v2993
        %v2996 = vshrl.u32 %v2821, 16
        %v2998 = vrot.slane %v2996, 4
        %v2999 = vshll.u32 %v2821, 16
        %v3001 = vrot.slane %v2999, 5
        %v3002 = vor.u32 %v2998, %v3001
        %v3003 = vrot.slane %v3002, 4
        %v3005 = vshll.u32 %v2822, 16
        %v3007 = vrot.slane %v3005, 5
        %v3008 = vsel %vm955, %v3003, %v3007
        %v3009 = vshrl.u32 %v2822, 16
        %v3011 = vrot.slane %v3009, 4
        %v3012 = vor.u32 %v3011, %v3007
        %v3013 = vrot.slane %v3012, 4
        %v3015 = vshll.u32 %v2823, 16
        %v3017 = vrot.slane %v3015, 5
        %v3018 = vsel %vm955, %v3013, %v3017
        %v3020 = vshrl.u32 %v2824, 16
        %v3022 = vrot.slane %v3020, 4
        %v3023 = vshll.u32 %v2824, 16
        %v3025 = vrot.slane %v3023, 5
        %v3026 = vor.u32 %v3022, %v3025
        %v3027 = vrot.slane %v3026, 4
        %v3029 = vshll.u32 %v2825, 16
        %v3031 = vrot.slane %v3029, 5
        %v3032 = vsel %vm955, %v3027, %v3031
        %v3033 = vshrl.u32 %v2825, 16
        %v3035 = vrot.slane %v3033, 4
        %v3036 = vor.u32 %v3035, %v3031
        %v3037 = vrot.slane %v3036, 4
        %v3039 = vshll.u32 %v2826, 16
        %v3041 = vrot.slane %v3039, 5
        %v3042 = vsel %vm955, %v3037, %v3041
        %v3044 = vshrl.u32 %v2827, 16
        %v3046 = vrot.slane %v3044, 4
        %v3047 = vshll.u32 %v2827, 16
        %v3049 = vrot.slane %v3047, 5
        %v3050 = vor.u32 %v3046, %v3049
        %v3051 = vrot.slane %v3050, 4
        %v3053 = vshll.u32 %v2828, 16
        %v3055 = vrot.slane %v3053, 5
        %v3056 = vsel %vm955, %v3051, %v3055
        %v3057 = vshrl.u32 %v2828, 16
        %v3059 = vrot.slane %v3057, 4
        %v3060 = vor.u32 %v3059, %v3055
        %v3061 = vrot.slane %v3060, 4
        %v3063 = vshll.u32 %v2829, 16
        %v3065 = vrot.slane %v3063, 5
        %v3066 = vsel %vm955, %v3061, %v3065
        %v3068 = vshrl.u32 %v2830, 16
        %v3070 = vrot.slane %v3068, 4
        %v3071 = vshll.u32 %v2830, 16
        %v3073 = vrot.slane %v3071, 5
        %v3074 = vor.u32 %v3070, %v3073
        %v3075 = vrot.slane %v3074, 4
        %v3077 = vshll.u32 %v2831, 16
        %v3079 = vrot.slane %v3077, 5
        %v3080 = vsel %vm955, %v3075, %v3079
        %v3081 = vshrl.u32 %v2831, 16
        %v3083 = vrot.slane %v3081, 4
        %v3084 = vor.u32 %v3083, %v3079
        %v3085 = vrot.slane %v3084, 4
        %v3087 = vshll.u32 %v2832, 16
        %v3089 = vrot.slane %v3087, 5
        %v3090 = vsel %vm955, %v3085, %v3089
        %v3092 = vshrl.u32 %v2833, 16
        %v3094 = vrot.slane %v3092, 4
        %v3095 = vshll.u32 %v2833, 16
        %v3097 = vrot.slane %v3095, 5
        %v3098 = vor.u32 %v3094, %v3097
        %v3099 = vrot.slane %v3098, 4
        %v3101 = vshll.u32 %v2834, 16
        %v3103 = vrot.slane %v3101, 5
        %v3104 = vsel %vm955, %v3099, %v3103
        %v3105 = vshrl.u32 %v2834, 16
        %v3107 = vrot.slane %v3105, 4
        %v3108 = vor.u32 %v3107, %v3103
        %v3109 = vrot.slane %v3108, 4
        %v3111 = vshll.u32 %v2835, 16
        %v3113 = vrot.slane %v3111, 5
        %v3114 = vsel %vm955, %v3109, %v3113
        %v3116 = vshrl.u32 %v2836, 16
        %v3118 = vrot.slane %v3116, 4
        %v3119 = vshll.u32 %v2836, 16
        %v3121 = vrot.slane %v3119, 5
        %v3122 = vor.u32 %v3118, %v3121
        %v3123 = vrot.slane %v3122, 4
        %v3125 = vshll.u32 %v2837, 16
        %v3127 = vrot.slane %v3125, 5
        %v3128 = vsel %vm955, %v3123, %v3127
        %v3129 = vshrl.u32 %v2837, 16
        %v3131 = vrot.slane %v3129, 4
        %v3132 = vor.u32 %v3131, %v3127
        %v3133 = vrot.slane %v3132, 4
        %v3135 = vshll.u32 %v2838, 16
        %v3137 = vrot.slane %v3135, 5
        %v3138 = vsel %vm955, %v3133, %v3137
        %v3140 = vshrl.u32 %v2839, 16
        %v3142 = vrot.slane %v3140, 4
        %v3143 = vshll.u32 %v2839, 16
        %v3145 = vrot.slane %v3143, 5
        %v3146 = vor.u32 %v3142, %v3145
        %v3147 = vrot.slane %v3146, 4
        %v3149 = vshll.u32 %v2840, 16
        %v3151 = vrot.slane %v3149, 5
        %v3152 = vsel %vm955, %v3147, %v3151
        %v3153 = vshrl.u32 %v2840, 16
        %v3155 = vrot.slane %v3153, 4
        %v3156 = vor.u32 %v3155, %v3151
        %v3157 = vrot.slane %v3156, 4
        %v3159 = vshll.u32 %v2841, 16
        %v3161 = vrot.slane %v3159, 5
        %v3162 = vsel %vm955, %v3157, %v3161
        %v3164 = vshrl.u32 %v2842, 16
        %v3166 = vrot.slane %v3164, 4
        %v3167 = vshll.u32 %v2842, 16
        %v3169 = vrot.slane %v3167, 5
        %v3170 = vor.u32 %v3166, %v3169
        %v3171 = vrot.slane %v3170, 4
        %v3173 = vshll.u32 %v2843, 16
        %v3175 = vrot.slane %v3173, 5
        %v3176 = vsel %vm955, %v3171, %v3175
        %v3177 = vshrl.u32 %v2843, 16
        %v3179 = vrot.slane %v3177, 4
        %v3180 = vor.u32 %v3179, %v3175
        %v3181 = vrot.slane %v3180, 4
        %v3183 = vshll.u32 %v2844, 16
        %v3185 = vrot.slane %v3183, 5
        %v3186 = vsel %vm955, %v3181, %v3185
        %v3188 = vshrl.u32 %v2845, 16
        %v3190 = vrot.slane %v3188, 4
        %v3191 = vshll.u32 %v2845, 16
        %v3193 = vrot.slane %v3191, 5
        %v3194 = vor.u32 %v3190, %v3193
        %v3195 = vrot.slane %v3194, 4
        %v3197 = vshll.u32 %v2846, 16
        %v3199 = vrot.slane %v3197, 5
        %v3200 = vsel %vm955, %v3195, %v3199
        %v3201 = vshrl.u32 %v2846, 16
        %v3203 = vrot.slane %v3201, 4
        %v3204 = vor.u32 %v3203, %v3199
        %v3205 = vrot.slane %v3204, 4
        %v3207 = vshll.u32 %v2847, 16
        %v3209 = vrot.slane %v3207, 5
        %v3210 = vsel %vm955, %v3205, %v3209
        %v3212 = vshrl.u32 %v2848, 16
        %v3214 = vrot.slane %v3212, 4
        %v3215 = vshll.u32 %v2848, 16
        %v3217 = vrot.slane %v3215, 5
        %v3218 = vor.u32 %v3214, %v3217
        %v3219 = vrot.slane %v3218, 4
        %v3221 = vshll.u32 %v2849, 16
        %v3223 = vrot.slane %v3221, 5
        %v3224 = vsel %vm955, %v3219, %v3223
        %v3225 = vshrl.u32 %v2849, 16
        %v3227 = vrot.slane %v3225, 4
        %v3228 = vor.u32 %v3227, %v3223
        %v3229 = vrot.slane %v3228, 4
        %v3231 = vshll.u32 %v2850, 16
        %v3233 = vrot.slane %v3231, 5
        %v3234 = vsel %vm955, %v3229, %v3233
        %v3235 = vld [vmem:[#allocation6 + $0x100] sm:$0xf]
        %v3236 = vld [vmem:[#allocation6 + $0x104] sm:$0xf]
        %v3237 = vld [vmem:[#allocation6 + $0x108] sm:$0xf]
        %v3238 = vld [vmem:[#allocation6 + $0x10c] sm:$0xf]
        %v3239 = vld [vmem:[#allocation6 + $0x110] sm:$0xf]
        %v3240 = vld [vmem:[#allocation6 + $0x114] sm:$0xf]
        %v3241 = vld [vmem:[#allocation6 + $0x118] sm:$0xf]
        %v3242 = vld [vmem:[#allocation6 + $0x11c] sm:$0xf]
        %v3243 = vld [vmem:[#allocation6 + $0x120] sm:$0xf]
        %v3244 = vld [vmem:[#allocation6 + $0x124] sm:$0xf]
        %v3245 = vld [vmem:[#allocation6 + $0x128] sm:$0xf]
        %v3246 = vld [vmem:[#allocation6 + $0x12c] sm:$0xf]
        %v3247 = vld [vmem:[#allocation6 + $0x130] sm:$0xf]
        %v3248 = vld [vmem:[#allocation6 + $0x134] sm:$0xf]
        %v3249 = vld [vmem:[#allocation6 + $0x138] sm:$0xf]
        %v3250 = vld [vmem:[#allocation6 + $0x13c] sm:$0xf]
        %v3251 = vunpack.c.l.b16 %v2864
        %v3252 = vunpack.c.l.b16 %v2874
        %v3253 = vunpack.c.l.b16 %v2888
        %v3254 = vunpack.c.l.b16 %v2898
        %v3255 = vunpack.c.l.b16 %v2912
        %v3256 = vunpack.c.l.b16 %v2922
        %v3257 = vunpack.c.l.b16 %v2936
        %v3258 = vunpack.c.l.b16 %v2946
        %v3259 = vunpack.c.l.b16 %v2960
        %v3260 = vunpack.c.l.b16 %v2970
        %v3261 = vunpack.c.l.b16 %v2984
        %v3262 = vunpack.c.l.b16 %v2994
        %v3263 = vunpack.c.l.b16 %v3008
        %v3264 = vunpack.c.l.b16 %v3018
        %v3265 = vunpack.c.l.b16 %v3032
        %v3266 = vunpack.c.l.b16 %v3042
        %v3267 = vunpack.c.l.b16 %v3056
        %v3268 = vunpack.c.l.b16 %v3066
        %v3269 = vunpack.c.l.b16 %v3080
        %v3270 = vunpack.c.l.b16 %v3090
        %v3271 = vunpack.c.l.b16 %v3104
        %v3272 = vunpack.c.l.b16 %v3114
        %v3273 = vunpack.c.l.b16 %v3128
        %v3274 = vunpack.c.l.b16 %v3138
        %v3275 = vunpack.c.l.b16 %v3152
        %v3276 = vunpack.c.l.b16 %v3162
        %v3277 = vunpack.c.l.b16 %v3176
        %v3278 = vunpack.c.l.b16 %v3186
        %v3279 = vunpack.c.l.b16 %v3200
        %v3280 = vunpack.c.l.b16 %v3210
        %v3281 = vunpack.c.l.b16 %v3224
        %v3282 = vunpack.c.l.b16 %v3234
        %v3283 = vpack.c.b16 %v3252, %v3251
        %v3284 = vpack.c.b16 %v3254, %v3253
        %v3285 = vpack.c.b16 %v3256, %v3255
        %v3286 = vpack.c.b16 %v3258, %v3257
        %v3287 = vpack.c.b16 %v3260, %v3259
        %v3288 = vpack.c.b16 %v3262, %v3261
        %v3289 = vpack.c.b16 %v3264, %v3263
        %v3290 = vpack.c.b16 %v3266, %v3265
        %v3291 = vpack.c.b16 %v3268, %v3267
        %v3292 = vpack.c.b16 %v3270, %v3269
        %v3293 = vpack.c.b16 %v3272, %v3271
        %v3294 = vpack.c.b16 %v3274, %v3273
        %v3295 = vpack.c.b16 %v3276, %v3275
        %v3296 = vpack.c.b16 %v3278, %v3277
        %v3297 = vpack.c.b16 %v3280, %v3279
        %v3298 = vpack.c.b16 %v3282, %v3281
        %v3331 = vunpack.c.l.b16 %v3235
        %v3332 = vunpack.c.l.b16 %v3236
        %v3333 = vunpack.c.l.b16 %v3237
        %v3334 = vunpack.c.l.b16 %v3238
        %v3335 = vunpack.c.l.b16 %v3239
        %v3336 = vunpack.c.l.b16 %v3240
        %v3337 = vunpack.c.l.b16 %v3241
        %v3338 = vunpack.c.l.b16 %v3242
        %v3339 = vunpack.c.l.b16 %v3243
        %v3340 = vunpack.c.l.b16 %v3244
        %v3341 = vunpack.c.l.b16 %v3245
        %v3342 = vunpack.c.l.b16 %v3246
        %v3343 = vunpack.c.l.b16 %v3247
        %v3344 = vunpack.c.l.b16 %v3248
        %v3345 = vunpack.c.l.b16 %v3249
        %v3346 = vunpack.c.l.b16 %v3250
        %v3347 = vpack.c.b16 %v3332, %v3331
        %v3348 = vpack.c.b16 %v3334, %v3333
        %v3349 = vpack.c.b16 %v3336, %v3335
        %v3350 = vpack.c.b16 %v3338, %v3337
        %v3351 = vpack.c.b16 %v3340, %v3339
        %v3352 = vpack.c.b16 %v3342, %v3341
        %v3353 = vpack.c.b16 %v3344, %v3343
        %v3354 = vpack.c.b16 %v3346, %v3345
        %3363 = vmatprep.subr.bf16.mxu0 0
        %3364 = vmatpush1.bf16.msra.mxu0 %v3347
        %3365 = vmatprep.subr.bf16.mxu0 0
        %3366 = vmatpush1.bf16.msra.mxu0 %v3348
        %3367 = vmatprep.subr.bf16.mxu0 0
        %3368 = vmatpush1.bf16.msra.mxu0 %v3349
        %3369 = vmatprep.subr.bf16.mxu0 0
        %3370 = vmatpush1.bf16.msra.mxu0 %v3350
        %3371 = vmatprep.subr.bf16.mxu0 0
        %3372 = vmatpush1.bf16.msra.mxu0 %v3351
        %3373 = vmatprep.subr.bf16.mxu0 0
        %3374 = vmatpush1.bf16.msra.mxu0 %v3352
        %3375 = vmatprep.subr.bf16.mxu0 0
        %3376 = vmatpush1.bf16.msra.mxu0 %v3353
        %3377 = vmatprep.subr.bf16.mxu0 0
        %3378 = vmatpush1.bf16.msra.mxu0 %v3354
        %3379 = vmatprep.subr.bf16.mxu0 0
        %3380 = vmatpush1.bf16.msra.mxu0 0
        %3381 = vmatprep.subr.bf16.mxu0 0
        %3382 = vmatpush1.bf16.msra.mxu0 0
        %3383 = vmatprep.subr.bf16.mxu0 0
        %3384 = vmatpush1.bf16.msra.mxu0 0
        %3385 = vmatprep.subr.bf16.mxu0 0
        %3386 = vmatpush1.bf16.msra.mxu0 0
        %3387 = vmatprep.subr.bf16.mxu0 0
        %3388 = vmatpush1.bf16.msra.mxu0 0
        %3389 = vmatprep.subr.bf16.mxu0 0
        %3390 = vmatpush1.bf16.msra.mxu0 0
        %3391 = vmatprep.subr.bf16.mxu0 0
        %3392 = vmatpush1.bf16.msra.mxu0 0
        %3393 = vmatprep.subr.bf16.mxu0 0
        %3394 = vmatpush1.bf16.msra.mxu0 0
        %3395 = vmatprep.mubr.bf16.mxu0 0
        %3396 = vmatmul.mubr.bf16.gmra.mrb[0].mxu0 %v3283
        %v3397 = vpop.f32.mrb[0].mxu0
        %v3398 = vadd.f32 0.0, %v3397
        %v3399 = vpop.f32.mrb[0].mxu0
        %v3400 = vpop.f32.mrb[0].mxu0
        %v3401 = vadd.f32 0.0, %v3400
        %v3402 = vpop.f32.mrb[0].mxu0
        %3403 = vmatprep.mubr.bf16.mxu0 0
        %3404 = vmatmul.mubr.bf16.gmra.mrb[0].mxu0 %v3284
        %v3405 = vpop.f32.mrb[0].mxu0
        %v3406 = vadd.f32 0.0, %v3405
        %v3407 = vpop.f32.mrb[0].mxu0
        %v3408 = vpop.f32.mrb[0].mxu0
        %v3409 = vadd.f32 0.0, %v3408
        %v3410 = vpop.f32.mrb[0].mxu0
        %3411 = vmatprep.mubr.bf16.mxu0 0
        %3412 = vmatmul.mubr.bf16.gmra.mrb[0].mxu0 %v3285
        %v3413 = vpop.f32.mrb[0].mxu0
        %v3414 = vadd.f32 0.0, %v3413
        %v3415 = vpop.f32.mrb[0].mxu0
        %v3416 = vpop.f32.mrb[0].mxu0
        %v3417 = vadd.f32 0.0, %v3416
        %v3418 = vpop.f32.mrb[0].mxu0
        %3419 = vmatprep.mubr.bf16.mxu0 0
        %3420 = vmatmul.mubr.bf16.gmra.mrb[0].mxu0 %v3286
        %v3421 = vpop.f32.mrb[0].mxu0
        %v3422 = vadd.f32 0.0, %v3421
        %v3423 = vpop.f32.mrb[0].mxu0
        %v3424 = vpop.f32.mrb[0].mxu0
        %v3425 = vadd.f32 0.0, %v3424
        %v3426 = vpop.f32.mrb[0].mxu0
        %3427 = vmatprep.mubr.bf16.mxu0 0
        %3428 = vmatmul.mubr.bf16.gmra.mrb[0].mxu0 %v3287
        %v3429 = vpop.f32.mrb[0].mxu0
        %v3430 = vadd.f32 0.0, %v3429
        %v3431 = vpop.f32.mrb[0].mxu0
        %v3432 = vpop.f32.mrb[0].mxu0
        %v3433 = vadd.f32 0.0, %v3432
        %v3434 = vpop.f32.mrb[0].mxu0
        %3435 = vmatprep.mubr.bf16.mxu0 0
        %3436 = vmatmul.mubr.bf16.gmra.mrb[0].mxu0 %v3288
        %v3437 = vpop.f32.mrb[0].mxu0
        %v3438 = vadd.f32 0.0, %v3437
        %v3439 = vpop.f32.mrb[0].mxu0
        %v3440 = vpop.f32.mrb[0].mxu0
        %v3441 = vadd.f32 0.0, %v3440
        %v3442 = vpop.f32.mrb[0].mxu0
        %3443 = vmatprep.mubr.bf16.mxu0 0
        %3444 = vmatmul.mubr.bf16.gmra.mrb[0].mxu0 %v3289
        %v3445 = vpop.f32.mrb[0].mxu0
        %v3446 = vadd.f32 0.0, %v3445
        %v3447 = vpop.f32.mrb[0].mxu0
        %v3448 = vpop.f32.mrb[0].mxu0
        %v3449 = vadd.f32 0.0, %v3448
        %v3450 = vpop.f32.mrb[0].mxu0
        %3451 = vmatprep.mubr.bf16.mxu0 0
        %3452 = vmatmul.mubr.bf16.gmra.mrb[0].mxu0 %v3290
        %v3453 = vpop.f32.mrb[0].mxu0
        %v3454 = vadd.f32 0.0, %v3453
        %v3455 = vpop.f32.mrb[0].mxu0
        %v3456 = vpop.f32.mrb[0].mxu0
        %v3457 = vadd.f32 0.0, %v3456
        %v3458 = vpop.f32.mrb[0].mxu0
        %3459 = vmatprep.mubr.bf16.mxu0 0
        %3460 = vmatmul.mubr.bf16.gmra.mrb[0].mxu0 %v3291
        %v3461 = vpop.f32.mrb[0].mxu0
        %v3462 = vadd.f32 0.0, %v3461
        %v3463 = vpop.f32.mrb[0].mxu0
        %v3464 = vpop.f32.mrb[0].mxu0
        %v3465 = vadd.f32 0.0, %v3464
        %v3466 = vpop.f32.mrb[0].mxu0
        %3467 = vmatprep.mubr.bf16.mxu0 0
        %3468 = vmatmul.mubr.bf16.gmra.mrb[0].mxu0 %v3292
        %v3469 = vpop.f32.mrb[0].mxu0
        %v3470 = vadd.f32 0.0, %v3469
        %v3471 = vpop.f32.mrb[0].mxu0
        %v3472 = vpop.f32.mrb[0].mxu0
        %v3473 = vadd.f32 0.0, %v3472
        %v3474 = vpop.f32.mrb[0].mxu0
        %3475 = vmatprep.mubr.bf16.mxu0 0
        %3476 = vmatmul.mubr.bf16.gmra.mrb[0].mxu0 %v3293
        %v3477 = vpop.f32.mrb[0].mxu0
        %v3478 = vadd.f32 0.0, %v3477
        %v3479 = vpop.f32.mrb[0].mxu0
        %v3480 = vpop.f32.mrb[0].mxu0
        %v3481 = vadd.f32 0.0, %v3480
        %v3482 = vpop.f32.mrb[0].mxu0
        %3483 = vmatprep.mubr.bf16.mxu0 0
        %3484 = vmatmul.mubr.bf16.gmra.mrb[0].mxu0 %v3294
        %v3485 = vpop.f32.mrb[0].mxu0
        %v3486 = vadd.f32 0.0, %v3485
        %v3487 = vpop.f32.mrb[0].mxu0
        %v3488 = vpop.f32.mrb[0].mxu0
        %v3489 = vadd.f32 0.0, %v3488
        %v3490 = vpop.f32.mrb[0].mxu0
        %3491 = vmatprep.mubr.bf16.mxu0 0
        %3492 = vmatmul.mubr.bf16.gmra.mrb[0].mxu0 %v3295
        %v3493 = vpop.f32.mrb[0].mxu0
        %v3494 = vadd.f32 0.0, %v3493
        %v3495 = vpop.f32.mrb[0].mxu0
        %v3496 = vpop.f32.mrb[0].mxu0
        %v3497 = vadd.f32 0.0, %v3496
        %v3498 = vpop.f32.mrb[0].mxu0
        %3499 = vmatprep.mubr.bf16.mxu0 0
        %3500 = vmatmul.mubr.bf16.gmra.mrb[0].mxu0 %v3296
        %v3501 = vpop.f32.mrb[0].mxu0
        %v3502 = vadd.f32 0.0, %v3501
        %v3503 = vpop.f32.mrb[0].mxu0
        %v3504 = vpop.f32.mrb[0].mxu0
        %v3505 = vadd.f32 0.0, %v3504
        %v3506 = vpop.f32.mrb[0].mxu0
        %3507 = vmatprep.mubr.bf16.mxu0 0
        %3508 = vmatmul.mubr.bf16.gmra.mrb[0].mxu0 %v3297
        %v3509 = vpop.f32.mrb[0].mxu0
        %v3510 = vadd.f32 0.0, %v3509
        %v3511 = vpop.f32.mrb[0].mxu0
        %v3512 = vpop.f32.mrb[0].mxu0
        %v3513 = vadd.f32 0.0, %v3512
        %v3514 = vpop.f32.mrb[0].mxu0
        %3515 = vmatprep.mubr.bf16.mxu0 0
        %3516 = vmatmul.mubr.bf16.gmra.mrb[0].mxu0 %v3298
        %v3517 = vpop.f32.mrb[0].mxu0
        %v3518 = vadd.f32 0.0, %v3517
        %v3519 = vpop.f32.mrb[0].mxu0
        %v3520 = vpop.f32.mrb[0].mxu0
        %v3521 = vadd.f32 0.0, %v3520
        %v3522 = vpop.f32.mrb[0].mxu0
        %3523 = vdwg.mxu0
        %v3524 = vadd.f32 %v2771, %v3398
        %v3525 = vadd.f32 %v2772, %v3401
        %v3526 = vadd.f32 %v2773, %v3406
        %v3527 = vadd.f32 %v2774, %v3409
        %v3528 = vadd.f32 %v2775, %v3414
        %v3529 = vadd.f32 %v2776, %v3417
        %v3530 = vadd.f32 %v2777, %v3422
        %v3531 = vadd.f32 %v2778, %v3425
        %v3532 = vadd.f32 %v2779, %v3430
        %v3533 = vadd.f32 %v2780, %v3433
        %v3534 = vadd.f32 %v2781, %v3438
        %v3535 = vadd.f32 %v2782, %v3441
        %v3536 = vadd.f32 %v2783, %v3446
        %v3537 = vadd.f32 %v2784, %v3449
        %v3538 = vadd.f32 %v2785, %v3454
        %v3539 = vadd.f32 %v2786, %v3457
        %v3540 = vadd.f32 %v2787, %v3462
        %v3541 = vadd.f32 %v2788, %v3465
        %v3542 = vadd.f32 %v2789, %v3470
        %v3543 = vadd.f32 %v2790, %v3473
        %v3544 = vadd.f32 %v2791, %v3478
        %v3545 = vadd.f32 %v2792, %v3481
        %v3546 = vadd.f32 %v2793, %v3486
        %v3547 = vadd.f32 %v2794, %v3489
        %v3548 = vadd.f32 %v2795, %v3494
        %v3549 = vadd.f32 %v2796, %v3497
        %v3550 = vadd.f32 %v2797, %v3502
        %v3551 = vadd.f32 %v2798, %v3505
        %v3552 = vadd.f32 %v2799, %v3510
        %v3553 = vadd.f32 %v2800, %v3513
        %v3554 = vadd.f32 %v2801, %v3518
        %v3555 = vadd.f32 %v2802, %v3521
        %v3556 = vld [vmem:[%s255] sm:$0xe]
        %v3557 = vld [vmem:[%s255 + $0xc] sm:$0xe]
        %v3558 = vld [vmem:[%s255 + $0x18] sm:$0xe]
        %v3559 = vld [vmem:[%s255 + $0x24] sm:$0xe]
        %v3560 = vld [vmem:[%s255 + $0x30] sm:$0xe]
        %v3561 = vld [vmem:[%s255 + $0x3c] sm:$0xe]
        %v3562 = vld [vmem:[%s255 + $0x48] sm:$0xe]
        %v3563 = vld [vmem:[%s255 + $0x54] sm:$0xe]
        %v3564 = vld [vmem:[%s255 + $0x60] sm:$0xe]
        %v3565 = vld [vmem:[%s255 + $0x6c] sm:$0xe]
        %v3566 = vld [vmem:[%s255 + $0x78] sm:$0xe]
        %v3567 = vld [vmem:[%s255 + $0x84] sm:$0xe]
        %v3568 = vld [vmem:[%s255 + $0x90] sm:$0xe]
        %v3569 = vld [vmem:[%s255 + $0x9c] sm:$0xe]
        %v3570 = vld [vmem:[%s255 + $0xa8] sm:$0xe]
        %v3571 = vld [vmem:[%s255 + $0xb4] sm:$0xe]
        %v3620 = vrot.slane %v3556, 5
        %v3621 = vrot.slane %v3620, 4
        %v3622 = vrot.slane %v2804, 5
        %v3623 = vsel %vm1984, %v3621, %v3622
        %v3624 = vrot.slane %v3622, 4
        %v3625 = vrot.slane %v2805, 5
        %v3626 = vsel %vm1984, %v3624, %v3625
        %v3627 = vrot.slane %v3557, 5
        %v3628 = vrot.slane %v3627, 4
        %v3629 = vrot.slane %v2807, 5
        %v3630 = vsel %vm1984, %v3628, %v3629
        %v3631 = vrot.slane %v3629, 4
        %v3632 = vrot.slane %v2808, 5
        %v3633 = vsel %vm1984, %v3631, %v3632
        %v3634 = vrot.slane %v3558, 5
        %v3635 = vrot.slane %v3634, 4
        %v3636 = vrot.slane %v2810, 5
        %v3637 = vsel %vm1984, %v3635, %v3636
        %v3638 = vrot.slane %v3636, 4
        %v3639 = vrot.slane %v2811, 5
        %v3640 = vsel %vm1984, %v3638, %v3639
        %v3641 = vrot.slane %v3559, 5
        %v3642 = vrot.slane %v3641, 4
        %v3643 = vrot.slane %v2813, 5
        %v3644 = vsel %vm1984, %v3642, %v3643
        %v3645 = vrot.slane %v3643, 4
        %v3646 = vrot.slane %v2814, 5
        %v3647 = vsel %vm1984, %v3645, %v3646
        %v3648 = vrot.slane %v3560, 5
        %v3649 = vrot.slane %v3648, 4
        %v3650 = vrot.slane %v2816, 5
        %v3651 = vsel %vm1984, %v3649, %v3650
        %v3652 = vrot.slane %v3650, 4
        %v3653 = vrot.slane %v2817, 5
        %v3654 = vsel %vm1984, %v3652, %v3653
        %v3655 = vrot.slane %v3561, 5
        %v3656 = vrot.slane %v3655, 4
        %v3657 = vrot.slane %v2819, 5
        %v3658 = vsel %vm1984, %v3656, %v3657
        %v3659 = vrot.slane %v3657, 4
        %v3660 = vrot.slane %v2820, 5
        %v3661 = vsel %vm1984, %v3659, %v3660
        %v3662 = vrot.slane %v3562, 5
        %v3663 = vrot.slane %v3662, 4
        %v3664 = vrot.slane %v2822, 5
        %v3665 = vsel %vm1984, %v3663, %v3664
        %v3666 = vrot.slane %v3664, 4
        %v3667 = vrot.slane %v2823, 5
        %v3668 = vsel %vm1984, %v3666, %v3667
        %v3669 = vrot.slane %v3563, 5
        %v3670 = vrot.slane %v3669, 4
        %v3671 = vrot.slane %v2825, 5
        %v3672 = vsel %vm1984, %v3670, %v3671
        %v3673 = vrot.slane %v3671, 4
        %v3674 = vrot.slane %v2826, 5
        %v3675 = vsel %vm1984, %v3673, %v3674
        %v3676 = vrot.slane %v3564, 5
        %v3677 = vrot.slane %v3676, 4
        %v3678 = vrot.slane %v2828, 5
        %v3679 = vsel %vm1984, %v3677, %v3678
        %v3680 = vrot.slane %v3678, 4
        %v3681 = vrot.slane %v2829, 5
        %v3682 = vsel %vm1984, %v3680, %v3681
        %v3683 = vrot.slane %v3565, 5
        %v3684 = vrot.slane %v3683, 4
        %v3685 = vrot.slane %v2831, 5
        %v3686 = vsel %vm1984, %v3684, %v3685
        %v3687 = vrot.slane %v3685, 4
        %v3688 = vrot.slane %v2832, 5
        %v3689 = vsel %vm1984, %v3687, %v3688
        %v3690 = vrot.slane %v3566, 5
        %v3691 = vrot.slane %v3690, 4
        %v3692 = vrot.slane %v2834, 5
        %v3693 = vsel %vm1984, %v3691, %v3692
        %v3694 = vrot.slane %v3692, 4
        %v3695 = vrot.slane %v2835, 5
        %v3696 = vsel %vm1984, %v3694, %v3695
        %v3697 = vrot.slane %v3567, 5
        %v3698 = vrot.slane %v3697, 4
        %v3699 = vrot.slane %v2837, 5
        %v3700 = vsel %vm1984, %v3698, %v3699
        %v3701 = vrot.slane %v3699, 4
        %v3702 = vrot.slane %v2838, 5
        %v3703 = vsel %vm1984, %v3701, %v3702
        %v3704 = vrot.slane %v3568, 5
        %v3705 = vrot.slane %v3704, 4
        %v3706 = vrot.slane %v2840, 5
        %v3707 = vsel %vm1984, %v3705, %v3706
        %v3708 = vrot.slane %v3706, 4
        %v3709 = vrot.slane %v2841, 5
        %v3710 = vsel %vm1984, %v3708, %v3709
        %v3711 = vrot.slane %v3569, 5
        %v3712 = vrot.slane %v3711, 4
        %v3713 = vrot.slane %v2843, 5
        %v3714 = vsel %vm1984, %v3712, %v3713
        %v3715 = vrot.slane %v3713, 4
        %v3716 = vrot.slane %v2844, 5
        %v3717 = vsel %vm1984, %v3715, %v3716
        %v3718 = vrot.slane %v3570, 5
        %v3719 = vrot.slane %v3718, 4
        %v3720 = vrot.slane %v2846, 5
        %v3721 = vsel %vm1984, %v3719, %v3720
        %v3722 = vrot.slane %v3720, 4
        %v3723 = vrot.slane %v2847, 5
        %v3724 = vsel %vm1984, %v3722, %v3723
        %v3725 = vrot.slane %v3571, 5
        %v3726 = vrot.slane %v3725, 4
        %v3727 = vrot.slane %v2849, 5
        %v3728 = vsel %vm1984, %v3726, %v3727
        %v3729 = vrot.slane %v3727, 4
        %v3730 = vrot.slane %v2850, 5
        %v3731 = vsel %vm1984, %v3729, %v3730
        %v3732 = vld [vmem:[#allocation6 + $0x140] sm:$0xf]
        %v3733 = vld [vmem:[#allocation6 + $0x144] sm:$0xf]
        %v3734 = vld [vmem:[#allocation6 + $0x148] sm:$0xf]
        %v3735 = vld [vmem:[#allocation6 + $0x14c] sm:$0xf]
        %v3736 = vld [vmem:[#allocation6 + $0x150] sm:$0xf]
        %v3737 = vld [vmem:[#allocation6 + $0x154] sm:$0xf]
        %v3738 = vld [vmem:[#allocation6 + $0x158] sm:$0xf]
        %v3739 = vld [vmem:[#allocation6 + $0x15c] sm:$0xf]
        %v3740 = vld [vmem:[#allocation6 + $0x160] sm:$0xf]
        %v3741 = vld [vmem:[#allocation6 + $0x164] sm:$0xf]
        %v3742 = vld [vmem:[#allocation6 + $0x168] sm:$0xf]
        %v3743 = vld [vmem:[#allocation6 + $0x16c] sm:$0xf]
        %v3744 = vld [vmem:[#allocation6 + $0x170] sm:$0xf]
        %v3745 = vld [vmem:[#allocation6 + $0x174] sm:$0xf]
        %v3746 = vld [vmem:[#allocation6 + $0x178] sm:$0xf]
        %v3747 = vld [vmem:[#allocation6 + $0x17c] sm:$0xf]
        %v3748 = vunpack.c.l.b16 %v3623
        %v3749 = vunpack.c.l.b16 %v3626
        %v3750 = vunpack.c.l.b16 %v3630
        %v3751 = vunpack.c.l.b16 %v3633
        %v3752 = vunpack.c.l.b16 %v3637
        %v3753 = vunpack.c.l.b16 %v3640
        %v3754 = vunpack.c.l.b16 %v3644
        %v3755 = vunpack.c.l.b16 %v3647
        %v3756 = vunpack.c.l.b16 %v3651
        %v3757 = vunpack.c.l.b16 %v3654
        %v3758 = vunpack.c.l.b16 %v3658
        %v3759 = vunpack.c.l.b16 %v3661
        %v3760 = vunpack.c.l.b16 %v3665
        %v3761 = vunpack.c.l.b16 %v3668
        %v3762 = vunpack.c.l.b16 %v3672
        %v3763 = vunpack.c.l.b16 %v3675
        %v3764 = vunpack.c.l.b16 %v3679
        %v3765 = vunpack.c.l.b16 %v3682
        %v3766 = vunpack.c.l.b16 %v3686
        %v3767 = vunpack.c.l.b16 %v3689
        %v3768 = vunpack.c.l.b16 %v3693
        %v3769 = vunpack.c.l.b16 %v3696
        %v3770 = vunpack.c.l.b16 %v3700
        %v3771 = vunpack.c.l.b16 %v3703
        %v3772 = vunpack.c.l.b16 %v3707
        %v3773 = vunpack.c.l.b16 %v3710
        %v3774 = vunpack.c.l.b16 %v3714
        %v3775 = vunpack.c.l.b16 %v3717
        %v3776 = vunpack.c.l.b16 %v3721
        %v3777 = vunpack.c.l.b16 %v3724
        %v3778 = vunpack.c.l.b16 %v3728
        %v3779 = vunpack.c.l.b16 %v3731
        %v3780 = vpack.c.b16 %v3749, %v3748
        %v3781 = vpack.c.b16 %v3751, %v3750
        %v3782 = vpack.c.b16 %v3753, %v3752
        %v3783 = vpack.c.b16 %v3755, %v3754
        %v3784 = vpack.c.b16 %v3757, %v3756
        %v3785 = vpack.c.b16 %v3759, %v3758
        %v3786 = vpack.c.b16 %v3761, %v3760
        %v3787 = vpack.c.b16 %v3763, %v3762
        %v3788 = vpack.c.b16 %v3765, %v3764
        %v3789 = vpack.c.b16 %v3767, %v3766
        %v3790 = vpack.c.b16 %v3769, %v3768
        %v3791 = vpack.c.b16 %v3771, %v3770
        %v3792 = vpack.c.b16 %v3773, %v3772
        %v3793 = vpack.c.b16 %v3775, %v3774
        %v3794 = vpack.c.b16 %v3777, %v3776
        %v3795 = vpack.c.b16 %v3779, %v3778
        %v3828 = vunpack.c.l.b16 %v3732
        %v3829 = vunpack.c.l.b16 %v3733
        %v3830 = vunpack.c.l.b16 %v3734
        %v3831 = vunpack.c.l.b16 %v3735
        %v3832 = vunpack.c.l.b16 %v3736
        %v3833 = vunpack.c.l.b16 %v3737
        %v3834 = vunpack.c.l.b16 %v3738
        %v3835 = vunpack.c.l.b16 %v3739
        %v3836 = vunpack.c.l.b16 %v3740
        %v3837 = vunpack.c.l.b16 %v3741
        %v3838 = vunpack.c.l.b16 %v3742
        %v3839 = vunpack.c.l.b16 %v3743
        %v3840 = vunpack.c.l.b16 %v3744
        %v3841 = vunpack.c.l.b16 %v3745
        %v3842 = vunpack.c.l.b16 %v3746
        %v3843 = vunpack.c.l.b16 %v3747
        %v3844 = vpack.c.b16 %v3829, %v3828
        %v3845 = vpack.c.b16 %v3831, %v3830
        %v3846 = vpack.c.b16 %v3833, %v3832
        %v3847 = vpack.c.b16 %v3835, %v3834
        %v3848 = vpack.c.b16 %v3837, %v3836
        %v3849 = vpack.c.b16 %v3839, %v3838
        %v3850 = vpack.c.b16 %v3841, %v3840
        %v3851 = vpack.c.b16 %v3843, %v3842
        %3860 = vmatprep.subr.bf16.mxu0 0
        %3861 = vmatpush1.bf16.msra.mxu0 %v3844
        %3862 = vmatprep.subr.bf16.mxu0 0
        %3863 = vmatpush1.bf16.msra.mxu0 %v3845
        %3864 = vmatprep.subr.bf16.mxu0 0
        %3865 = vmatpush1.bf16.msra.mxu0 %v3846
        %3866 = vmatprep.subr.bf16.mxu0 0
        %3867 = vmatpush1.bf16.msra.mxu0 %v3847
        %3868 = vmatprep.subr.bf16.mxu0 0
        %3869 = vmatpush1.bf16.msra.mxu0 %v3848
        %3870 = vmatprep.subr.bf16.mxu0 0
        %3871 = vmatpush1.bf16.msra.mxu0 %v3849
        %3872 = vmatprep.subr.bf16.mxu0 0
        %3873 = vmatpush1.bf16.msra.mxu0 %v3850
        %3874 = vmatprep.subr.bf16.mxu0 0
        %3875 = vmatpush1.bf16.msra.mxu0 %v3851
        %3876 = vmatprep.subr.bf16.mxu0 0
        %3877 = vmatpush1.bf16.msra.mxu0 0
        %3878 = vmatprep.subr.bf16.mxu0 0
        %3879 = vmatpush1.bf16.msra.mxu0 0
        %3880 = vmatprep.subr.bf16.mxu0 0
        %3881 = vmatpush1.bf16.msra.mxu0 0
        %3882 = vmatprep.subr.bf16.mxu0 0
        %3883 = vmatpush1.bf16.msra.mxu0 0
        %3884 = vmatprep.subr.bf16.mxu0 0
        %3885 = vmatpush1.bf16.msra.mxu0 0
        %3886 = vmatprep.subr.bf16.mxu0 0
        %3887 = vmatpush1.bf16.msra.mxu0 0
        %3888 = vmatprep.subr.bf16.mxu0 0
        %3889 = vmatpush1.bf16.msra.mxu0 0
        %3890 = vmatprep.subr.bf16.mxu0 0
        %3891 = vmatpush1.bf16.msra.mxu0 0
        %3892 = vmatprep.mubr.bf16.mxu0 0
        %3893 = vmatmul.mubr.bf16.gmra.mrb[0].mxu0 %v3780
        %v3894 = vpop.f32.mrb[0].mxu0
        %v3895 = vadd.f32 0.0, %v3894
        %v3896 = vpop.f32.mrb[0].mxu0
        %v3897 = vpop.f32.mrb[0].mxu0
        %v3898 = vadd.f32 0.0, %v3897
        %v3899 = vpop.f32.mrb[0].mxu0
        %3900 = vmatprep.mubr.bf16.mxu0 0
        %3901 = vmatmul.mubr.bf16.gmra.mrb[0].mxu0 %v3781
        %v3902 = vpop.f32.mrb[0].mxu0
        %v3903 = vadd.f32 0.0, %v3902
        %v3904 = vpop.f32.mrb[0].mxu0
        %v3905 = vpop.f32.mrb[0].mxu0
        %v3906 = vadd.f32 0.0, %v3905
        %v3907 = vpop.f32.mrb[0].mxu0
        %3908 = vmatprep.mubr.bf16.mxu0 0
        %3909 = vmatmul.mubr.bf16.gmra.mrb[0].mxu0 %v3782
        %v3910 = vpop.f32.mrb[0].mxu0
        %v3911 = vadd.f32 0.0, %v3910
        %v3912 = vpop.f32.mrb[0].mxu0
        %v3913 = vpop.f32.mrb[0].mxu0
        %v3914 = vadd.f32 0.0, %v3913
        %v3915 = vpop.f32.mrb[0].mxu0
        %3916 = vmatprep.mubr.bf16.mxu0 0
        %3917 = vmatmul.mubr.bf16.gmra.mrb[0].mxu0 %v3783
        %v3918 = vpop.f32.mrb[0].mxu0
        %v3919 = vadd.f32 0.0, %v3918
        %v3920 = vpop.f32.mrb[0].mxu0
        %v3921 = vpop.f32.mrb[0].mxu0
        %v3922 = vadd.f32 0.0, %v3921
        %v3923 = vpop.f32.mrb[0].mxu0
        %3924 = vmatprep.mubr.bf16.mxu0 0
        %3925 = vmatmul.mubr.bf16.gmra.mrb[0].mxu0 %v3784
        %v3926 = vpop.f32.mrb[0].mxu0
        %v3927 = vadd.f32 0.0, %v3926
        %v3928 = vpop.f32.mrb[0].mxu0
        %v3929 = vpop.f32.mrb[0].mxu0
        %v3930 = vadd.f32 0.0, %v3929
        %v3931 = vpop.f32.mrb[0].mxu0
        %3932 = vmatprep.mubr.bf16.mxu0 0
        %3933 = vmatmul.mubr.bf16.gmra.mrb[0].mxu0 %v3785
        %v3934 = vpop.f32.mrb[0].mxu0
        %v3935 = vadd.f32 0.0, %v3934
        %v3936 = vpop.f32.mrb[0].mxu0
        %v3937 = vpop.f32.mrb[0].mxu0
        %v3938 = vadd.f32 0.0, %v3937
        %v3939 = vpop.f32.mrb[0].mxu0
        %3940 = vmatprep.mubr.bf16.mxu0 0
        %3941 = vmatmul.mubr.bf16.gmra.mrb[0].mxu0 %v3786
        %v3942 = vpop.f32.mrb[0].mxu0
        %v3943 = vadd.f32 0.0, %v3942
        %v3944 = vpop.f32.mrb[0].mxu0
        %v3945 = vpop.f32.mrb[0].mxu0
        %v3946 = vadd.f32 0.0, %v3945
        %v3947 = vpop.f32.mrb[0].mxu0
        %3948 = vmatprep.mubr.bf16.mxu0 0
        %3949 = vmatmul.mubr.bf16.gmra.mrb[0].mxu0 %v3787
        %v3950 = vpop.f32.mrb[0].mxu0
        %v3951 = vadd.f32 0.0, %v3950
        %v3952 = vpop.f32.mrb[0].mxu0
        %v3953 = vpop.f32.mrb[0].mxu0
        %v3954 = vadd.f32 0.0, %v3953
        %v3955 = vpop.f32.mrb[0].mxu0
        %3956 = vmatprep.mubr.bf16.mxu0 0
        %3957 = vmatmul.mubr.bf16.gmra.mrb[0].mxu0 %v3788
        %v3958 = vpop.f32.mrb[0].mxu0
        %v3959 = vadd.f32 0.0, %v3958
        %v3960 = vpop.f32.mrb[0].mxu0
        %v3961 = vpop.f32.mrb[0].mxu0
        %v3962 = vadd.f32 0.0, %v3961
        %v3963 = vpop.f32.mrb[0].mxu0
        %3964 = vmatprep.mubr.bf16.mxu0 0
        %3965 = vmatmul.mubr.bf16.gmra.mrb[0].mxu0 %v3789
        %v3966 = vpop.f32.mrb[0].mxu0
        %v3967 = vadd.f32 0.0, %v3966
        %v3968 = vpop.f32.mrb[0].mxu0
        %v3969 = vpop.f32.mrb[0].mxu0
        %v3970 = vadd.f32 0.0, %v3969
        %v3971 = vpop.f32.mrb[0].mxu0
        %3972 = vmatprep.mubr.bf16.mxu0 0
        %3973 = vmatmul.mubr.bf16.gmra.mrb[0].mxu0 %v3790
        %v3974 = vpop.f32.mrb[0].mxu0
        %v3975 = vadd.f32 0.0, %v3974
        %v3976 = vpop.f32.mrb[0].mxu0
        %v3977 = vpop.f32.mrb[0].mxu0
        %v3978 = vadd.f32 0.0, %v3977
        %v3979 = vpop.f32.mrb[0].mxu0
        %3980 = vmatprep.mubr.bf16.mxu0 0
        %3981 = vmatmul.mubr.bf16.gmra.mrb[0].mxu0 %v3791
        %v3982 = vpop.f32.mrb[0].mxu0
        %v3983 = vadd.f32 0.0, %v3982
        %v3984 = vpop.f32.mrb[0].mxu0
        %v3985 = vpop.f32.mrb[0].mxu0
        %v3986 = vadd.f32 0.0, %v3985
        %v3987 = vpop.f32.mrb[0].mxu0
        %3988 = vmatprep.mubr.bf16.mxu0 0
        %3989 = vmatmul.mubr.bf16.gmra.mrb[0].mxu0 %v3792
        %v3990 = vpop.f32.mrb[0].mxu0
        %v3991 = vadd.f32 0.0, %v3990
        %v3992 = vpop.f32.mrb[0].mxu0
        %v3993 = vpop.f32.mrb[0].mxu0
        %v3994 = vadd.f32 0.0, %v3993
        %v3995 = vpop.f32.mrb[0].mxu0
        %3996 = vmatprep.mubr.bf16.mxu0 0
        %3997 = vmatmul.mubr.bf16.gmra.mrb[0].mxu0 %v3793
        %v3998 = vpop.f32.mrb[0].mxu0
        %v3999 = vadd.f32 0.0, %v3998
        %v4000 = vpop.f32.mrb[0].mxu0
        %v4001 = vpop.f32.mrb[0].mxu0
        %v4002 = vadd.f32 0.0, %v4001
        %v4003 = vpop.f32.mrb[0].mxu0
        %4004 = vmatprep.mubr.bf16.mxu0 0
        %4005 = vmatmul.mubr.bf16.gmra.mrb[0].mxu0 %v3794
        %v4006 = vpop.f32.mrb[0].mxu0
        %v4007 = vadd.f32 0.0, %v4006
        %v4008 = vpop.f32.mrb[0].mxu0
        %v4009 = vpop.f32.mrb[0].mxu0
        %v4010 = vadd.f32 0.0, %v4009
        %v4011 = vpop.f32.mrb[0].mxu0
        %4012 = vmatprep.mubr.bf16.mxu0 0
        %4013 = vmatmul.mubr.bf16.gmra.mrb[0].mxu0 %v3795
        %v4014 = vpop.f32.mrb[0].mxu0
        %v4015 = vadd.f32 0.0, %v4014
        %v4016 = vpop.f32.mrb[0].mxu0
        %v4017 = vpop.f32.mrb[0].mxu0
        %v4018 = vadd.f32 0.0, %v4017
        %v4019 = vpop.f32.mrb[0].mxu0
        %4020 = vdwg.mxu0
        %v4021 = vadd.f32 %v3524, %v3895
        %v4022 = vadd.f32 %v3525, %v3898
        %v4023 = vadd.f32 %v3526, %v3903
        %v4024 = vadd.f32 %v3527, %v3906
        %v4025 = vadd.f32 %v3528, %v3911
        %v4026 = vadd.f32 %v3529, %v3914
        %v4027 = vadd.f32 %v3530, %v3919
        %v4028 = vadd.f32 %v3531, %v3922
        %v4029 = vadd.f32 %v3532, %v3927
        %v4030 = vadd.f32 %v3533, %v3930
        %v4031 = vadd.f32 %v3534, %v3935
        %v4032 = vadd.f32 %v3535, %v3938
        %v4033 = vadd.f32 %v3536, %v3943
        %v4034 = vadd.f32 %v3537, %v3946
        %v4035 = vadd.f32 %v3538, %v3951
        %v4036 = vadd.f32 %v3539, %v3954
        %v4037 = vadd.f32 %v3540, %v3959
        %v4038 = vadd.f32 %v3541, %v3962
        %v4039 = vadd.f32 %v3542, %v3967
        %v4040 = vadd.f32 %v3543, %v3970
        %v4041 = vadd.f32 %v3544, %v3975
        %v4042 = vadd.f32 %v3545, %v3978
        %v4043 = vadd.f32 %v3546, %v3983
        %v4044 = vadd.f32 %v3547, %v3986
        %v4045 = vadd.f32 %v3548, %v3991
        %v4046 = vadd.f32 %v3549, %v3994
        %v4047 = vadd.f32 %v3550, %v3999
        %v4048 = vadd.f32 %v3551, %v4002
        %v4049 = vadd.f32 %v3552, %v4007
        %v4050 = vadd.f32 %v3553, %v4010
        %v4051 = vadd.f32 %v3554, %v4015
        %v4052 = vadd.f32 %v3555, %v4018
        %s4053 = scalar_lea.vmem [#allocation2], 24
        %v4054 = vld [vmem:[%s4053] sm:$0xf]
        %v4055 = vld [vmem:[%s4053 + $0x4] sm:$0xf]
        %v4056 = vld [vmem:[%s4053 + $0xc] sm:$0xf]
        %v4057 = vld [vmem:[%s4053 + $0x10] sm:$0xf]
        %v4058 = vld [vmem:[%s4053 + $0x18] sm:$0xf]
        %v4059 = vld [vmem:[%s4053 + $0x1c] sm:$0xf]
        %v4060 = vld [vmem:[%s4053 + $0x24] sm:$0xf]
        %v4061 = vld [vmem:[%s4053 + $0x28] sm:$0xf]
        %v4062 = vld [vmem:[%s4053 + $0x30] sm:$0xf]
        %v4063 = vld [vmem:[%s4053 + $0x34] sm:$0xf]
        %v4064 = vld [vmem:[%s4053 + $0x3c] sm:$0xf]
        %v4065 = vld [vmem:[%s4053 + $0x40] sm:$0xf]
        %v4066 = vld [vmem:[%s4053 + $0x48] sm:$0xf]
        %v4067 = vld [vmem:[%s4053 + $0x4c] sm:$0xf]
        %v4068 = vld [vmem:[%s4053 + $0x54] sm:$0xf]
        %v4069 = vld [vmem:[%s4053 + $0x58] sm:$0xf]
        %v4070 = vld [vmem:[%s4053 + $0x60] sm:$0xf]
        %v4071 = vld [vmem:[%s4053 + $0x64] sm:$0xf]
        %v4072 = vld [vmem:[%s4053 + $0x6c] sm:$0xf]
        %v4073 = vld [vmem:[%s4053 + $0x70] sm:$0xf]
        %v4074 = vld [vmem:[%s4053 + $0x78] sm:$0xf]
        %v4075 = vld [vmem:[%s4053 + $0x7c] sm:$0xf]
        %v4076 = vld [vmem:[%s4053 + $0x84] sm:$0xf]
        %v4077 = vld [vmem:[%s4053 + $0x88] sm:$0xf]
        %v4078 = vld [vmem:[%s4053 + $0x90] sm:$0xf]
        %v4079 = vld [vmem:[%s4053 + $0x94] sm:$0xf]
        %v4080 = vld [vmem:[%s4053 + $0x9c] sm:$0xf]
        %v4081 = vld [vmem:[%s4053 + $0xa0] sm:$0xf]
        %v4082 = vld [vmem:[%s4053 + $0xa8] sm:$0xf]
        %v4083 = vld [vmem:[%s4053 + $0xac] sm:$0xf]
        %v4084 = vld [vmem:[%s4053 + $0xb4] sm:$0xf]
        %v4085 = vld [vmem:[%s4053 + $0xb8] sm:$0xf]
        %v4086 = vld [vmem:[#allocation6 + $0x180] sm:$0xf]
        %v4087 = vld [vmem:[#allocation6 + $0x184] sm:$0xf]
        %v4088 = vld [vmem:[#allocation6 + $0x188] sm:$0xf]
        %v4089 = vld [vmem:[#allocation6 + $0x18c] sm:$0xf]
        %v4090 = vld [vmem:[#allocation6 + $0x190] sm:$0xf]
        %v4091 = vld [vmem:[#allocation6 + $0x194] sm:$0xf]
        %v4092 = vld [vmem:[#allocation6 + $0x198] sm:$0xf]
        %v4093 = vld [vmem:[#allocation6 + $0x19c] sm:$0xf]
        %v4094 = vld [vmem:[#allocation6 + $0x1a0] sm:$0xf]
        %v4095 = vld [vmem:[#allocation6 + $0x1a4] sm:$0xf]
        %v4096 = vld [vmem:[#allocation6 + $0x1a8] sm:$0xf]
        %v4097 = vld [vmem:[#allocation6 + $0x1ac] sm:$0xf]
        %v4098 = vld [vmem:[#allocation6 + $0x1b0] sm:$0xf]
        %v4099 = vld [vmem:[#allocation6 + $0x1b4] sm:$0xf]
        %v4100 = vld [vmem:[#allocation6 + $0x1b8] sm:$0xf]
        %v4101 = vld [vmem:[#allocation6 + $0x1bc] sm:$0xf]
        %v4134 = vunpack.c.l.b16 %v4054
        %v4135 = vunpack.c.l.b16 %v4055
        %v4136 = vunpack.c.l.b16 %v4056
        %v4137 = vunpack.c.l.b16 %v4057
        %v4138 = vunpack.c.l.b16 %v4058
        %v4139 = vunpack.c.l.b16 %v4059
        %v4140 = vunpack.c.l.b16 %v4060
        %v4141 = vunpack.c.l.b16 %v4061
        %v4142 = vunpack.c.l.b16 %v4062
        %v4143 = vunpack.c.l.b16 %v4063
        %v4144 = vunpack.c.l.b16 %v4064
        %v4145 = vunpack.c.l.b16 %v4065
        %v4146 = vunpack.c.l.b16 %v4066
        %v4147 = vunpack.c.l.b16 %v4067
        %v4148 = vunpack.c.l.b16 %v4068
        %v4149 = vunpack.c.l.b16 %v4069
        %v4150 = vunpack.c.l.b16 %v4070
        %v4151 = vunpack.c.l.b16 %v4071
        %v4152 = vunpack.c.l.b16 %v4072
        %v4153 = vunpack.c.l.b16 %v4073
        %v4154 = vunpack.c.l.b16 %v4074
        %v4155 = vunpack.c.l.b16 %v4075
        %v4156 = vunpack.c.l.b16 %v4076
        %v4157 = vunpack.c.l.b16 %v4077
        %v4158 = vunpack.c.l.b16 %v4078
        %v4159 = vunpack.c.l.b16 %v4079
        %v4160 = vunpack.c.l.b16 %v4080
        %v4161 = vunpack.c.l.b16 %v4081
        %v4162 = vunpack.c.l.b16 %v4082
        %v4163 = vunpack.c.l.b16 %v4083
        %v4164 = vunpack.c.l.b16 %v4084
        %v4165 = vunpack.c.l.b16 %v4085
        %v4166 = vpack.c.b16 %v4135, %v4134
        %v4167 = vpack.c.b16 %v4137, %v4136
        %v4168 = vpack.c.b16 %v4139, %v4138
        %v4169 = vpack.c.b16 %v4141, %v4140
        %v4170 = vpack.c.b16 %v4143, %v4142
        %v4171 = vpack.c.b16 %v4145, %v4144
        %v4172 = vpack.c.b16 %v4147, %v4146
        %v4173 = vpack.c.b16 %v4149, %v4148
        %v4174 = vpack.c.b16 %v4151, %v4150
        %v4175 = vpack.c.b16 %v4153, %v4152
        %v4176 = vpack.c.b16 %v4155, %v4154
        %v4177 = vpack.c.b16 %v4157, %v4156
        %v4178 = vpack.c.b16 %v4159, %v4158
        %v4179 = vpack.c.b16 %v4161, %v4160
        %v4180 = vpack.c.b16 %v4163, %v4162
        %v4181 = vpack.c.b16 %v4165, %v4164
        %v4214 = vunpack.c.l.b16 %v4086
        %v4215 = vunpack.c.l.b16 %v4087
        %v4216 = vunpack.c.l.b16 %v4088
        %v4217 = vunpack.c.l.b16 %v4089
        %v4218 = vunpack.c.l.b16 %v4090
        %v4219 = vunpack.c.l.b16 %v4091
        %v4220 = vunpack.c.l.b16 %v4092
        %v4221 = vunpack.c.l.b16 %v4093
        %v4222 = vunpack.c.l.b16 %v4094
        %v4223 = vunpack.c.l.b16 %v4095
        %v4224 = vunpack.c.l.b16 %v4096
        %v4225 = vunpack.c.l.b16 %v4097
        %v4226 = vunpack.c.l.b16 %v4098
        %v4227 = vunpack.c.l.b16 %v4099
        %v4228 = vunpack.c.l.b16 %v4100
        %v4229 = vunpack.c.l.b16 %v4101
        %v4230 = vpack.c.b16 %v4215, %v4214
        %v4231 = vpack.c.b16 %v4217, %v4216
        %v4232 = vpack.c.b16 %v4219, %v4218
        %v4233 = vpack.c.b16 %v4221, %v4220
        %v4234 = vpack.c.b16 %v4223, %v4222
        %v4235 = vpack.c.b16 %v4225, %v4224
        %v4236 = vpack.c.b16 %v4227, %v4226
        %v4237 = vpack.c.b16 %v4229, %v4228
        %4246 = vmatprep.subr.bf16.mxu0 0
        %4247 = vmatpush1.bf16.msra.mxu0 %v4230
        %4248 = vmatprep.subr.bf16.mxu0 0
        %4249 = vmatpush1.bf16.msra.mxu0 %v4231
        %4250 = vmatprep.subr.bf16.mxu0 0
        %4251 = vmatpush1.bf16.msra.mxu0 %v4232
        %4252 = vmatprep.subr.bf16.mxu0 0
        %4253 = vmatpush1.bf16.msra.mxu0 %v4233
        %4254 = vmatprep.subr.bf16.mxu0 0
        %4255 = vmatpush1.bf16.msra.mxu0 %v4234
        %4256 = vmatprep.subr.bf16.mxu0 0
        %4257 = vmatpush1.bf16.msra.mxu0 %v4235
        %4258 = vmatprep.subr.bf16.mxu0 0
        %4259 = vmatpush1.bf16.msra.mxu0 %v4236
        %4260 = vmatprep.subr.bf16.mxu0 0
        %4261 = vmatpush1.bf16.msra.mxu0 %v4237
        %4262 = vmatprep.subr.bf16.mxu0 0
        %4263 = vmatpush1.bf16.msra.mxu0 0
        %4264 = vmatprep.subr.bf16.mxu0 0
        %4265 = vmatpush1.bf16.msra.mxu0 0
        %4266 = vmatprep.subr.bf16.mxu0 0
        %4267 = vmatpush1.bf16.msra.mxu0 0
        %4268 = vmatprep.subr.bf16.mxu0 0
        %4269 = vmatpush1.bf16.msra.mxu0 0
        %4270 = vmatprep.subr.bf16.mxu0 0
        %4271 = vmatpush1.bf16.msra.mxu0 0
        %4272 = vmatprep.subr.bf16.mxu0 0
        %4273 = vmatpush1.bf16.msra.mxu0 0
        %4274 = vmatprep.subr.bf16.mxu0 0
        %4275 = vmatpush1.bf16.msra.mxu0 0
        %4276 = vmatprep.subr.bf16.mxu0 0
        %4277 = vmatpush1.bf16.msra.mxu0 0
        %4278 = vmatprep.mubr.bf16.mxu0 0
        %4279 = vmatmul.mubr.bf16.gmra.mrb[0].mxu0 %v4166
        %v4280 = vpop.f32.mrb[0].mxu0
        %v4281 = vadd.f32 0.0, %v4280
        %v4282 = vpop.f32.mrb[0].mxu0
        %v4283 = vpop.f32.mrb[0].mxu0
        %v4284 = vadd.f32 0.0, %v4283
        %v4285 = vpop.f32.mrb[0].mxu0
        %4286 = vmatprep.mubr.bf16.mxu0 0
        %4287 = vmatmul.mubr.bf16.gmra.mrb[0].mxu0 %v4167
        %v4288 = vpop.f32.mrb[0].mxu0
        %v4289 = vadd.f32 0.0, %v4288
        %v4290 = vpop.f32.mrb[0].mxu0
        %v4291 = vpop.f32.mrb[0].mxu0
        %v4292 = vadd.f32 0.0, %v4291
        %v4293 = vpop.f32.mrb[0].mxu0
        %4294 = vmatprep.mubr.bf16.mxu0 0
        %4295 = vmatmul.mubr.bf16.gmra.mrb[0].mxu0 %v4168
        %v4296 = vpop.f32.mrb[0].mxu0
        %v4297 = vadd.f32 0.0, %v4296
        %v4298 = vpop.f32.mrb[0].mxu0
        %v4299 = vpop.f32.mrb[0].mxu0
        %v4300 = vadd.f32 0.0, %v4299
        %v4301 = vpop.f32.mrb[0].mxu0
        %4302 = vmatprep.mubr.bf16.mxu0 0
        %4303 = vmatmul.mubr.bf16.gmra.mrb[0].mxu0 %v4169
        %v4304 = vpop.f32.mrb[0].mxu0
        %v4305 = vadd.f32 0.0, %v4304
        %v4306 = vpop.f32.mrb[0].mxu0
        %v4307 = vpop.f32.mrb[0].mxu0
        %v4308 = vadd.f32 0.0, %v4307
        %v4309 = vpop.f32.mrb[0].mxu0
        %4310 = vmatprep.mubr.bf16.mxu0 0
        %4311 = vmatmul.mubr.bf16.gmra.mrb[0].mxu0 %v4170
        %v4312 = vpop.f32.mrb[0].mxu0
        %v4313 = vadd.f32 0.0, %v4312
        %v4314 = vpop.f32.mrb[0].mxu0
        %v4315 = vpop.f32.mrb[0].mxu0
        %v4316 = vadd.f32 0.0, %v4315
        %v4317 = vpop.f32.mrb[0].mxu0
        %4318 = vmatprep.mubr.bf16.mxu0 0
        %4319 = vmatmul.mubr.bf16.gmra.mrb[0].mxu0 %v4171
        %v4320 = vpop.f32.mrb[0].mxu0
        %v4321 = vadd.f32 0.0, %v4320
        %v4322 = vpop.f32.mrb[0].mxu0
        %v4323 = vpop.f32.mrb[0].mxu0
        %v4324 = vadd.f32 0.0, %v4323
        %v4325 = vpop.f32.mrb[0].mxu0
        %4326 = vmatprep.mubr.bf16.mxu0 0
        %4327 = vmatmul.mubr.bf16.gmra.mrb[0].mxu0 %v4172
        %v4328 = vpop.f32.mrb[0].mxu0
        %v4329 = vadd.f32 0.0, %v4328
        %v4330 = vpop.f32.mrb[0].mxu0
        %v4331 = vpop.f32.mrb[0].mxu0
        %v4332 = vadd.f32 0.0, %v4331
        %v4333 = vpop.f32.mrb[0].mxu0
        %4334 = vmatprep.mubr.bf16.mxu0 0
        %4335 = vmatmul.mubr.bf16.gmra.mrb[0].mxu0 %v4173
        %v4336 = vpop.f32.mrb[0].mxu0
        %v4337 = vadd.f32 0.0, %v4336
        %v4338 = vpop.f32.mrb[0].mxu0
        %v4339 = vpop.f32.mrb[0].mxu0
        %v4340 = vadd.f32 0.0, %v4339
        %v4341 = vpop.f32.mrb[0].mxu0
        %4342 = vmatprep.mubr.bf16.mxu0 0
        %4343 = vmatmul.mubr.bf16.gmra.mrb[0].mxu0 %v4174
        %v4344 = vpop.f32.mrb[0].mxu0
        %v4345 = vadd.f32 0.0, %v4344
        %v4346 = vpop.f32.mrb[0].mxu0
        %v4347 = vpop.f32.mrb[0].mxu0
        %v4348 = vadd.f32 0.0, %v4347
        %v4349 = vpop.f32.mrb[0].mxu0
        %4350 = vmatprep.mubr.bf16.mxu0 0
        %4351 = vmatmul.mubr.bf16.gmra.mrb[0].mxu0 %v4175
        %v4352 = vpop.f32.mrb[0].mxu0
        %v4353 = vadd.f32 0.0, %v4352
        %v4354 = vpop.f32.mrb[0].mxu0
        %v4355 = vpop.f32.mrb[0].mxu0
        %v4356 = vadd.f32 0.0, %v4355
        %v4357 = vpop.f32.mrb[0].mxu0
        %4358 = vmatprep.mubr.bf16.mxu0 0
        %4359 = vmatmul.mubr.bf16.gmra.mrb[0].mxu0 %v4176
        %v4360 = vpop.f32.mrb[0].mxu0
        %v4361 = vadd.f32 0.0, %v4360
        %v4362 = vpop.f32.mrb[0].mxu0
        %v4363 = vpop.f32.mrb[0].mxu0
        %v4364 = vadd.f32 0.0, %v4363
        %v4365 = vpop.f32.mrb[0].mxu0
        %4366 = vmatprep.mubr.bf16.mxu0 0
        %4367 = vmatmul.mubr.bf16.gmra.mrb[0].mxu0 %v4177
        %v4368 = vpop.f32.mrb[0].mxu0
        %v4369 = vadd.f32 0.0, %v4368
        %v4370 = vpop.f32.mrb[0].mxu0
        %v4371 = vpop.f32.mrb[0].mxu0
        %v4372 = vadd.f32 0.0, %v4371
        %v4373 = vpop.f32.mrb[0].mxu0
        %4374 = vmatprep.mubr.bf16.mxu0 0
        %4375 = vmatmul.mubr.bf16.gmra.mrb[0].mxu0 %v4178
        %v4376 = vpop.f32.mrb[0].mxu0
        %v4377 = vadd.f32 0.0, %v4376
        %v4378 = vpop.f32.mrb[0].mxu0
        %v4379 = vpop.f32.mrb[0].mxu0
        %v4380 = vadd.f32 0.0, %v4379
        %v4381 = vpop.f32.mrb[0].mxu0
        %4382 = vmatprep.mubr.bf16.mxu0 0
        %4383 = vmatmul.mubr.bf16.gmra.mrb[0].mxu0 %v4179
        %v4384 = vpop.f32.mrb[0].mxu0
        %v4385 = vadd.f32 0.0, %v4384
        %v4386 = vpop.f32.mrb[0].mxu0
        %v4387 = vpop.f32.mrb[0].mxu0
        %v4388 = vadd.f32 0.0, %v4387
        %v4389 = vpop.f32.mrb[0].mxu0
        %4390 = vmatprep.mubr.bf16.mxu0 0
        %4391 = vmatmul.mubr.bf16.gmra.mrb[0].mxu0 %v4180
        %v4392 = vpop.f32.mrb[0].mxu0
        %v4393 = vadd.f32 0.0, %v4392
        %v4394 = vpop.f32.mrb[0].mxu0
        %v4395 = vpop.f32.mrb[0].mxu0
        %v4396 = vadd.f32 0.0, %v4395
        %v4397 = vpop.f32.mrb[0].mxu0
        %4398 = vmatprep.mubr.bf16.mxu0 0
        %4399 = vmatmul.mubr.bf16.gmra.mrb[0].mxu0 %v4181
        %v4400 = vpop.f32.mrb[0].mxu0
        %v4401 = vadd.f32 0.0, %v4400
        %v4402 = vpop.f32.mrb[0].mxu0
        %v4403 = vpop.f32.mrb[0].mxu0
        %v4404 = vadd.f32 0.0, %v4403
        %v4405 = vpop.f32.mrb[0].mxu0
        %4406 = vdwg.mxu0
        %v4407 = vadd.f32 %v4021, %v4281
        %v4408 = vadd.f32 %v4022, %v4284
        %v4409 = vadd.f32 %v4023, %v4289
        %v4410 = vadd.f32 %v4024, %v4292
        %v4411 = vadd.f32 %v4025, %v4297
        %v4412 = vadd.f32 %v4026, %v4300
        %v4413 = vadd.f32 %v4027, %v4305
        %v4414 = vadd.f32 %v4028, %v4308
        %v4415 = vadd.f32 %v4029, %v4313
        %v4416 = vadd.f32 %v4030, %v4316
        %v4417 = vadd.f32 %v4031, %v4321
        %v4418 = vadd.f32 %v4032, %v4324
        %v4419 = vadd.f32 %v4033, %v4329
        %v4420 = vadd.f32 %v4034, %v4332
        %v4421 = vadd.f32 %v4035, %v4337
        %v4422 = vadd.f32 %v4036, %v4340
        %v4423 = vadd.f32 %v4037, %v4345
        %v4424 = vadd.f32 %v4038, %v4348
        %v4425 = vadd.f32 %v4039, %v4353
        %v4426 = vadd.f32 %v4040, %v4356
        %v4427 = vadd.f32 %v4041, %v4361
        %v4428 = vadd.f32 %v4042, %v4364
        %v4429 = vadd.f32 %v4043, %v4369
        %v4430 = vadd.f32 %v4044, %v4372
        %v4431 = vadd.f32 %v4045, %v4377
        %v4432 = vadd.f32 %v4046, %v4380
        %v4433 = vadd.f32 %v4047, %v4385
        %v4434 = vadd.f32 %v4048, %v4388
        %v4435 = vadd.f32 %v4049, %v4393
        %v4436 = vadd.f32 %v4050, %v4396
        %v4437 = vadd.f32 %v4051, %v4401
        %v4438 = vadd.f32 %v4052, %v4404
        %v4439 = vld [vmem:[%s4053] sm:$0xf]
        %v4440 = vld [vmem:[%s4053 + $0x4] sm:$0xf]
        %v4441 = vld [vmem:[%s4053 + $0x8] sm:$0x1]
        %v4442 = vld [vmem:[%s4053 + $0xc] sm:$0xf]
        %v4443 = vld [vmem:[%s4053 + $0x10] sm:$0xf]
        %v4444 = vld [vmem:[%s4053 + $0x14] sm:$0x1]
        %v4445 = vld [vmem:[%s4053 + $0x18] sm:$0xf]
        %v4446 = vld [vmem:[%s4053 + $0x1c] sm:$0xf]
        %v4447 = vld [vmem:[%s4053 + $0x20] sm:$0x1]
        %v4448 = vld [vmem:[%s4053 + $0x24] sm:$0xf]
        %v4449 = vld [vmem:[%s4053 + $0x28] sm:$0xf]
        %v4450 = vld [vmem:[%s4053 + $0x2c] sm:$0x1]
        %v4451 = vld [vmem:[%s4053 + $0x30] sm:$0xf]
        %v4452 = vld [vmem:[%s4053 + $0x34] sm:$0xf]
        %v4453 = vld [vmem:[%s4053 + $0x38] sm:$0x1]
        %v4454 = vld [vmem:[%s4053 + $0x3c] sm:$0xf]
        %v4455 = vld [vmem:[%s4053 + $0x40] sm:$0xf]
        %v4456 = vld [vmem:[%s4053 + $0x44] sm:$0x1]
        %v4457 = vld [vmem:[%s4053 + $0x48] sm:$0xf]
        %v4458 = vld [vmem:[%s4053 + $0x4c] sm:$0xf]
        %v4459 = vld [vmem:[%s4053 + $0x50] sm:$0x1]
        %v4460 = vld [vmem:[%s4053 + $0x54] sm:$0xf]
        %v4461 = vld [vmem:[%s4053 + $0x58] sm:$0xf]
        %v4462 = vld [vmem:[%s4053 + $0x5c] sm:$0x1]
        %v4463 = vld [vmem:[%s4053 + $0x60] sm:$0xf]
        %v4464 = vld [vmem:[%s4053 + $0x64] sm:$0xf]
        %v4465 = vld [vmem:[%s4053 + $0x68] sm:$0x1]
        %v4466 = vld [vmem:[%s4053 + $0x6c] sm:$0xf]
        %v4467 = vld [vmem:[%s4053 + $0x70] sm:$0xf]
        %v4468 = vld [vmem:[%s4053 + $0x74] sm:$0x1]
        %v4469 = vld [vmem:[%s4053 + $0x78] sm:$0xf]
        %v4470 = vld [vmem:[%s4053 + $0x7c] sm:$0xf]
        %v4471 = vld [vmem:[%s4053 + $0x80] sm:$0x1]
        %v4472 = vld [vmem:[%s4053 + $0x84] sm:$0xf]
        %v4473 = vld [vmem:[%s4053 + $0x88] sm:$0xf]
        %v4474 = vld [vmem:[%s4053 + $0x8c] sm:$0x1]
        %v4475 = vld [vmem:[%s4053 + $0x90] sm:$0xf]
        %v4476 = vld [vmem:[%s4053 + $0x94] sm:$0xf]
        %v4477 = vld [vmem:[%s4053 + $0x98] sm:$0x1]
        %v4478 = vld [vmem:[%s4053 + $0x9c] sm:$0xf]
        %v4479 = vld [vmem:[%s4053 + $0xa0] sm:$0xf]
        %v4480 = vld [vmem:[%s4053 + $0xa4] sm:$0x1]
        %v4481 = vld [vmem:[%s4053 + $0xa8] sm:$0xf]
        %v4482 = vld [vmem:[%s4053 + $0xac] sm:$0xf]
        %v4483 = vld [vmem:[%s4053 + $0xb0] sm:$0x1]
        %v4484 = vld [vmem:[%s4053 + $0xb4] sm:$0xf]
        %v4485 = vld [vmem:[%s4053 + $0xb8] sm:$0xf]
        %v4486 = vld [vmem:[%s4053 + $0xbc] sm:$0x1]
        %v4488 = vshrl.u32 %v4439, 16
        %v4490 = vrot.slane %v4488, 4
        %v4491 = vshll.u32 %v4439, 16
        %v4493 = vrot.slane %v4491, 5
        %v4494 = vor.u32 %v4490, %v4493
        %v4495 = vrot.slane %v4494, 4
        %v4497 = vshll.u32 %v4440, 16
        %v4499 = vrot.slane %v4497, 5
        %v4500 = vsel %vm955, %v4495, %v4499
        %v4501 = vshrl.u32 %v4440, 16
        %v4503 = vrot.slane %v4501, 4
        %v4504 = vor.u32 %v4503, %v4499
        %v4505 = vrot.slane %v4504, 4
        %v4507 = vshll.u32 %v4441, 16
        %v4509 = vrot.slane %v4507, 5
        %v4510 = vsel %vm955, %v4505, %v4509
        %v4512 = vshrl.u32 %v4442, 16
        %v4514 = vrot.slane %v4512, 4
        %v4515 = vshll.u32 %v4442, 16
        %v4517 = vrot.slane %v4515, 5
        %v4518 = vor.u32 %v4514, %v4517
        %v4519 = vrot.slane %v4518, 4
        %v4521 = vshll.u32 %v4443, 16
        %v4523 = vrot.slane %v4521, 5
        %v4524 = vsel %vm955, %v4519, %v4523
        %v4525 = vshrl.u32 %v4443, 16
        %v4527 = vrot.slane %v4525, 4
        %v4528 = vor.u32 %v4527, %v4523
        %v4529 = vrot.slane %v4528, 4
        %v4531 = vshll.u32 %v4444, 16
        %v4533 = vrot.slane %v4531, 5
        %v4534 = vsel %vm955, %v4529, %v4533
        %v4536 = vshrl.u32 %v4445, 16
        %v4538 = vrot.slane %v4536, 4
        %v4539 = vshll.u32 %v4445, 16
        %v4541 = vrot.slane %v4539, 5
        %v4542 = vor.u32 %v4538, %v4541
        %v4543 = vrot.slane %v4542, 4
        %v4545 = vshll.u32 %v4446, 16
        %v4547 = vrot.slane %v4545, 5
        %v4548 = vsel %vm955, %v4543, %v4547
        %v4549 = vshrl.u32 %v4446, 16
        %v4551 = vrot.slane %v4549, 4
        %v4552 = vor.u32 %v4551, %v4547
        %v4553 = vrot.slane %v4552, 4
        %v4555 = vshll.u32 %v4447, 16
        %v4557 = vrot.slane %v4555, 5
        %v4558 = vsel %vm955, %v4553, %v4557
        %v4560 = vshrl.u32 %v4448, 16
        %v4562 = vrot.slane %v4560, 4
        %v4563 = vshll.u32 %v4448, 16
        %v4565 = vrot.slane %v4563, 5
        %v4566 = vor.u32 %v4562, %v4565
        %v4567 = vrot.slane %v4566, 4
        %v4569 = vshll.u32 %v4449, 16
        %v4571 = vrot.slane %v4569, 5
        %v4572 = vsel %vm955, %v4567, %v4571
        %v4573 = vshrl.u32 %v4449, 16
        %v4575 = vrot.slane %v4573, 4
        %v4576 = vor.u32 %v4575, %v4571
        %v4577 = vrot.slane %v4576, 4
        %v4579 = vshll.u32 %v4450, 16
        %v4581 = vrot.slane %v4579, 5
        %v4582 = vsel %vm955, %v4577, %v4581
        %v4584 = vshrl.u32 %v4451, 16
        %v4586 = vrot.slane %v4584, 4
        %v4587 = vshll.u32 %v4451, 16
        %v4589 = vrot.slane %v4587, 5
        %v4590 = vor.u32 %v4586, %v4589
        %v4591 = vrot.slane %v4590, 4
        %v4593 = vshll.u32 %v4452, 16
        %v4595 = vrot.slane %v4593, 5
        %v4596 = vsel %vm955, %v4591, %v4595
        %v4597 = vshrl.u32 %v4452, 16
        %v4599 = vrot.slane %v4597, 4
        %v4600 = vor.u32 %v4599, %v4595
        %v4601 = vrot.slane %v4600, 4
        %v4603 = vshll.u32 %v4453, 16
        %v4605 = vrot.slane %v4603, 5
        %v4606 = vsel %vm955, %v4601, %v4605
        %v4608 = vshrl.u32 %v4454, 16
        %v4610 = vrot.slane %v4608, 4
        %v4611 = vshll.u32 %v4454, 16
        %v4613 = vrot.slane %v4611, 5
        %v4614 = vor.u32 %v4610, %v4613
        %v4615 = vrot.slane %v4614, 4
        %v4617 = vshll.u32 %v4455, 16
        %v4619 = vrot.slane %v4617, 5
        %v4620 = vsel %vm955, %v4615, %v4619
        %v4621 = vshrl.u32 %v4455, 16
        %v4623 = vrot.slane %v4621, 4
        %v4624 = vor.u32 %v4623, %v4619
        %v4625 = vrot.slane %v4624, 4
        %v4627 = vshll.u32 %v4456, 16
        %v4629 = vrot.slane %v4627, 5
        %v4630 = vsel %vm955, %v4625, %v4629
        %v4632 = vshrl.u32 %v4457, 16
        %v4634 = vrot.slane %v4632, 4
        %v4635 = vshll.u32 %v4457, 16
        %v4637 = vrot.slane %v4635, 5
        %v4638 = vor.u32 %v4634, %v4637
        %v4639 = vrot.slane %v4638, 4
        %v4641 = vshll.u32 %v4458, 16
        %v4643 = vrot.slane %v4641, 5
        %v4644 = vsel %vm955, %v4639, %v4643
        %v4645 = vshrl.u32 %v4458, 16
        %v4647 = vrot.slane %v4645, 4
        %v4648 = vor.u32 %v4647, %v4643
        %v4649 = vrot.slane %v4648, 4
        %v4651 = vshll.u32 %v4459, 16
        %v4653 = vrot.slane %v4651, 5
        %v4654 = vsel %vm955, %v4649, %v4653
        %v4656 = vshrl.u32 %v4460, 16
        %v4658 = vrot.slane %v4656, 4
        %v4659 = vshll.u32 %v4460, 16
        %v4661 = vrot.slane %v4659, 5
        %v4662 = vor.u32 %v4658, %v4661
        %v4663 = vrot.slane %v4662, 4
        %v4665 = vshll.u32 %v4461, 16
        %v4667 = vrot.slane %v4665, 5
        %v4668 = vsel %vm955, %v4663, %v4667
        %v4669 = vshrl.u32 %v4461, 16
        %v4671 = vrot.slane %v4669, 4
        %v4672 = vor.u32 %v4671, %v4667
        %v4673 = vrot.slane %v4672, 4
        %v4675 = vshll.u32 %v4462, 16
        %v4677 = vrot.slane %v4675, 5
        %v4678 = vsel %vm955, %v4673, %v4677
        %v4680 = vshrl.u32 %v4463, 16
        %v4682 = vrot.slane %v4680, 4
        %v4683 = vshll.u32 %v4463, 16
        %v4685 = vrot.slane %v4683, 5
        %v4686 = vor.u32 %v4682, %v4685
        %v4687 = vrot.slane %v4686, 4
        %v4689 = vshll.u32 %v4464, 16
        %v4691 = vrot.slane %v4689, 5
        %v4692 = vsel %vm955, %v4687, %v4691
        %v4693 = vshrl.u32 %v4464, 16
        %v4695 = vrot.slane %v4693, 4
        %v4696 = vor.u32 %v4695, %v4691
        %v4697 = vrot.slane %v4696, 4
        %v4699 = vshll.u32 %v4465, 16
        %v4701 = vrot.slane %v4699, 5
        %v4702 = vsel %vm955, %v4697, %v4701
        %v4704 = vshrl.u32 %v4466, 16
        %v4706 = vrot.slane %v4704, 4
        %v4707 = vshll.u32 %v4466, 16
        %v4709 = vrot.slane %v4707, 5
        %v4710 = vor.u32 %v4706, %v4709
        %v4711 = vrot.slane %v4710, 4
        %v4713 = vshll.u32 %v4467, 16
        %v4715 = vrot.slane %v4713, 5
        %v4716 = vsel %vm955, %v4711, %v4715
        %v4717 = vshrl.u32 %v4467, 16
        %v4719 = vrot.slane %v4717, 4
        %v4720 = vor.u32 %v4719, %v4715
        %v4721 = vrot.slane %v4720, 4
        %v4723 = vshll.u32 %v4468, 16
        %v4725 = vrot.slane %v4723, 5
        %v4726 = vsel %vm955, %v4721, %v4725
        %v4728 = vshrl.u32 %v4469, 16
        %v4730 = vrot.slane %v4728, 4
        %v4731 = vshll.u32 %v4469, 16
        %v4733 = vrot.slane %v4731, 5
        %v4734 = vor.u32 %v4730, %v4733
        %v4735 = vrot.slane %v4734, 4
        %v4737 = vshll.u32 %v4470, 16
        %v4739 = vrot.slane %v4737, 5
        %v4740 = vsel %vm955, %v4735, %v4739
        %v4741 = vshrl.u32 %v4470, 16
        %v4743 = vrot.slane %v4741, 4
        %v4744 = vor.u32 %v4743, %v4739
        %v4745 = vrot.slane %v4744, 4
        %v4747 = vshll.u32 %v4471, 16
        %v4749 = vrot.slane %v4747, 5
        %v4750 = vsel %vm955, %v4745, %v4749
        %v4752 = vshrl.u32 %v4472, 16
        %v4754 = vrot.slane %v4752, 4
        %v4755 = vshll.u32 %v4472, 16
        %v4757 = vrot.slane %v4755, 5
        %v4758 = vor.u32 %v4754, %v4757
        %v4759 = vrot.slane %v4758, 4
        %v4761 = vshll.u32 %v4473, 16
        %v4763 = vrot.slane %v4761, 5
        %v4764 = vsel %vm955, %v4759, %v4763
        %v4765 = vshrl.u32 %v4473, 16
        %v4767 = vrot.slane %v4765, 4
        %v4768 = vor.u32 %v4767, %v4763
        %v4769 = vrot.slane %v4768, 4
        %v4771 = vshll.u32 %v4474, 16
        %v4773 = vrot.slane %v4771, 5
        %v4774 = vsel %vm955, %v4769, %v4773
        %v4776 = vshrl.u32 %v4475, 16
        %v4778 = vrot.slane %v4776, 4
        %v4779 = vshll.u32 %v4475, 16
        %v4781 = vrot.slane %v4779, 5
        %v4782 = vor.u32 %v4778, %v4781
        %v4783 = vrot.slane %v4782, 4
        %v4785 = vshll.u32 %v4476, 16
        %v4787 = vrot.slane %v4785, 5
        %v4788 = vsel %vm955, %v4783, %v4787
        %v4789 = vshrl.u32 %v4476, 16
        %v4791 = vrot.slane %v4789, 4
        %v4792 = vor.u32 %v4791, %v4787
        %v4793 = vrot.slane %v4792, 4
        %v4795 = vshll.u32 %v4477, 16
        %v4797 = vrot.slane %v4795, 5
        %v4798 = vsel %vm955, %v4793, %v4797
        %v4800 = vshrl.u32 %v4478, 16
        %v4802 = vrot.slane %v4800, 4
        %v4803 = vshll.u32 %v4478, 16
        %v4805 = vrot.slane %v4803, 5
        %v4806 = vor.u32 %v4802, %v4805
        %v4807 = vrot.slane %v4806, 4
        %v4809 = vshll.u32 %v4479, 16
        %v4811 = vrot.slane %v4809, 5
        %v4812 = vsel %vm955, %v4807, %v4811
        %v4813 = vshrl.u32 %v4479, 16
        %v4815 = vrot.slane %v4813, 4
        %v4816 = vor.u32 %v4815, %v4811
        %v4817 = vrot.slane %v4816, 4
        %v4819 = vshll.u32 %v4480, 16
        %v4821 = vrot.slane %v4819, 5
        %v4822 = vsel %vm955, %v4817, %v4821
        %v4824 = vshrl.u32 %v4481, 16
        %v4826 = vrot.slane %v4824, 4
        %v4827 = vshll.u32 %v4481, 16
        %v4829 = vrot.slane %v4827, 5
        %v4830 = vor.u32 %v4826, %v4829
        %v4831 = vrot.slane %v4830, 4
        %v4833 = vshll.u32 %v4482, 16
        %v4835 = vrot.slane %v4833, 5
        %v4836 = vsel %vm955, %v4831, %v4835
        %v4837 = vshrl.u32 %v4482, 16
        %v4839 = vrot.slane %v4837, 4
        %v4840 = vor.u32 %v4839, %v4835
        %v4841 = vrot.slane %v4840, 4
        %v4843 = vshll.u32 %v4483, 16
        %v4845 = vrot.slane %v4843, 5
        %v4846 = vsel %vm955, %v4841, %v4845
        %v4848 = vshrl.u32 %v4484, 16
        %v4850 = vrot.slane %v4848, 4
        %v4851 = vshll.u32 %v4484, 16
        %v4853 = vrot.slane %v4851, 5
        %v4854 = vor.u32 %v4850, %v4853
        %v4855 = vrot.slane %v4854, 4
        %v4857 = vshll.u32 %v4485, 16
        %v4859 = vrot.slane %v4857, 5
        %v4860 = vsel %vm955, %v4855, %v4859
        %v4861 = vshrl.u32 %v4485, 16
        %v4863 = vrot.slane %v4861, 4
        %v4864 = vor.u32 %v4863, %v4859
        %v4865 = vrot.slane %v4864, 4
        %v4867 = vshll.u32 %v4486, 16
        %v4869 = vrot.slane %v4867, 5
        %v4870 = vsel %vm955, %v4865, %v4869
        %v4871 = vld [vmem:[#allocation6 + $0x1c0] sm:$0xf]
        %v4872 = vld [vmem:[#allocation6 + $0x1c4] sm:$0xf]
        %v4873 = vld [vmem:[#allocation6 + $0x1c8] sm:$0xf]
        %v4874 = vld [vmem:[#allocation6 + $0x1cc] sm:$0xf]
        %v4875 = vld [vmem:[#allocation6 + $0x1d0] sm:$0xf]
        %v4876 = vld [vmem:[#allocation6 + $0x1d4] sm:$0xf]
        %v4877 = vld [vmem:[#allocation6 + $0x1d8] sm:$0xf]
        %v4878 = vld [vmem:[#allocation6 + $0x1dc] sm:$0xf]
        %v4879 = vld [vmem:[#allocation6 + $0x1e0] sm:$0xf]
        %v4880 = vld [vmem:[#allocation6 + $0x1e4] sm:$0xf]
        %v4881 = vld [vmem:[#allocation6 + $0x1e8] sm:$0xf]
        %v4882 = vld [vmem:[#allocation6 + $0x1ec] sm:$0xf]
        %v4883 = vld [vmem:[#allocation6 + $0x1f0] sm:$0xf]
        %v4884 = vld [vmem:[#allocation6 + $0x1f4] sm:$0xf]
        %v4885 = vld [vmem:[#allocation6 + $0x1f8] sm:$0xf]
        %v4886 = vld [vmem:[#allocation6 + $0x1fc] sm:$0xf]
        %v4887 = vunpack.c.l.b16 %v4500
        %v4888 = vunpack.c.l.b16 %v4510
        %v4889 = vunpack.c.l.b16 %v4524
        %v4890 = vunpack.c.l.b16 %v4534
        %v4891 = vunpack.c.l.b16 %v4548
        %v4892 = vunpack.c.l.b16 %v4558
        %v4893 = vunpack.c.l.b16 %v4572
        %v4894 = vunpack.c.l.b16 %v4582
        %v4895 = vunpack.c.l.b16 %v4596
        %v4896 = vunpack.c.l.b16 %v4606
        %v4897 = vunpack.c.l.b16 %v4620
        %v4898 = vunpack.c.l.b16 %v4630
        %v4899 = vunpack.c.l.b16 %v4644
        %v4900 = vunpack.c.l.b16 %v4654
        %v4901 = vunpack.c.l.b16 %v4668
        %v4902 = vunpack.c.l.b16 %v4678
        %v4903 = vunpack.c.l.b16 %v4692
        %v4904 = vunpack.c.l.b16 %v4702
        %v4905 = vunpack.c.l.b16 %v4716
        %v4906 = vunpack.c.l.b16 %v4726
        %v4907 = vunpack.c.l.b16 %v4740
        %v4908 = vunpack.c.l.b16 %v4750
        %v4909 = vunpack.c.l.b16 %v4764
        %v4910 = vunpack.c.l.b16 %v4774
        %v4911 = vunpack.c.l.b16 %v4788
        %v4912 = vunpack.c.l.b16 %v4798
        %v4913 = vunpack.c.l.b16 %v4812
        %v4914 = vunpack.c.l.b16 %v4822
        %v4915 = vunpack.c.l.b16 %v4836
        %v4916 = vunpack.c.l.b16 %v4846
        %v4917 = vunpack.c.l.b16 %v4860
        %v4918 = vunpack.c.l.b16 %v4870
        %v4919 = vpack.c.b16 %v4888, %v4887
        %v4920 = vpack.c.b16 %v4890, %v4889
        %v4921 = vpack.c.b16 %v4892, %v4891
        %v4922 = vpack.c.b16 %v4894, %v4893
        %v4923 = vpack.c.b16 %v4896, %v4895
        %v4924 = vpack.c.b16 %v4898, %v4897
        %v4925 = vpack.c.b16 %v4900, %v4899
        %v4926 = vpack.c.b16 %v4902, %v4901
        %v4927 = vpack.c.b16 %v4904, %v4903
        %v4928 = vpack.c.b16 %v4906, %v4905
        %v4929 = vpack.c.b16 %v4908, %v4907
        %v4930 = vpack.c.b16 %v4910, %v4909
        %v4931 = vpack.c.b16 %v4912, %v4911
        %v4932 = vpack.c.b16 %v4914, %v4913
        %v4933 = vpack.c.b16 %v4916, %v4915
        %v4934 = vpack.c.b16 %v4918, %v4917
        %v4967 = vunpack.c.l.b16 %v4871
        %v4968 = vunpack.c.l.b16 %v4872
        %v4969 = vunpack.c.l.b16 %v4873
        %v4970 = vunpack.c.l.b16 %v4874
        %v4971 = vunpack.c.l.b16 %v4875
        %v4972 = vunpack.c.l.b16 %v4876
        %v4973 = vunpack.c.l.b16 %v4877
        %v4974 = vunpack.c.l.b16 %v4878
        %v4975 = vunpack.c.l.b16 %v4879
        %v4976 = vunpack.c.l.b16 %v4880
        %v4977 = vunpack.c.l.b16 %v4881
        %v4978 = vunpack.c.l.b16 %v4882
        %v4979 = vunpack.c.l.b16 %v4883
        %v4980 = vunpack.c.l.b16 %v4884
        %v4981 = vunpack.c.l.b16 %v4885
        %v4982 = vunpack.c.l.b16 %v4886
        %v4983 = vpack.c.b16 %v4968, %v4967
        %v4984 = vpack.c.b16 %v4970, %v4969
        %v4985 = vpack.c.b16 %v4972, %v4971
        %v4986 = vpack.c.b16 %v4974, %v4973
        %v4987 = vpack.c.b16 %v4976, %v4975
        %v4988 = vpack.c.b16 %v4978, %v4977
        %v4989 = vpack.c.b16 %v4980, %v4979
        %v4990 = vpack.c.b16 %v4982, %v4981
        %4999 = vmatprep.subr.bf16.mxu0 0
        %5000 = vmatpush1.bf16.msra.mxu0 %v4983
        %5001 = vmatprep.subr.bf16.mxu0 0
        %5002 = vmatpush1.bf16.msra.mxu0 %v4984
        %5003 = vmatprep.subr.bf16.mxu0 0
        %5004 = vmatpush1.bf16.msra.mxu0 %v4985
        %5005 = vmatprep.subr.bf16.mxu0 0
        %5006 = vmatpush1.bf16.msra.mxu0 %v4986
        %5007 = vmatprep.subr.bf16.mxu0 0
        %5008 = vmatpush1.bf16.msra.mxu0 %v4987
        %5009 = vmatprep.subr.bf16.mxu0 0
        %5010 = vmatpush1.bf16.msra.mxu0 %v4988
        %5011 = vmatprep.subr.bf16.mxu0 0
        %5012 = vmatpush1.bf16.msra.mxu0 %v4989
        %5013 = vmatprep.subr.bf16.mxu0 0
        %5014 = vmatpush1.bf16.msra.mxu0 %v4990
        %5015 = vmatprep.subr.bf16.mxu0 0
        %5016 = vmatpush1.bf16.msra.mxu0 0
        %5017 = vmatprep.subr.bf16.mxu0 0
        %5018 = vmatpush1.bf16.msra.mxu0 0
        %5019 = vmatprep.subr.bf16.mxu0 0
        %5020 = vmatpush1.bf16.msra.mxu0 0
        %5021 = vmatprep.subr.bf16.mxu0 0
        %5022 = vmatpush1.bf16.msra.mxu0 0
        %5023 = vmatprep.subr.bf16.mxu0 0
        %5024 = vmatpush1.bf16.msra.mxu0 0
        %5025 = vmatprep.subr.bf16.mxu0 0
        %5026 = vmatpush1.bf16.msra.mxu0 0
        %5027 = vmatprep.subr.bf16.mxu0 0
        %5028 = vmatpush1.bf16.msra.mxu0 0
        %5029 = vmatprep.subr.bf16.mxu0 0
        %5030 = vmatpush1.bf16.msra.mxu0 0
        %5031 = vmatprep.mubr.bf16.mxu0 0
        %5032 = vmatmul.mubr.bf16.gmra.mrb[0].mxu0 %v4919
        %v5033 = vpop.f32.mrb[0].mxu0
        %v5034 = vadd.f32 0.0, %v5033
        %v5035 = vpop.f32.mrb[0].mxu0
        %v5036 = vpop.f32.mrb[0].mxu0
        %v5037 = vadd.f32 0.0, %v5036
        %v5038 = vpop.f32.mrb[0].mxu0
        %5039 = vmatprep.mubr.bf16.mxu0 0
        %5040 = vmatmul.mubr.bf16.gmra.mrb[0].mxu0 %v4920
        %v5041 = vpop.f32.mrb[0].mxu0
        %v5042 = vadd.f32 0.0, %v5041
        %v5043 = vpop.f32.mrb[0].mxu0
        %v5044 = vpop.f32.mrb[0].mxu0
        %v5045 = vadd.f32 0.0, %v5044
        %v5046 = vpop.f32.mrb[0].mxu0
        %5047 = vmatprep.mubr.bf16.mxu0 0
        %5048 = vmatmul.mubr.bf16.gmra.mrb[0].mxu0 %v4921
        %v5049 = vpop.f32.mrb[0].mxu0
        %v5050 = vadd.f32 0.0, %v5049
        %v5051 = vpop.f32.mrb[0].mxu0
        %v5052 = vpop.f32.mrb[0].mxu0
        %v5053 = vadd.f32 0.0, %v5052
        %v5054 = vpop.f32.mrb[0].mxu0
        %5055 = vmatprep.mubr.bf16.mxu0 0
        %5056 = vmatmul.mubr.bf16.gmra.mrb[0].mxu0 %v4922
        %v5057 = vpop.f32.mrb[0].mxu0
        %v5058 = vadd.f32 0.0, %v5057
        %v5059 = vpop.f32.mrb[0].mxu0
        %v5060 = vpop.f32.mrb[0].mxu0
        %v5061 = vadd.f32 0.0, %v5060
        %v5062 = vpop.f32.mrb[0].mxu0
        %5063 = vmatprep.mubr.bf16.mxu0 0
        %5064 = vmatmul.mubr.bf16.gmra.mrb[0].mxu0 %v4923
        %v5065 = vpop.f32.mrb[0].mxu0
        %v5066 = vadd.f32 0.0, %v5065
        %v5067 = vpop.f32.mrb[0].mxu0
        %v5068 = vpop.f32.mrb[0].mxu0
        %v5069 = vadd.f32 0.0, %v5068
        %v5070 = vpop.f32.mrb[0].mxu0
        %5071 = vmatprep.mubr.bf16.mxu0 0
        %5072 = vmatmul.mubr.bf16.gmra.mrb[0].mxu0 %v4924
        %v5073 = vpop.f32.mrb[0].mxu0
        %v5074 = vadd.f32 0.0, %v5073
        %v5075 = vpop.f32.mrb[0].mxu0
        %v5076 = vpop.f32.mrb[0].mxu0
        %v5077 = vadd.f32 0.0, %v5076
        %v5078 = vpop.f32.mrb[0].mxu0
        %5079 = vmatprep.mubr.bf16.mxu0 0
        %5080 = vmatmul.mubr.bf16.gmra.mrb[0].mxu0 %v4925
        %v5081 = vpop.f32.mrb[0].mxu0
        %v5082 = vadd.f32 0.0, %v5081
        %v5083 = vpop.f32.mrb[0].mxu0
        %v5084 = vpop.f32.mrb[0].mxu0
        %v5085 = vadd.f32 0.0, %v5084
        %v5086 = vpop.f32.mrb[0].mxu0
        %5087 = vmatprep.mubr.bf16.mxu0 0
        %5088 = vmatmul.mubr.bf16.gmra.mrb[0].mxu0 %v4926
        %v5089 = vpop.f32.mrb[0].mxu0
        %v5090 = vadd.f32 0.0, %v5089
        %v5091 = vpop.f32.mrb[0].mxu0
        %v5092 = vpop.f32.mrb[0].mxu0
        %v5093 = vadd.f32 0.0, %v5092
        %v5094 = vpop.f32.mrb[0].mxu0
        %5095 = vmatprep.mubr.bf16.mxu0 0
        %5096 = vmatmul.mubr.bf16.gmra.mrb[0].mxu0 %v4927
        %v5097 = vpop.f32.mrb[0].mxu0
        %v5098 = vadd.f32 0.0, %v5097
        %v5099 = vpop.f32.mrb[0].mxu0
        %v5100 = vpop.f32.mrb[0].mxu0
        %v5101 = vadd.f32 0.0, %v5100
        %v5102 = vpop.f32.mrb[0].mxu0
        %5103 = vmatprep.mubr.bf16.mxu0 0
        %5104 = vmatmul.mubr.bf16.gmra.mrb[0].mxu0 %v4928
        %v5105 = vpop.f32.mrb[0].mxu0
        %v5106 = vadd.f32 0.0, %v5105
        %v5107 = vpop.f32.mrb[0].mxu0
        %v5108 = vpop.f32.mrb[0].mxu0
        %v5109 = vadd.f32 0.0, %v5108
        %v5110 = vpop.f32.mrb[0].mxu0
        %5111 = vmatprep.mubr.bf16.mxu0 0
        %5112 = vmatmul.mubr.bf16.gmra.mrb[0].mxu0 %v4929
        %v5113 = vpop.f32.mrb[0].mxu0
        %v5114 = vadd.f32 0.0, %v5113
        %v5115 = vpop.f32.mrb[0].mxu0
        %v5116 = vpop.f32.mrb[0].mxu0
        %v5117 = vadd.f32 0.0, %v5116
        %v5118 = vpop.f32.mrb[0].mxu0
        %5119 = vmatprep.mubr.bf16.mxu0 0
        %5120 = vmatmul.mubr.bf16.gmra.mrb[0].mxu0 %v4930
        %v5121 = vpop.f32.mrb[0].mxu0
        %v5122 = vadd.f32 0.0, %v5121
        %v5123 = vpop.f32.mrb[0].mxu0
        %v5124 = vpop.f32.mrb[0].mxu0
        %v5125 = vadd.f32 0.0, %v5124
        %v5126 = vpop.f32.mrb[0].mxu0
        %5127 = vmatprep.mubr.bf16.mxu0 0
        %5128 = vmatmul.mubr.bf16.gmra.mrb[0].mxu0 %v4931
        %v5129 = vpop.f32.mrb[0].mxu0
        %v5130 = vadd.f32 0.0, %v5129
        %v5131 = vpop.f32.mrb[0].mxu0
        %v5132 = vpop.f32.mrb[0].mxu0
        %v5133 = vadd.f32 0.0, %v5132
        %v5134 = vpop.f32.mrb[0].mxu0
        %5135 = vmatprep.mubr.bf16.mxu0 0
        %5136 = vmatmul.mubr.bf16.gmra.mrb[0].mxu0 %v4932
        %v5137 = vpop.f32.mrb[0].mxu0
        %v5138 = vadd.f32 0.0, %v5137
        %v5139 = vpop.f32.mrb[0].mxu0
        %v5140 = vpop.f32.mrb[0].mxu0
        %v5141 = vadd.f32 0.0, %v5140
        %v5142 = vpop.f32.mrb[0].mxu0
        %5143 = vmatprep.mubr.bf16.mxu0 0
        %5144 = vmatmul.mubr.bf16.gmra.mrb[0].mxu0 %v4933
        %v5145 = vpop.f32.mrb[0].mxu0
        %v5146 = vadd.f32 0.0, %v5145
        %v5147 = vpop.f32.mrb[0].mxu0
        %v5148 = vpop.f32.mrb[0].mxu0
        %v5149 = vadd.f32 0.0, %v5148
        %v5150 = vpop.f32.mrb[0].mxu0
        %5151 = vmatprep.mubr.bf16.mxu0 0
        %5152 = vmatmul.mubr.bf16.gmra.mrb[0].mxu0 %v4934
        %v5153 = vpop.f32.mrb[0].mxu0
        %v5154 = vadd.f32 0.0, %v5153
        %v5155 = vpop.f32.mrb[0].mxu0
        %v5156 = vpop.f32.mrb[0].mxu0
        %v5157 = vadd.f32 0.0, %v5156
        %v5158 = vpop.f32.mrb[0].mxu0
        %5159 = vdwg.mxu0
        %v5160 = vadd.f32 %v4407, %v5034
        %v5161 = vadd.f32 %v4408, %v5037
        %v5162 = vadd.f32 %v4409, %v5042
        %v5163 = vadd.f32 %v4410, %v5045
        %v5164 = vadd.f32 %v4411, %v5050
        %v5165 = vadd.f32 %v4412, %v5053
        %v5166 = vadd.f32 %v4413, %v5058
        %v5167 = vadd.f32 %v4414, %v5061
        %v5168 = vadd.f32 %v4415, %v5066
        %v5169 = vadd.f32 %v4416, %v5069
        %v5170 = vadd.f32 %v4417, %v5074
        %v5171 = vadd.f32 %v4418, %v5077
        %v5172 = vadd.f32 %v4419, %v5082
        %v5173 = vadd.f32 %v4420, %v5085
        %v5174 = vadd.f32 %v4421, %v5090
        %v5175 = vadd.f32 %v4422, %v5093
        %v5176 = vadd.f32 %v4423, %v5098
        %v5177 = vadd.f32 %v4424, %v5101
        %v5178 = vadd.f32 %v4425, %v5106
        %v5179 = vadd.f32 %v4426, %v5109
        %v5180 = vadd.f32 %v4427, %v5114
        %v5181 = vadd.f32 %v4428, %v5117
        %v5182 = vadd.f32 %v4429, %v5122
        %v5183 = vadd.f32 %v4430, %v5125
        %v5184 = vadd.f32 %v4431, %v5130
        %v5185 = vadd.f32 %v4432, %v5133
        %v5186 = vadd.f32 %v4433, %v5138
        %v5187 = vadd.f32 %v4434, %v5141
        %v5188 = vadd.f32 %v4435, %v5146
        %v5189 = vadd.f32 %v4436, %v5149
        %v5190 = vadd.f32 %v4437, %v5154
        %v5191 = vadd.f32 %v4438, %v5157
        %v5192 = vld [vmem:[%s4053] sm:$0xe]
        %v5193 = vld [vmem:[%s4053 + $0xc] sm:$0xe]
        %v5194 = vld [vmem:[%s4053 + $0x18] sm:$0xe]
        %v5195 = vld [vmem:[%s4053 + $0x24] sm:$0xe]
        %v5196 = vld [vmem:[%s4053 + $0x30] sm:$0xe]
        %v5197 = vld [vmem:[%s4053 + $0x3c] sm:$0xe]
        %v5198 = vld [vmem:[%s4053 + $0x48] sm:$0xe]
        %v5199 = vld [vmem:[%s4053 + $0x54] sm:$0xe]
        %v5200 = vld [vmem:[%s4053 + $0x60] sm:$0xe]
        %v5201 = vld [vmem:[%s4053 + $0x6c] sm:$0xe]
        %v5202 = vld [vmem:[%s4053 + $0x78] sm:$0xe]
        %v5203 = vld [vmem:[%s4053 + $0x84] sm:$0xe]
        %v5204 = vld [vmem:[%s4053 + $0x90] sm:$0xe]
        %v5205 = vld [vmem:[%s4053 + $0x9c] sm:$0xe]
        %v5206 = vld [vmem:[%s4053 + $0xa8] sm:$0xe]
        %v5207 = vld [vmem:[%s4053 + $0xb4] sm:$0xe]
        %v5256 = vrot.slane %v5192, 5
        %v5257 = vrot.slane %v5256, 4
        %v5258 = vrot.slane %v4440, 5
        %v5259 = vsel %vm1984, %v5257, %v5258
        %v5260 = vrot.slane %v5258, 4
        %v5261 = vrot.slane %v4441, 5
        %v5262 = vsel %vm1984, %v5260, %v5261
        %v5263 = vrot.slane %v5193, 5
        %v5264 = vrot.slane %v5263, 4
        %v5265 = vrot.slane %v4443, 5
        %v5266 = vsel %vm1984, %v5264, %v5265
        %v5267 = vrot.slane %v5265, 4
        %v5268 = vrot.slane %v4444, 5
        %v5269 = vsel %vm1984, %v5267, %v5268
        %v5270 = vrot.slane %v5194, 5
        %v5271 = vrot.slane %v5270, 4
        %v5272 = vrot.slane %v4446, 5
        %v5273 = vsel %vm1984, %v5271, %v5272
        %v5274 = vrot.slane %v5272, 4
        %v5275 = vrot.slane %v4447, 5
        %v5276 = vsel %vm1984, %v5274, %v5275
        %v5277 = vrot.slane %v5195, 5
        %v5278 = vrot.slane %v5277, 4
        %v5279 = vrot.slane %v4449, 5
        %v5280 = vsel %vm1984, %v5278, %v5279
        %v5281 = vrot.slane %v5279, 4
        %v5282 = vrot.slane %v4450, 5
        %v5283 = vsel %vm1984, %v5281, %v5282
        %v5284 = vrot.slane %v5196, 5
        %v5285 = vrot.slane %v5284, 4
        %v5286 = vrot.slane %v4452, 5
        %v5287 = vsel %vm1984, %v5285, %v5286
        %v5288 = vrot.slane %v5286, 4
        %v5289 = vrot.slane %v4453, 5
        %v5290 = vsel %vm1984, %v5288, %v5289
        %v5291 = vrot.slane %v5197, 5
        %v5292 = vrot.slane %v5291, 4
        %v5293 = vrot.slane %v4455, 5
        %v5294 = vsel %vm1984, %v5292, %v5293
        %v5295 = vrot.slane %v5293, 4
        %v5296 = vrot.slane %v4456, 5
        %v5297 = vsel %vm1984, %v5295, %v5296
        %v5298 = vrot.slane %v5198, 5
        %v5299 = vrot.slane %v5298, 4
        %v5300 = vrot.slane %v4458, 5
        %v5301 = vsel %vm1984, %v5299, %v5300
        %v5302 = vrot.slane %v5300, 4
        %v5303 = vrot.slane %v4459, 5
        %v5304 = vsel %vm1984, %v5302, %v5303
        %v5305 = vrot.slane %v5199, 5
        %v5306 = vrot.slane %v5305, 4
        %v5307 = vrot.slane %v4461, 5
        %v5308 = vsel %vm1984, %v5306, %v5307
        %v5309 = vrot.slane %v5307, 4
        %v5310 = vrot.slane %v4462, 5
        %v5311 = vsel %vm1984, %v5309, %v5310
        %v5312 = vrot.slane %v5200, 5
        %v5313 = vrot.slane %v5312, 4
        %v5314 = vrot.slane %v4464, 5
        %v5315 = vsel %vm1984, %v5313, %v5314
        %v5316 = vrot.slane %v5314, 4
        %v5317 = vrot.slane %v4465, 5
        %v5318 = vsel %vm1984, %v5316, %v5317
        %v5319 = vrot.slane %v5201, 5
        %v5320 = vrot.slane %v5319, 4
        %v5321 = vrot.slane %v4467, 5
        %v5322 = vsel %vm1984, %v5320, %v5321
        %v5323 = vrot.slane %v5321, 4
        %v5324 = vrot.slane %v4468, 5
        %v5325 = vsel %vm1984, %v5323, %v5324
        %v5326 = vrot.slane %v5202, 5
        %v5327 = vrot.slane %v5326, 4
        %v5328 = vrot.slane %v4470, 5
        %v5329 = vsel %vm1984, %v5327, %v5328
        %v5330 = vrot.slane %v5328, 4
        %v5331 = vrot.slane %v4471, 5
        %v5332 = vsel %vm1984, %v5330, %v5331
        %v5333 = vrot.slane %v5203, 5
        %v5334 = vrot.slane %v5333, 4
        %v5335 = vrot.slane %v4473, 5
        %v5336 = vsel %vm1984, %v5334, %v5335
        %v5337 = vrot.slane %v5335, 4
        %v5338 = vrot.slane %v4474, 5
        %v5339 = vsel %vm1984, %v5337, %v5338
        %v5340 = vrot.slane %v5204, 5
        %v5341 = vrot.slane %v5340, 4
        %v5342 = vrot.slane %v4476, 5
        %v5343 = vsel %vm1984, %v5341, %v5342
        %v5344 = vrot.slane %v5342, 4
        %v5345 = vrot.slane %v4477, 5
        %v5346 = vsel %vm1984, %v5344, %v5345
        %v5347 = vrot.slane %v5205, 5
        %v5348 = vrot.slane %v5347, 4
        %v5349 = vrot.slane %v4479, 5
        %v5350 = vsel %vm1984, %v5348, %v5349
        %v5351 = vrot.slane %v5349, 4
        %v5352 = vrot.slane %v4480, 5
        %v5353 = vsel %vm1984, %v5351, %v5352
        %v5354 = vrot.slane %v5206, 5
        %v5355 = vrot.slane %v5354, 4
        %v5356 = vrot.slane %v4482, 5
        %v5357 = vsel %vm1984, %v5355, %v5356
        %v5358 = vrot.slane %v5356, 4
        %v5359 = vrot.slane %v4483, 5
        %v5360 = vsel %vm1984, %v5358, %v5359
        %v5361 = vrot.slane %v5207, 5
        %v5362 = vrot.slane %v5361, 4
        %v5363 = vrot.slane %v4485, 5
        %v5364 = vsel %vm1984, %v5362, %v5363
        %v5365 = vrot.slane %v5363, 4
        %v5366 = vrot.slane %v4486, 5
        %v5367 = vsel %vm1984, %v5365, %v5366
        %v5368 = vld [vmem:[#allocation6 + $0x200] sm:$0xf]
        %v5369 = vld [vmem:[#allocation6 + $0x204] sm:$0xf]
        %v5370 = vld [vmem:[#allocation6 + $0x208] sm:$0xf]
        %v5371 = vld [vmem:[#allocation6 + $0x20c] sm:$0xf]
        %v5372 = vld [vmem:[#allocation6 + $0x210] sm:$0xf]
        %v5373 = vld [vmem:[#allocation6 + $0x214] sm:$0xf]
        %v5374 = vld [vmem:[#allocation6 + $0x218] sm:$0xf]
        %v5375 = vld [vmem:[#allocation6 + $0x21c] sm:$0xf]
        %v5376 = vld [vmem:[#allocation6 + $0x220] sm:$0xf]
        %v5377 = vld [vmem:[#allocation6 + $0x224] sm:$0xf]
        %v5378 = vld [vmem:[#allocation6 + $0x228] sm:$0xf]
        %v5379 = vld [vmem:[#allocation6 + $0x22c] sm:$0xf]
        %v5380 = vld [vmem:[#allocation6 + $0x230] sm:$0xf]
        %v5381 = vld [vmem:[#allocation6 + $0x234] sm:$0xf]
        %v5382 = vld [vmem:[#allocation6 + $0x238] sm:$0xf]
        %v5383 = vld [vmem:[#allocation6 + $0x23c] sm:$0xf]
        %v5384 = vunpack.c.l.b16 %v5259
        %v5385 = vunpack.c.l.b16 %v5262
        %v5386 = vunpack.c.l.b16 %v5266
        %v5387 = vunpack.c.l.b16 %v5269
        %v5388 = vunpack.c.l.b16 %v5273
        %v5389 = vunpack.c.l.b16 %v5276
        %v5390 = vunpack.c.l.b16 %v5280
        %v5391 = vunpack.c.l.b16 %v5283
        %v5392 = vunpack.c.l.b16 %v5287
        %v5393 = vunpack.c.l.b16 %v5290
        %v5394 = vunpack.c.l.b16 %v5294
        %v5395 = vunpack.c.l.b16 %v5297
        %v5396 = vunpack.c.l.b16 %v5301
        %v5397 = vunpack.c.l.b16 %v5304
        %v5398 = vunpack.c.l.b16 %v5308
        %v5399 = vunpack.c.l.b16 %v5311
        %v5400 = vunpack.c.l.b16 %v5315
        %v5401 = vunpack.c.l.b16 %v5318
        %v5402 = vunpack.c.l.b16 %v5322
        %v5403 = vunpack.c.l.b16 %v5325
        %v5404 = vunpack.c.l.b16 %v5329
        %v5405 = vunpack.c.l.b16 %v5332
        %v5406 = vunpack.c.l.b16 %v5336
        %v5407 = vunpack.c.l.b16 %v5339
        %v5408 = vunpack.c.l.b16 %v5343
        %v5409 = vunpack.c.l.b16 %v5346
        %v5410 = vunpack.c.l.b16 %v5350
        %v5411 = vunpack.c.l.b16 %v5353
        %v5412 = vunpack.c.l.b16 %v5357
        %v5413 = vunpack.c.l.b16 %v5360
        %v5414 = vunpack.c.l.b16 %v5364
        %v5415 = vunpack.c.l.b16 %v5367
        %v5416 = vpack.c.b16 %v5385, %v5384
        %v5417 = vpack.c.b16 %v5387, %v5386
        %v5418 = vpack.c.b16 %v5389, %v5388
        %v5419 = vpack.c.b16 %v5391, %v5390
        %v5420 = vpack.c.b16 %v5393, %v5392
        %v5421 = vpack.c.b16 %v5395, %v5394
        %v5422 = vpack.c.b16 %v5397, %v5396
        %v5423 = vpack.c.b16 %v5399, %v5398
        %v5424 = vpack.c.b16 %v5401, %v5400
        %v5425 = vpack.c.b16 %v5403, %v5402
        %v5426 = vpack.c.b16 %v5405, %v5404
        %v5427 = vpack.c.b16 %v5407, %v5406
        %v5428 = vpack.c.b16 %v5409, %v5408
        %v5429 = vpack.c.b16 %v5411, %v5410
        %v5430 = vpack.c.b16 %v5413, %v5412
        %v5431 = vpack.c.b16 %v5415, %v5414
        %v5464 = vunpack.c.l.b16 %v5368
        %v5465 = vunpack.c.l.b16 %v5369
        %v5466 = vunpack.c.l.b16 %v5370
        %v5467 = vunpack.c.l.b16 %v5371
        %v5468 = vunpack.c.l.b16 %v5372
        %v5469 = vunpack.c.l.b16 %v5373
        %v5470 = vunpack.c.l.b16 %v5374
        %v5471 = vunpack.c.l.b16 %v5375
        %v5472 = vunpack.c.l.b16 %v5376
        %v5473 = vunpack.c.l.b16 %v5377
        %v5474 = vunpack.c.l.b16 %v5378
        %v5475 = vunpack.c.l.b16 %v5379
        %v5476 = vunpack.c.l.b16 %v5380
        %v5477 = vunpack.c.l.b16 %v5381
        %v5478 = vunpack.c.l.b16 %v5382
        %v5479 = vunpack.c.l.b16 %v5383
        %v5480 = vpack.c.b16 %v5465, %v5464
        %v5481 = vpack.c.b16 %v5467, %v5466
        %v5482 = vpack.c.b16 %v5469, %v5468
        %v5483 = vpack.c.b16 %v5471, %v5470
        %v5484 = vpack.c.b16 %v5473, %v5472
        %v5485 = vpack.c.b16 %v5475, %v5474
        %v5486 = vpack.c.b16 %v5477, %v5476
        %v5487 = vpack.c.b16 %v5479, %v5478
        %5496 = vmatprep.subr.bf16.mxu0 0
        %5497 = vmatpush1.bf16.msra.mxu0 %v5480
        %5498 = vmatprep.subr.bf16.mxu0 0
        %5499 = vmatpush1.bf16.msra.mxu0 %v5481
        %5500 = vmatprep.subr.bf16.mxu0 0
        %5501 = vmatpush1.bf16.msra.mxu0 %v5482
        %5502 = vmatprep.subr.bf16.mxu0 0
        %5503 = vmatpush1.bf16.msra.mxu0 %v5483
        %5504 = vmatprep.subr.bf16.mxu0 0
        %5505 = vmatpush1.bf16.msra.mxu0 %v5484
        %5506 = vmatprep.subr.bf16.mxu0 0
        %5507 = vmatpush1.bf16.msra.mxu0 %v5485
        %5508 = vmatprep.subr.bf16.mxu0 0
        %5509 = vmatpush1.bf16.msra.mxu0 %v5486
        %5510 = vmatprep.subr.bf16.mxu0 0
        %5511 = vmatpush1.bf16.msra.mxu0 %v5487
        %5512 = vmatprep.subr.bf16.mxu0 0
        %5513 = vmatpush1.bf16.msra.mxu0 0
        %5514 = vmatprep.subr.bf16.mxu0 0
        %5515 = vmatpush1.bf16.msra.mxu0 0
        %5516 = vmatprep.subr.bf16.mxu0 0
        %5517 = vmatpush1.bf16.msra.mxu0 0
        %5518 = vmatprep.subr.bf16.mxu0 0
        %5519 = vmatpush1.bf16.msra.mxu0 0
        %5520 = vmatprep.subr.bf16.mxu0 0
        %5521 = vmatpush1.bf16.msra.mxu0 0
        %5522 = vmatprep.subr.bf16.mxu0 0
        %5523 = vmatpush1.bf16.msra.mxu0 0
        %5524 = vmatprep.subr.bf16.mxu0 0
        %5525 = vmatpush1.bf16.msra.mxu0 0
        %5526 = vmatprep.subr.bf16.mxu0 0
        %5527 = vmatpush1.bf16.msra.mxu0 0
        %5528 = vmatprep.mubr.bf16.mxu0 0
        %5529 = vmatmul.mubr.bf16.gmra.mrb[0].mxu0 %v5416
        %v5530 = vpop.f32.mrb[0].mxu0
        %v5531 = vadd.f32 0.0, %v5530
        %v5532 = vpop.f32.mrb[0].mxu0
        %v5533 = vpop.f32.mrb[0].mxu0
        %v5534 = vadd.f32 0.0, %v5533
        %v5535 = vpop.f32.mrb[0].mxu0
        %5536 = vmatprep.mubr.bf16.mxu0 0
        %5537 = vmatmul.mubr.bf16.gmra.mrb[0].mxu0 %v5417
        %v5538 = vpop.f32.mrb[0].mxu0
        %v5539 = vadd.f32 0.0, %v5538
        %v5540 = vpop.f32.mrb[0].mxu0
        %v5541 = vpop.f32.mrb[0].mxu0
        %v5542 = vadd.f32 0.0, %v5541
        %v5543 = vpop.f32.mrb[0].mxu0
        %5544 = vmatprep.mubr.bf16.mxu0 0
        %5545 = vmatmul.mubr.bf16.gmra.mrb[0].mxu0 %v5418
        %v5546 = vpop.f32.mrb[0].mxu0
        %v5547 = vadd.f32 0.0, %v5546
        %v5548 = vpop.f32.mrb[0].mxu0
        %v5549 = vpop.f32.mrb[0].mxu0
        %v5550 = vadd.f32 0.0, %v5549
        %v5551 = vpop.f32.mrb[0].mxu0
        %5552 = vmatprep.mubr.bf16.mxu0 0
        %5553 = vmatmul.mubr.bf16.gmra.mrb[0].mxu0 %v5419
        %v5554 = vpop.f32.mrb[0].mxu0
        %v5555 = vadd.f32 0.0, %v5554
        %v5556 = vpop.f32.mrb[0].mxu0
        %v5557 = vpop.f32.mrb[0].mxu0
        %v5558 = vadd.f32 0.0, %v5557
        %v5559 = vpop.f32.mrb[0].mxu0
        %5560 = vmatprep.mubr.bf16.mxu0 0
        %5561 = vmatmul.mubr.bf16.gmra.mrb[0].mxu0 %v5420
        %v5562 = vpop.f32.mrb[0].mxu0
        %v5563 = vadd.f32 0.0, %v5562
        %v5564 = vpop.f32.mrb[0].mxu0
        %v5565 = vpop.f32.mrb[0].mxu0
        %v5566 = vadd.f32 0.0, %v5565
        %v5567 = vpop.f32.mrb[0].mxu0
        %5568 = vmatprep.mubr.bf16.mxu0 0
        %5569 = vmatmul.mubr.bf16.gmra.mrb[0].mxu0 %v5421
        %v5570 = vpop.f32.mrb[0].mxu0
        %v5571 = vadd.f32 0.0, %v5570
        %v5572 = vpop.f32.mrb[0].mxu0
        %v5573 = vpop.f32.mrb[0].mxu0
        %v5574 = vadd.f32 0.0, %v5573
        %v5575 = vpop.f32.mrb[0].mxu0
        %5576 = vmatprep.mubr.bf16.mxu0 0
        %5577 = vmatmul.mubr.bf16.gmra.mrb[0].mxu0 %v5422
        %v5578 = vpop.f32.mrb[0].mxu0
        %v5579 = vadd.f32 0.0, %v5578
        %v5580 = vpop.f32.mrb[0].mxu0
        %v5581 = vpop.f32.mrb[0].mxu0
        %v5582 = vadd.f32 0.0, %v5581
        %v5583 = vpop.f32.mrb[0].mxu0
        %5584 = vmatprep.mubr.bf16.mxu0 0
        %5585 = vmatmul.mubr.bf16.gmra.mrb[0].mxu0 %v5423
        %v5586 = vpop.f32.mrb[0].mxu0
        %v5587 = vadd.f32 0.0, %v5586
        %v5588 = vpop.f32.mrb[0].mxu0
        %v5589 = vpop.f32.mrb[0].mxu0
        %v5590 = vadd.f32 0.0, %v5589
        %v5591 = vpop.f32.mrb[0].mxu0
        %5592 = vmatprep.mubr.bf16.mxu0 0
        %5593 = vmatmul.mubr.bf16.gmra.mrb[0].mxu0 %v5424
        %v5594 = vpop.f32.mrb[0].mxu0
        %v5595 = vadd.f32 0.0, %v5594
        %v5596 = vpop.f32.mrb[0].mxu0
        %v5597 = vpop.f32.mrb[0].mxu0
        %v5598 = vadd.f32 0.0, %v5597
        %v5599 = vpop.f32.mrb[0].mxu0
        %5600 = vmatprep.mubr.bf16.mxu0 0
        %5601 = vmatmul.mubr.bf16.gmra.mrb[0].mxu0 %v5425
        %v5602 = vpop.f32.mrb[0].mxu0
        %v5603 = vadd.f32 0.0, %v5602
        %v5604 = vpop.f32.mrb[0].mxu0
        %v5605 = vpop.f32.mrb[0].mxu0
        %v5606 = vadd.f32 0.0, %v5605
        %v5607 = vpop.f32.mrb[0].mxu0
        %5608 = vmatprep.mubr.bf16.mxu0 0
        %5609 = vmatmul.mubr.bf16.gmra.mrb[0].mxu0 %v5426
        %v5610 = vpop.f32.mrb[0].mxu0
        %v5611 = vadd.f32 0.0, %v5610
        %v5612 = vpop.f32.mrb[0].mxu0
        %v5613 = vpop.f32.mrb[0].mxu0
        %v5614 = vadd.f32 0.0, %v5613
        %v5615 = vpop.f32.mrb[0].mxu0
        %5616 = vmatprep.mubr.bf16.mxu0 0
        %5617 = vmatmul.mubr.bf16.gmra.mrb[0].mxu0 %v5427
        %v5618 = vpop.f32.mrb[0].mxu0
        %v5619 = vadd.f32 0.0, %v5618
        %v5620 = vpop.f32.mrb[0].mxu0
        %v5621 = vpop.f32.mrb[0].mxu0
        %v5622 = vadd.f32 0.0, %v5621
        %v5623 = vpop.f32.mrb[0].mxu0
        %5624 = vmatprep.mubr.bf16.mxu0 0
        %5625 = vmatmul.mubr.bf16.gmra.mrb[0].mxu0 %v5428
        %v5626 = vpop.f32.mrb[0].mxu0
        %v5627 = vadd.f32 0.0, %v5626
        %v5628 = vpop.f32.mrb[0].mxu0
        %v5629 = vpop.f32.mrb[0].mxu0
        %v5630 = vadd.f32 0.0, %v5629
        %v5631 = vpop.f32.mrb[0].mxu0
        %5632 = vmatprep.mubr.bf16.mxu0 0
        %5633 = vmatmul.mubr.bf16.gmra.mrb[0].mxu0 %v5429
        %v5634 = vpop.f32.mrb[0].mxu0
        %v5635 = vadd.f32 0.0, %v5634
        %v5636 = vpop.f32.mrb[0].mxu0
        %v5637 = vpop.f32.mrb[0].mxu0
        %v5638 = vadd.f32 0.0, %v5637
        %v5639 = vpop.f32.mrb[0].mxu0
        %5640 = vmatprep.mubr.bf16.mxu0 0
        %5641 = vmatmul.mubr.bf16.gmra.mrb[0].mxu0 %v5430
        %v5642 = vpop.f32.mrb[0].mxu0
        %v5643 = vadd.f32 0.0, %v5642
        %v5644 = vpop.f32.mrb[0].mxu0
        %v5645 = vpop.f32.mrb[0].mxu0
        %v5646 = vadd.f32 0.0, %v5645
        %v5647 = vpop.f32.mrb[0].mxu0
        %5648 = vmatprep.mubr.bf16.mxu0 0
        %5649 = vmatmul.mubr.bf16.gmra.mrb[0].mxu0 %v5431
        %v5650 = vpop.f32.mrb[0].mxu0
        %v5651 = vadd.f32 0.0, %v5650
        %v5652 = vpop.f32.mrb[0].mxu0
        %v5653 = vpop.f32.mrb[0].mxu0
        %v5654 = vadd.f32 0.0, %v5653
        %v5655 = vpop.f32.mrb[0].mxu0
        %5656 = vdwg.mxu0
        %v5657 = vadd.f32 %v5160, %v5531
        %v5658 = vadd.f32 %v5161, %v5534
        %v5659 = vadd.f32 %v5162, %v5539
        %v5660 = vadd.f32 %v5163, %v5542
        %v5661 = vadd.f32 %v5164, %v5547
        %v5662 = vadd.f32 %v5165, %v5550
        %v5663 = vadd.f32 %v5166, %v5555
        %v5664 = vadd.f32 %v5167, %v5558
        %v5665 = vadd.f32 %v5168, %v5563
        %v5666 = vadd.f32 %v5169, %v5566
        %v5667 = vadd.f32 %v5170, %v5571
        %v5668 = vadd.f32 %v5171, %v5574
        %v5669 = vadd.f32 %v5172, %v5579
        %v5670 = vadd.f32 %v5173, %v5582
        %v5671 = vadd.f32 %v5174, %v5587
        %v5672 = vadd.f32 %v5175, %v5590
        %v5673 = vadd.f32 %v5176, %v5595
        %v5674 = vadd.f32 %v5177, %v5598
        %v5675 = vadd.f32 %v5178, %v5603
        %v5676 = vadd.f32 %v5179, %v5606
        %v5677 = vadd.f32 %v5180, %v5611
        %v5678 = vadd.f32 %v5181, %v5614
        %v5679 = vadd.f32 %v5182, %v5619
        %v5680 = vadd.f32 %v5183, %v5622
        %v5681 = vadd.f32 %v5184, %v5627
        %v5682 = vadd.f32 %v5185, %v5630
        %v5683 = vadd.f32 %v5186, %v5635
        %v5684 = vadd.f32 %v5187, %v5638
        %v5685 = vadd.f32 %v5188, %v5643
        %v5686 = vadd.f32 %v5189, %v5646
        %v5687 = vadd.f32 %v5190, %v5651
        %v5688 = vadd.f32 %v5191, %v5654
        %v5689 = vadd.f32 %v5657, %v5658
        %v5690 = vadd.f32 %v5689, %v5659
        %v5691 = vadd.f32 %v5690, %v5660
        %v5692 = vadd.f32 %v5691, %v5661
        %v5693 = vadd.f32 %v5692, %v5662
        %v5694 = vadd.f32 %v5693, %v5663
        %v5695 = vadd.f32 %v5694, %v5664
        %v5696 = vadd.f32 %v5695, %v5665
        %v5697 = vadd.f32 %v5696, %v5666
        %v5698 = vadd.f32 %v5697, %v5667
        %v5699 = vadd.f32 %v5698, %v5668
        %v5700 = vadd.f32 %v5699, %v5669
        %v5701 = vadd.f32 %v5700, %v5670
        %v5702 = vadd.f32 %v5701, %v5671
        %v5703 = vadd.f32 %v5702, %v5672
        %v5704 = vadd.f32 %v5703, %v5673
        %v5705 = vadd.f32 %v5704, %v5674
        %v5706 = vadd.f32 %v5705, %v5675
        %v5707 = vadd.f32 %v5706, %v5676
        %v5708 = vadd.f32 %v5707, %v5677
        %v5709 = vadd.f32 %v5708, %v5678
        %v5710 = vadd.f32 %v5709, %v5679
        %v5711 = vadd.f32 %v5710, %v5680
        %v5712 = vadd.f32 %v5711, %v5681
        %v5713 = vadd.f32 %v5712, %v5682
        %v5714 = vadd.f32 %v5713, %v5683
        %v5715 = vadd.f32 %v5714, %v5684
        %v5716 = vadd.f32 %v5715, %v5685
        %v5717 = vadd.f32 %v5716, %v5686
        %v5718 = vadd.f32 %v5717, %v5687
        %v5719 = vadd.f32 %v5718, %v5688
        %v5720 = vrot.slane %v5719, 4
        %v5721 = vadd.f32 %v5719, %v5720
        %v5722 = vrot.slane %v5721, 2
        %v5723 = vadd.f32 %v5721, %v5722
        %v5724 = vrot.slane %v5723, 1
        %v5725 = vadd.f32 %v5723, %v5724
        %5726 = vst [vmem:[%s214] sm:$0x1] %v5725
        %v5727 = vmul.f32 %v5657, %v5657
        %v5728 = vmul.f32 %v5658, %v5658
        %v5729 = vmul.f32 %v5659, %v5659
        %v5730 = vmul.f32 %v5660, %v5660
        %v5731 = vmul.f32 %v5661, %v5661
        %v5732 = vmul.f32 %v5662, %v5662
        %v5733 = vmul.f32 %v5663, %v5663
        %v5734 = vmul.f32 %v5664, %v5664
        %v5735 = vmul.f32 %v5665, %v5665
        %v5736 = vmul.f32 %v5666, %v5666
        %v5737 = vmul.f32 %v5667, %v5667
        %v5738 = vmul.f32 %v5668, %v5668
        %v5739 = vmul.f32 %v5669, %v5669
        %v5740 = vmul.f32 %v5670, %v5670
        %v5741 = vmul.f32 %v5671, %v5671
        %v5742 = vmul.f32 %v5672, %v5672
        %v5743 = vmul.f32 %v5673, %v5673
        %v5744 = vmul.f32 %v5674, %v5674
        %v5745 = vmul.f32 %v5675, %v5675
        %v5746 = vmul.f32 %v5676, %v5676
        %v5747 = vmul.f32 %v5677, %v5677
        %v5748 = vmul.f32 %v5678, %v5678
        %v5749 = vmul.f32 %v5679, %v5679
        %v5750 = vmul.f32 %v5680, %v5680
        %v5751 = vmul.f32 %v5681, %v5681
        %v5752 = vmul.f32 %v5682, %v5682
        %v5753 = vmul.f32 %v5683, %v5683
        %v5754 = vmul.f32 %v5684, %v5684
        %v5755 = vmul.f32 %v5685, %v5685
        %v5756 = vmul.f32 %v5686, %v5686
        %v5757 = vmul.f32 %v5687, %v5687
        %v5758 = vmul.f32 %v5688, %v5688
        %v5759 = vadd.f32 %v5727, %v5728
        %v5760 = vadd.f32 %v5759, %v5729
        %v5761 = vadd.f32 %v5760, %v5730
        %v5762 = vadd.f32 %v5761, %v5731
        %v5763 = vadd.f32 %v5762, %v5732
        %v5764 = vadd.f32 %v5763, %v5733
        %v5765 = vadd.f32 %v5764, %v5734
        %v5766 = vadd.f32 %v5765, %v5735
        %v5767 = vadd.f32 %v5766, %v5736
        %v5768 = vadd.f32 %v5767, %v5737
        %v5769 = vadd.f32 %v5768, %v5738
        %v5770 = vadd.f32 %v5769, %v5739
        %v5771 = vadd.f32 %v5770, %v5740
        %v5772 = vadd.f32 %v5771, %v5741
        %v5773 = vadd.f32 %v5772, %v5742
        %v5774 = vadd.f32 %v5773, %v5743
        %v5775 = vadd.f32 %v5774, %v5744
        %v5776 = vadd.f32 %v5775, %v5745
        %v5777 = vadd.f32 %v5776, %v5746
        %v5778 = vadd.f32 %v5777, %v5747
        %v5779 = vadd.f32 %v5778, %v5748
        %v5780 = vadd.f32 %v5779, %v5749
        %v5781 = vadd.f32 %v5780, %v5750
        %v5782 = vadd.f32 %v5781, %v5751
        %v5783 = vadd.f32 %v5782, %v5752
        %v5784 = vadd.f32 %v5783, %v5753
        %v5785 = vadd.f32 %v5784, %v5754
        %v5786 = vadd.f32 %v5785, %v5755
        %v5787 = vadd.f32 %v5786, %v5756
        %v5788 = vadd.f32 %v5787, %v5757
        %v5789 = vadd.f32 %v5788, %v5758
        %v5790 = vrot.slane %v5789, 4
        %v5791 = vadd.f32 %v5789, %v5790
        %v5792 = vrot.slane %v5791, 2
        %v5793 = vadd.f32 %v5791, %v5792
        %v5794 = vrot.slane %v5793, 1
        %v5795 = vadd.f32 %v5793, %v5794
        %5796 = vst [vmem:[%s214 + $0x1] sm:$0x1] %v5795
        %5797 = vst [vmem:[%s207] sm:$0xff] %v5657
        %5798 = vst [vmem:[%s207 + $0x8] sm:$0xff] %v5658
        %5799 = vst [vmem:[%s207 + $0x10] sm:$0xff] %v5659
        %5800 = vst [vmem:[%s207 + $0x18] sm:$0xff] %v5660
        %5801 = vst [vmem:[%s207 + $0x20] sm:$0xff] %v5661
        %5802 = vst [vmem:[%s207 + $0x28] sm:$0xff] %v5662
        %5803 = vst [vmem:[%s207 + $0x30] sm:$0xff] %v5663
        %5804 = vst [vmem:[%s207 + $0x38] sm:$0xff] %v5664
        %5805 = vst [vmem:[%s207 + $0x40] sm:$0xff] %v5665
        %5806 = vst [vmem:[%s207 + $0x48] sm:$0xff] %v5666
        %5807 = vst [vmem:[%s207 + $0x50] sm:$0xff] %v5667
        %5808 = vst [vmem:[%s207 + $0x58] sm:$0xff] %v5668
        %5809 = vst [vmem:[%s207 + $0x60] sm:$0xff] %v5669
        %5810 = vst [vmem:[%s207 + $0x68] sm:$0xff] %v5670
        %5811 = vst [vmem:[%s207 + $0x70] sm:$0xff] %v5671
        %5812 = vst [vmem:[%s207 + $0x78] sm:$0xff] %v5672
        %5813 = vst [vmem:[%s207 + $0x80] sm:$0xff] %v5673
        %5814 = vst [vmem:[%s207 + $0x88] sm:$0xff] %v5674
        %5815 = vst [vmem:[%s207 + $0x90] sm:$0xff] %v5675
        %5816 = vst [vmem:[%s207 + $0x98] sm:$0xff] %v5676
        %5817 = vst [vmem:[%s207 + $0xa0] sm:$0xff] %v5677
        %5818 = vst [vmem:[%s207 + $0xa8] sm:$0xff] %v5678
        %5819 = vst [vmem:[%s207 + $0xb0] sm:$0xff] %v5679
        %5820 = vst [vmem:[%s207 + $0xb8] sm:$0xff] %v5680
        %5821 = vst [vmem:[%s207 + $0xc0] sm:$0xff] %v5681
        %5822 = vst [vmem:[%s207 + $0xc8] sm:$0xff] %v5682
        %5823 = vst [vmem:[%s207 + $0xd0] sm:$0xff] %v5683
        %5824 = vst [vmem:[%s207 + $0xd8] sm:$0xff] %v5684
        %5825 = vst [vmem:[%s207 + $0xe0] sm:$0xff] %v5685
        %5826 = vst [vmem:[%s207 + $0xe8] sm:$0xff] %v5686
        %5827 = vst [vmem:[%s207 + $0xf0] sm:$0xff] %v5687
        %5828 = vst [vmem:[%s207 + $0xf8] sm:$0xff] %v5688
        %s5829 = sand.u32 %s80, 1
        %s5830 = scalar_lea.sflag [#allocation5], %s5829
        %s5831 = sand.u32 %s80, 1
        %s5832 = smul.addr %s5831, 256
        %s5833 = scalar_lea.vmem [#allocation8], %s5832
        %s5834 = sand.u32 %s106, 1
        %s5835 = scalar_lea.sflag [#allocation10], %s5834
        %s5836 = sand.u32 %s106, 1
        %s5837 = smul.addr %s5836, 2
        %s5838 = scalar_lea.vmem [#allocation9], %s5837
        // Predicated region
        $region37: #{tpu_custom_call.1} parent=27 // pred_check
          %p5839 = pneg %p90
        $region38: #{tpu_custom_call.1} parent=27 // pred_check_branch
          %5841 = sbr.rel (%p5839) target = $region40
        $region39: #{tpu_custom_call.1} parent=27 // pred_region
          %s5843 = ssub.s32 4096, 4096
          %5844 = vsyncadd %s5830, %s5843
          %s5845 = smul.addr %s25, 32
          %s5846 = smul.addr %s5845, 128
          %s5847 = scalar_lea.hbm %s2, %s5846
          %s5848 = sshll.u32 %s5833, 4
          %s5849 = int_to_ptr.vmem [resolvable:$true] %s5848
          %5854 = dma.vmem_to_hbm [thread:$0]  %s5849, 4096, %s5847, %s5830, 128, 128, 8
        $region40: #{tpu_custom_call.1} parent=27 // pred_fallthru
          _
        // Predicated region
        $region41: #{tpu_custom_call.1} parent=27 // pred_check
          %p5855 = pneg %p116
        $region42: #{tpu_custom_call.1} parent=27 // pred_check_branch
          %5857 = sbr.rel (%p5855) target = $region44
        $region43: #{tpu_custom_call.1} parent=27 // pred_region
          %s5859 = ssub.s32 32, 32
          %5860 = vsyncadd %s5835, %s5859
          %s5861 = smul.addr %s25, 32
          %s5862 = scalar_lea.hbm %s3, %s5861
          %s5864 = sshll.u32 %s5838, 4
          %s5865 = int_to_ptr.vmem [resolvable:$true] %s5864
          %5867 = dma.vmem_to_hbm [thread:$0]  %s5865, 32, %s5862, %s5835
        $region44: #{tpu_custom_call.1} parent=27 // pred_fallthru
          _
      $region28: #{tpu_custom_call.1} parent=5 // pred_fallthru
        _
      %p5868 = scmp.le.s32.totalorder 2, %s20
      // Predicated region
      $region45: #{tpu_custom_call.1} parent=5 // pred_check
        %p5869 = pneg %p5868
      $region46: #{tpu_custom_call.1} parent=5 // pred_check_branch
        %5871 = sbr.rel (%p5869) target = $region48
      $region47: #{tpu_custom_call.1} parent=5 // pred_region
        %s5872 = ssub.s32 %s20, 2
        // Predicated region
        $region49: #{tpu_custom_call.1} parent=47 // pred_check
          %p5873 = pneg %p96
        $region50: #{tpu_custom_call.1} parent=47 // pred_check_branch
          %5875 = sbr.rel (%p5873) target = $region52
        $region51: #{tpu_custom_call.1} parent=47 // pred_region
          %s5876 = sand.u32 %s81, 1
          %s5877 = scalar_lea.sflag [#allocation5], %s5876
          %s5878 = sand.u32 %s81, 1
          %s5879 = smul.addr %s5878, 256
          %s5880 = scalar_lea.vmem [#allocation8], %s5879
          %5881 = dma.done %s5877, 4096
        $region52: #{tpu_custom_call.1} parent=47 // pred_fallthru
          _
        // Predicated region
        $region53: #{tpu_custom_call.1} parent=47 // pred_check
          %p5882 = pneg %p122
        $region54: #{tpu_custom_call.1} parent=47 // pred_check_branch
          %5884 = sbr.rel (%p5882) target = $region56
        $region55: #{tpu_custom_call.1} parent=47 // pred_region
          %s5885 = sand.u32 %s107, 1
          %s5886 = scalar_lea.sflag [#allocation10], %s5885
          %s5887 = sand.u32 %s107, 1
          %s5888 = smul.addr %s5887, 2
          %s5889 = scalar_lea.vmem [#allocation9], %s5888
          %5890 = dma.done %s5886, 32
        $region56: #{tpu_custom_call.1} parent=47 // pred_fallthru
          _
      $region48: #{tpu_custom_call.1} parent=5 // pred_fallthru
        _
    $region6: #{tpu_custom_call.1} parent=1 // loop_footer
      %s24 = sadd.s32 1, %s20
    $region7: #{tpu_custom_call.1} parent=1 // loop_footer_branch
      %19 = sbr.rel target = $region3
    $region8: #{tpu_custom_call.1} parent=1 // loop_exit
      _
    %5891 = vsyncpa [#allocation4], 1
    %s5892 = scalar_lea.sflag [#allocation4], 1
    %5893 = vsyncpa %s5892, 1
    %5894 = vsyncpa [#allocation7], 1
    %5895 = vsyncpa [#allocation5], 1
    %s5896 = scalar_lea.sflag [#allocation5], 1
    %5897 = vsyncpa %s5896, 1
    %5898 = vsyncpa [#allocation10], 1
    %s5899 = scalar_lea.sflag [#allocation10], 1
    %5900 = vsyncpa %s5899, 1

</llo_original>
